<compile_context>
chip_gen: v5e
topology: v5e:2x2
jax: 0.10.0
libtpu: 0.0.40
codegen_flags: <defaults>
</compile_context>

<pallas_src>
import math

import jax
import jax.numpy as jnp
from jax.experimental import pallas as pl
from jax.experimental.pallas import tpu as pltpu

BN_EPS = 1e-5


def _round_up(x, m):
    return (x + m - 1) // m * m


# ----------------------------- Pallas kernel ---------------------------------
def _make_fused_kernel(n, ho, wo, ci, co, L):
    """Fused 3x(3x3 conv + train-mode BN + ReLU), channels-on-sublanes layout.

    Every feature map is a (C, L) slab: C channels on sublanes, L >= n*hp*wp
    flattened positions on lanes (hp=ho+2, wp=wo+2).  Flat position
    s = i*hp*wp + r*wp + c holds output pixel (i, r, c); positions with
    r >= ho or c >= wo (and the lane-pad tail) are masked to exactly 0, which
    doubles as the zero padding ring for the following conv.  A 3x3 tap is
    then just the same slab left-rolled by (kh-1)*wp + (kw-1) lanes.
    """
    hp, wp = ho + 2, wo + 2
    inv_m = 1.0 / float(n * ho * wo)
    # wrap-around of the negative-offset taps must land in the masked tail:
    assert L >= (n - 1) * hp * wp + (ho - 1) * wp + wo + wp + 1

    def lroll(x, d):
        # left-roll along lanes: result[:, p] = x[:, (p + d) % L]
        d = d % L
        if d == 0:
            return x
        return jnp.concatenate([x[:, d:], x[:, :d]], axis=1)

    def kernel(ph00_ref, ph01_ref, ph10_ref, ph11_ref, mask_ref,
               w1_ref, w2_ref, w3_ref, gam_ref, bet_ref,
               o_ref, acc_ref, y1_ref, y2_ref):
        mb = mask_ref[...]                                   # (co, L), 0/1 mask

        def conv3x3(w_ref, slab_fn, cin):
            # 9 taps; each tap = cin VPU broadcast-FMAs (exact f32).  The MXU
            # is <1% utilised at K,N <= 8 -- revisit once co >= 128.
            acc_ref[...] = jnp.zeros_like(acc_ref)
            for kh in range(3):
                for kw in range(3):
                    wt = w_ref[kh * 3 + kw]                  # (co, cin)
                    xs = slab_fn(kh, kw)                     # (cin, L)
                    part = wt[:, 0:1] * xs[0:1, :]
                    for c in range(1, cin):
                        part = part + wt[:, c:c + 1] * xs[c:c + 1, :]
                    acc_ref[...] += part                     # scratch accumulation

        def bn_relu_store(layer, dst_ref):
            a = acc_ref[...]
            # masked, mean-shifted (numerically stable) batch statistics
            mean = jnp.sum(a * mb, axis=1, keepdims=True) * inv_m       # (co, 1)
            ctr = (a - mean) * mb
            var = jnp.sum(ctr * ctr, axis=1, keepdims=True) * inv_m     # biased
            scale = gam_ref[layer] * jax.lax.rsqrt(var + BN_EPS)        # (co, 1)
            shift = bet_ref[layer] - mean * scale
            # one lane-dense masked store; the zeros are the next layer's ring
            dst_ref[...] = jnp.maximum(a * scale + shift, 0.0) * mb

        # ---- layer 1: stride-2 conv via the 4 even/odd input phases ----------
        ph = (ph00_ref[...], ph01_ref[...], ph10_ref[...], ph11_ref[...])

        def slab_l1(kh, kw):
            return lroll(ph[(kh % 2) * 2 + (kw % 2)], (kh // 2) * wp + (kw // 2))

        conv3x3(w1_ref, slab_l1, ci)      # conv bias omitted: train-BN cancels it
        bn_relu_store(0, y1_ref)

        # ---- layers 2 & 3: stride-1 convs, intermediates stay in VMEM --------
        def slab_same(src_ref):
            x = src_ref[...]              # load once, roll 9 times
            return lambda kh, kw: lroll(x, (kh - 1) * wp + (kw - 1))

        conv3x3(w2_ref, slab_same(y1_ref), co)
        bn_relu_store(1, y2_ref)

        conv3x3(w3_ref, slab_same(y2_ref), co)
        bn_relu_store(2, o_ref)

    return kernel


# ------------------------------ JAX wrapper -----------------------------------
def exact_conv_forward(x_nchw, params):
    """ExactConv.forward (default ctor args: no residual branch), one fused kernel."""
    n, ci, h, w = x_nchw.shape
    co = params["w1"].shape[0]
    assert h % 2 == 0 and w % 2 == 0, "stride-2 layer assumes even spatial dims"
    ho, wo = h // 2, w // 2
    hp, wp = ho + 2, wo + 2
    flat = n * hp * wp
    L = _round_up(flat, 128)

    x = x_nchw.astype(jnp.float32)
    xp = jnp.pad(x, ((0, 0), (0, 0), (1, 1), (1, 1)))        # (n, ci, h+2, w+2)

    # Even/odd phase split of the padded input: the stride-2 conv becomes four
    # unit-stride slabs (same total data; no 9x im2col expansion in HBM), each
    # embedded on the SAME (hp, wp) flat grid the stride-1 layers use.
    phases = []
    for a in range(2):
        for b in range(2):
            ph = xp[:, :, a::2, b::2]                        # (n, ci, ho+1, wo+1)
            ph = jnp.pad(ph, ((0, 0), (0, 0),
                              (0, hp - (ho + 1)), (0, wp - (wo + 1))))
            ph = jnp.transpose(ph, (1, 0, 2, 3)).reshape(ci, flat)
            phases.append(jnp.pad(ph, ((0, 0), (0, L - flat))))

    # Validity mask over flat positions (1 where r<ho and c<wo), pre-broadcast to
    # (co, L) so the kernel never re-emits broadcast_in_dim.
    valid2d = ((jnp.arange(hp) < ho)[:, None] & (jnp.arange(wp) < wo)[None, :])
    mask = jnp.tile(valid2d.astype(jnp.float32).reshape(-1), n)
    mask = jnp.pad(mask, (0, L - flat))
    mask = jnp.broadcast_to(mask[None, :], (co, L))

    # Per-tap weights, pre-transposed for the (C_out,C_in) x (C_in,L) contraction.
    w1t = jnp.transpose(params["w1"], (2, 3, 0, 1)).reshape(9, co, ci)
    w2t = jnp.transpose(params["w2"], (2, 3, 0, 1)).reshape(9, co, co)
    w3t = jnp.transpose(params["w3"], (2, 3, 0, 1)).reshape(9, co, co)
    gam = jnp.stack([params["g1"], params["g2"], params["g3"]]).reshape(3, co, 1)
    bet = jnp.stack([params["bt1"], params["bt2"], params["bt3"]]).reshape(3, co, 1)
    # NOTE: conv biases b1/b2/b3 are intentionally NOT passed: train-mode BN
    # subtracts the per-channel mean, which cancels them exactly.

    kernel = _make_fused_kernel(n, ho, wo, ci, co, L)

    def full(shape):
        nd = len(shape)
        return pl.BlockSpec(shape, lambda i: (0,) * nd)

    out_flat = pl.pallas_call(
        kernel,
        out_shape=jax.ShapeDtypeStruct((co, L), jnp.float32),  # lane-dense output
        grid=(1,),
        in_specs=[full(p.shape) for p in phases]
        + [full(mask.shape), full(w1t.shape), full(w2t.shape), full(w3t.shape),
           full(gam.shape), full(bet.shape)],
        out_specs=full((co, L)),
        scratch_shapes=[
            pltpu.VMEM((co, L), jnp.float32),   # conv accumulator
            pltpu.VMEM((co, L), jnp.float32),   # layer-1 activations
            pltpu.VMEM((co, L), jnp.float32),   # layer-2 activations
        ],
        compiler_params=pltpu.CompilerParams(
            dimension_semantics=("arbitrary",)),
        # Deferred for production N*H*W: M-tiled 'parallel' grid axis with
        # two-pass BN (uses both v7x TensorCores, enables BlockSpec pipelining
        # of the phase slabs), sized against v7x's 64 MiB VMEM.
    )(*phases, mask, w1t, w2t, w3t, gam, bet)

    out = out_flat[:, :flat].reshape(co, n, hp, wp)[:, :, :ho, :wo]
    return jnp.transpose(out, (1, 0, 2, 3))                  # -> (n, co, ho, wo)


# --------------------------- reference (pure JAX) ------------------------------
def _ref_layer(x_nhwc, w, b, gamma, beta, *, stride, pad):
    y = jax.lax.conv_general_dilated(
        x_nhwc, jnp.transpose(w, (2, 3, 1, 0)),
        window_strides=(stride, stride),
        padding=[(pad, pad), (pad, pad)],
        dimension_numbers=("NHWC", "HWIO", "NHWC"),
        precision=jax.lax.Precision.HIGHEST)
    y = y + b                                    # bias kept here on purpose
    mean = jnp.mean(y, axis=(0, 1, 2), keepdims=True)
    var = jnp.mean((y - mean) ** 2, axis=(0, 1, 2), keepdims=True)
    return jnp.maximum((y - mean) * jax.lax.rsqrt(var + BN_EPS) * gamma + beta, 0.0)


def exact_conv_reference(x_nchw, params):
    x = jnp.transpose(x_nchw, (0, 2, 3, 1))
    x = _ref_layer(x, params["w1"], params["b1"], params["g1"], params["bt1"], stride=2, pad=1)
    x = _ref_layer(x, params["w2"], params["b2"], params["g2"], params["bt2"], stride=1, pad=1)
    x = _ref_layer(x, params["w3"], params["b3"], params["g3"], params["bt3"], stride=1, pad=1)
    return jnp.transpose(x, (0, 3, 1, 2))


# ------------------------------- params ----------------------------------------
def _conv_init(key, co, ci, ks):
    kw, kb = jax.random.split(key)
    fan_in = ci * ks * ks
    bound = 1.0 / math.sqrt(fan_in)
    w = jax.random.uniform(kw, (co, ci, ks, ks), jnp.float32, -bound, bound)
    b = jax.random.uniform(kb, (co,), jnp.float32, -bound, bound)
    return w, b


def make_params(key, i, o, ks=3):
    k1, k2, k3 = jax.random.split(key, 3)
    w1, b1 = _conv_init(k1, o, i, ks)
    w2, b2 = _conv_init(k2, o, o, 3)
    w3, b3 = _conv_init(k3, o, o, 3)
    ones = jnp.ones((o,), jnp.float32)
    zeros = jnp.zeros((o,), jnp.float32)
    return {
        "w1": w1, "b1": b1, "g1": ones, "bt1": zeros,
        "w2": w2, "b2": b2, "g2": ones, "bt2": zeros,
        "w3": w3, "b3": b3, "g3": ones, "bt3": zeros,
    }


# --------------------------------- main -----------------------------------------
if __name__ == "__main__":
    key = jax.random.PRNGKey(0)
    k_x, k_p = jax.random.split(key)

    i_ch, o_ch = 4, 8
    x = jax.random.normal(k_x, (2, i_ch, 16, 16), jnp.float32)  # NCHW like PyTorch
    params = make_params(k_p, i_ch, o_ch)

    fwd = jax.jit(exact_conv_forward)
    out = jax.block_until_ready(fwd(x, params))

    ref = jax.block_until_ready(exact_conv_reference(x, params))
    assert out.shape == (2, o_ch, 8, 8), out.shape
    err = float(jnp.max(jnp.abs(out - ref)))
    assert jnp.allclose(out, ref, rtol=1e-3, atol=1e-3), err

    print("KERNEL_OK")
</pallas_src>

<mosaic_0001>
module attributes {stable_mosaic.version = 11 : i64} {
  func.func @kernel(%arg0: i32, %arg1: memref<4x256xf32, #tpu.memory_space<vmem>>, %arg2: memref<4x256xf32, #tpu.memory_space<vmem>>, %arg3: memref<4x256xf32, #tpu.memory_space<vmem>>, %arg4: memref<4x256xf32, #tpu.memory_space<vmem>>, %arg5: memref<8x256xf32, #tpu.memory_space<vmem>>, %arg6: memref<9x8x4xf32, #tpu.memory_space<vmem>>, %arg7: memref<9x8x8xf32, #tpu.memory_space<vmem>>, %arg8: memref<9x8x8xf32, #tpu.memory_space<vmem>>, %arg9: memref<3x8x1xf32, #tpu.memory_space<vmem>>, %arg10: memref<3x8x1xf32, #tpu.memory_space<vmem>>, %arg11: memref<8x256xf32, #tpu.memory_space<vmem>>, %arg12: memref<8x256xf32, #tpu.memory_space<vmem>>, %arg13: memref<8x256xf32, #tpu.memory_space<vmem>>, %arg14: memref<8x256xf32, #tpu.memory_space<vmem>>) attributes {dimension_semantics = [#tpu.dimension_semantics<arbitrary>], iteration_bounds = array<i64: 1>, scalar_prefetch = 0 : i64, scratch_operands = 3 : i64, tpu.core_type = #tpu.core_type<tc>, window_params = [{pipeline_mode = #tpu.pipeline_mode<synchronous>, transform_indices = @transform_0, window_bounds = array<i64: 4, 256>}, {pipeline_mode = #tpu.pipeline_mode<synchronous>, transform_indices = @transform_1, window_bounds = array<i64: 4, 256>}, {pipeline_mode = #tpu.pipeline_mode<synchronous>, transform_indices = @transform_2, window_bounds = array<i64: 4, 256>}, {pipeline_mode = #tpu.pipeline_mode<synchronous>, transform_indices = @transform_3, window_bounds = array<i64: 4, 256>}, {pipeline_mode = #tpu.pipeline_mode<synchronous>, transform_indices = @transform_4, window_bounds = array<i64: 8, 256>}, {pipeline_mode = #tpu.pipeline_mode<synchronous>, transform_indices = @transform_5, window_bounds = array<i64: 9, 8, 4>}, {pipeline_mode = #tpu.pipeline_mode<synchronous>, transform_indices = @transform_6, window_bounds = array<i64: 9, 8, 8>}, {pipeline_mode = #tpu.pipeline_mode<synchronous>, transform_indices = @transform_7, window_bounds = array<i64: 9, 8, 8>}, {pipeline_mode = #tpu.pipeline_mode<synchronous>, transform_indices = @transform_8, window_bounds = array<i64: 3, 8, 1>}, {pipeline_mode = #tpu.pipeline_mode<synchronous>, transform_indices = @transform_9, window_bounds = array<i64: 3, 8, 1>}, {pipeline_mode = #tpu.pipeline_mode<synchronous>, transform_indices = @transform_10, window_bounds = array<i64: 8, 256>}]} {
    %c0 = arith.constant 0 : index
    %c0_0 = arith.constant 0 : index
    %0 = vector.load %arg5[%c0, %c0_0] : memref<8x256xf32, #tpu.memory_space<vmem>>, vector<8x256xf32>
    %c0_1 = arith.constant 0 : index
    %c0_2 = arith.constant 0 : index
    %1 = vector.load %arg1[%c0_1, %c0_2] : memref<4x256xf32, #tpu.memory_space<vmem>>, vector<4x256xf32>
    %c0_3 = arith.constant 0 : index
    %c0_4 = arith.constant 0 : index
    %2 = vector.load %arg2[%c0_3, %c0_4] : memref<4x256xf32, #tpu.memory_space<vmem>>, vector<4x256xf32>
    %c0_5 = arith.constant 0 : index
    %c0_6 = arith.constant 0 : index
    %3 = vector.load %arg3[%c0_5, %c0_6] : memref<4x256xf32, #tpu.memory_space<vmem>>, vector<4x256xf32>
    %c0_7 = arith.constant 0 : index
    %c0_8 = arith.constant 0 : index
    %4 = vector.load %arg4[%c0_7, %c0_8] : memref<4x256xf32, #tpu.memory_space<vmem>>, vector<4x256xf32>
    %cst = arith.constant 0.000000e+00 : f32
    %5 = vector.broadcast %cst : f32 to vector<8x256xf32>
    %c0_9 = arith.constant 0 : index
    %c0_10 = arith.constant 0 : index
    %6 = vector.load %arg12[%c0_9, %c0_10] : memref<8x256xf32, #tpu.memory_space<vmem>>, vector<8x256xf32>
    tpu.vector_store %arg12[%c0_9, %c0_10], %5 {strides = array<i32>} : memref<8x256xf32, #tpu.memory_space<vmem>>, vector<8x256xf32>,
    %c0_11 = arith.constant 0 : index
    %c0_12 = arith.constant 0 : index
    %c0_13 = arith.constant 0 : index
    %7 = vector.load %arg6[%c0_11, %c0_12, %c0_13] : memref<9x8x4xf32, #tpu.memory_space<vmem>>, vector<1x8x4xf32>
    %8 = vector.shape_cast %7 : vector<1x8x4xf32> to vector<8x4xf32>
    %9 = vector.extract_strided_slice %8 {offsets = [0, 0], sizes = [8, 1], strides = [1, 1]} : vector<8x4xf32> to vector<8x1xf32>
    %10 = vector.extract_strided_slice %1 {offsets = [0, 0], sizes = [1, 256], strides = [1, 1]} : vector<4x256xf32> to vector<1x256xf32>
    %11 = vector.broadcast %9 : vector<8x1xf32> to vector<8x256xf32>
    %12 = vector.broadcast %10 : vector<1x256xf32> to vector<8x256xf32>
    %13 = arith.mulf %11, %12 : vector<8x256xf32>
    %14 = vector.extract_strided_slice %8 {offsets = [0, 1], sizes = [8, 1], strides = [1, 1]} : vector<8x4xf32> to vector<8x1xf32>
    %15 = vector.extract_strided_slice %1 {offsets = [1, 0], sizes = [1, 256], strides = [1, 1]} : vector<4x256xf32> to vector<1x256xf32>
    %16 = vector.broadcast %14 : vector<8x1xf32> to vector<8x256xf32>
    %17 = vector.broadcast %15 : vector<1x256xf32> to vector<8x256xf32>
    %18 = arith.mulf %16, %17 : vector<8x256xf32>
    %19 = arith.addf %13, %18 : vector<8x256xf32>
    %20 = vector.extract_strided_slice %8 {offsets = [0, 2], sizes = [8, 1], strides = [1, 1]} : vector<8x4xf32> to vector<8x1xf32>
    %21 = vector.extract_strided_slice %1 {offsets = [2, 0], sizes = [1, 256], strides = [1, 1]} : vector<4x256xf32> to vector<1x256xf32>
    %22 = vector.broadcast %20 : vector<8x1xf32> to vector<8x256xf32>
    %23 = vector.broadcast %21 : vector<1x256xf32> to vector<8x256xf32>
    %24 = arith.mulf %22, %23 : vector<8x256xf32>
    %25 = arith.addf %19, %24 : vector<8x256xf32>
    %26 = vector.extract_strided_slice %8 {offsets = [0, 3], sizes = [8, 1], strides = [1, 1]} : vector<8x4xf32> to vector<8x1xf32>
    %27 = vector.extract_strided_slice %1 {offsets = [3, 0], sizes = [1, 256], strides = [1, 1]} : vector<4x256xf32> to vector<1x256xf32>
    %28 = vector.broadcast %26 : vector<8x1xf32> to vector<8x256xf32>
    %29 = vector.broadcast %27 : vector<1x256xf32> to vector<8x256xf32>
    %30 = arith.mulf %28, %29 : vector<8x256xf32>
    %31 = arith.addf %25, %30 : vector<8x256xf32>
    %c0_14 = arith.constant 0 : index
    %c0_15 = arith.constant 0 : index
    %32 = vector.load %arg12[%c0_14, %c0_15] : memref<8x256xf32, #tpu.memory_space<vmem>>, vector<8x256xf32>
    %33 = arith.addf %32, %31 : vector<8x256xf32>
    %c0_16 = arith.constant 0 : index
    %c0_17 = arith.constant 0 : index
    %34 = vector.load %arg12[%c0_16, %c0_17] : memref<8x256xf32, #tpu.memory_space<vmem>>, vector<8x256xf32>
    tpu.vector_store %arg12[%c0_16, %c0_17], %33 {strides = array<i32>} : memref<8x256xf32, #tpu.memory_space<vmem>>, vector<8x256xf32>,
    %c1 = arith.constant 1 : index
    %c0_18 = arith.constant 0 : index
    %c0_19 = arith.constant 0 : index
    %35 = vector.load %arg6[%c1, %c0_18, %c0_19] : memref<9x8x4xf32, #tpu.memory_space<vmem>>, vector<1x8x4xf32>
    %36 = vector.shape_cast %35 : vector<1x8x4xf32> to vector<8x4xf32>
    %37 = vector.extract_strided_slice %36 {offsets = [0, 0], sizes = [8, 1], strides = [1, 1]} : vector<8x4xf32> to vector<8x1xf32>
    %38 = vector.extract_strided_slice %2 {offsets = [0, 0], sizes = [1, 256], strides = [1, 1]} : vector<4x256xf32> to vector<1x256xf32>
    %39 = vector.broadcast %37 : vector<8x1xf32> to vector<8x256xf32>
    %40 = vector.broadcast %38 : vector<1x256xf32> to vector<8x256xf32>
    %41 = arith.mulf %39, %40 : vector<8x256xf32>
    %42 = vector.extract_strided_slice %36 {offsets = [0, 1], sizes = [8, 1], strides = [1, 1]} : vector<8x4xf32> to vector<8x1xf32>
    %43 = vector.extract_strided_slice %2 {offsets = [1, 0], sizes = [1, 256], strides = [1, 1]} : vector<4x256xf32> to vector<1x256xf32>
    %44 = vector.broadcast %42 : vector<8x1xf32> to vector<8x256xf32>
    %45 = vector.broadcast %43 : vector<1x256xf32> to vector<8x256xf32>
    %46 = arith.mulf %44, %45 : vector<8x256xf32>
    %47 = arith.addf %41, %46 : vector<8x256xf32>
    %48 = vector.extract_strided_slice %36 {offsets = [0, 2], sizes = [8, 1], strides = [1, 1]} : vector<8x4xf32> to vector<8x1xf32>
    %49 = vector.extract_strided_slice %2 {offsets = [2, 0], sizes = [1, 256], strides = [1, 1]} : vector<4x256xf32> to vector<1x256xf32>
    %50 = vector.broadcast %48 : vector<8x1xf32> to vector<8x256xf32>
    %51 = vector.broadcast %49 : vector<1x256xf32> to vector<8x256xf32>
    %52 = arith.mulf %50, %51 : vector<8x256xf32>
    %53 = arith.addf %47, %52 : vector<8x256xf32>
    %54 = vector.extract_strided_slice %36 {offsets = [0, 3], sizes = [8, 1], strides = [1, 1]} : vector<8x4xf32> to vector<8x1xf32>
    %55 = vector.extract_strided_slice %2 {offsets = [3, 0], sizes = [1, 256], strides = [1, 1]} : vector<4x256xf32> to vector<1x256xf32>
    %56 = vector.broadcast %54 : vector<8x1xf32> to vector<8x256xf32>
    %57 = vector.broadcast %55 : vector<1x256xf32> to vector<8x256xf32>
    %58 = arith.mulf %56, %57 : vector<8x256xf32>
    %59 = arith.addf %53, %58 : vector<8x256xf32>
    %c0_20 = arith.constant 0 : index
    %c0_21 = arith.constant 0 : index
    %60 = vector.load %arg12[%c0_20, %c0_21] : memref<8x256xf32, #tpu.memory_space<vmem>>, vector<8x256xf32>
    %61 = arith.addf %60, %59 : vector<8x256xf32>
    %c0_22 = arith.constant 0 : index
    %c0_23 = arith.constant 0 : index
    %62 = vector.load %arg12[%c0_22, %c0_23] : memref<8x256xf32, #tpu.memory_space<vmem>>, vector<8x256xf32>
    tpu.vector_store %arg12[%c0_22, %c0_23], %61 {strides = array<i32>} : memref<8x256xf32, #tpu.memory_space<vmem>>, vector<8x256xf32>,
    %c2 = arith.constant 2 : index
    %c0_24 = arith.constant 0 : index
    %c0_25 = arith.constant 0 : index
    %63 = vector.load %arg6[%c2, %c0_24, %c0_25] : memref<9x8x4xf32, #tpu.memory_space<vmem>>, vector<1x8x4xf32>
    %64 = vector.shape_cast %63 : vector<1x8x4xf32> to vector<8x4xf32>
    %65 = vector.extract_strided_slice %1 {offsets = [0, 1], sizes = [4, 255], strides = [1, 1]} : vector<4x256xf32> to vector<4x255xf32>
    %66 = vector.extract_strided_slice %1 {offsets = [0, 0], sizes = [4, 1], strides = [1, 1]} : vector<4x256xf32> to vector<4x1xf32>
    %67 = tpu.concatenate %65, %66 in 1 : vector<4x255xf32>, vector<4x1xf32> -> vector<4x256xf32>
    %68 = vector.extract_strided_slice %64 {offsets = [0, 0], sizes = [8, 1], strides = [1, 1]} : vector<8x4xf32> to vector<8x1xf32>
    %69 = vector.extract_strided_slice %67 {offsets = [0, 0], sizes = [1, 256], strides = [1, 1]} : vector<4x256xf32> to vector<1x256xf32>
    %70 = vector.broadcast %68 : vector<8x1xf32> to vector<8x256xf32>
    %71 = vector.broadcast %69 : vector<1x256xf32> to vector<8x256xf32>
    %72 = arith.mulf %70, %71 : vector<8x256xf32>
    %73 = vector.extract_strided_slice %64 {offsets = [0, 1], sizes = [8, 1], strides = [1, 1]} : vector<8x4xf32> to vector<8x1xf32>
    %74 = vector.extract_strided_slice %67 {offsets = [1, 0], sizes = [1, 256], strides = [1, 1]} : vector<4x256xf32> to vector<1x256xf32>
    %75 = vector.broadcast %73 : vector<8x1xf32> to vector<8x256xf32>
    %76 = vector.broadcast %74 : vector<1x256xf32> to vector<8x256xf32>
    %77 = arith.mulf %75, %76 : vector<8x256xf32>
    %78 = arith.addf %72, %77 : vector<8x256xf32>
    %79 = vector.extract_strided_slice %64 {offsets = [0, 2], sizes = [8, 1], strides = [1, 1]} : vector<8x4xf32> to vector<8x1xf32>
    %80 = vector.extract_strided_slice %67 {offsets = [2, 0], sizes = [1, 256], strides = [1, 1]} : vector<4x256xf32> to vector<1x256xf32>
    %81 = vector.broadcast %79 : vector<8x1xf32> to vector<8x256xf32>
    %82 = vector.broadcast %80 : vector<1x256xf32> to vector<8x256xf32>
    %83 = arith.mulf %81, %82 : vector<8x256xf32>
    %84 = arith.addf %78, %83 : vector<8x256xf32>
    %85 = vector.extract_strided_slice %64 {offsets = [0, 3], sizes = [8, 1], strides = [1, 1]} : vector<8x4xf32> to vector<8x1xf32>
    %86 = vector.extract_strided_slice %67 {offsets = [3, 0], sizes = [1, 256], strides = [1, 1]} : vector<4x256xf32> to vector<1x256xf32>
    %87 = vector.broadcast %85 : vector<8x1xf32> to vector<8x256xf32>
    %88 = vector.broadcast %86 : vector<1x256xf32> to vector<8x256xf32>
    %89 = arith.mulf %87, %88 : vector<8x256xf32>
    %90 = arith.addf %84, %89 : vector<8x256xf32>
    %c0_26 = arith.constant 0 : index
    %c0_27 = arith.constant 0 : index
    %91 = vector.load %arg12[%c0_26, %c0_27] : memref<8x256xf32, #tpu.memory_space<vmem>>, vector<8x256xf32>
    %92 = arith.addf %91, %90 : vector<8x256xf32>
    %c0_28 = arith.constant 0 : index
    %c0_29 = arith.constant 0 : index
    %93 = vector.load %arg12[%c0_28, %c0_29] : memref<8x256xf32, #tpu.memory_space<vmem>>, vector<8x256xf32>
    tpu.vector_store %arg12[%c0_28, %c0_29], %92 {strides = array<i32>} : memref<8x256xf32, #tpu.memory_space<vmem>>, vector<8x256xf32>,
    %c3 = arith.constant 3 : index
    %c0_30 = arith.constant 0 : index
    %c0_31 = arith.constant 0 : index
    %94 = vector.load %arg6[%c3, %c0_30, %c0_31] : memref<9x8x4xf32, #tpu.memory_space<vmem>>, vector<1x8x4xf32>
    %95 = vector.shape_cast %94 : vector<1x8x4xf32> to vector<8x4xf32>
    %96 = vector.extract_strided_slice %95 {offsets = [0, 0], sizes = [8, 1], strides = [1, 1]} : vector<8x4xf32> to vector<8x1xf32>
    %97 = vector.extract_strided_slice %3 {offsets = [0, 0], sizes = [1, 256], strides = [1, 1]} : vector<4x256xf32> to vector<1x256xf32>
    %98 = vector.broadcast %96 : vector<8x1xf32> to vector<8x256xf32>
    %99 = vector.broadcast %97 : vector<1x256xf32> to vector<8x256xf32>
    %100 = arith.mulf %98, %99 : vector<8x256xf32>
    %101 = vector.extract_strided_slice %95 {offsets = [0, 1], sizes = [8, 1], strides = [1, 1]} : vector<8x4xf32> to vector<8x1xf32>
    %102 = vector.extract_strided_slice %3 {offsets = [1, 0], sizes = [1, 256], strides = [1, 1]} : vector<4x256xf32> to vector<1x256xf32>
    %103 = vector.broadcast %101 : vector<8x1xf32> to vector<8x256xf32>
    %104 = vector.broadcast %102 : vector<1x256xf32> to vector<8x256xf32>
    %105 = arith.mulf %103, %104 : vector<8x256xf32>
    %106 = arith.addf %100, %105 : vector<8x256xf32>
    %107 = vector.extract_strided_slice %95 {offsets = [0, 2], sizes = [8, 1], strides = [1, 1]} : vector<8x4xf32> to vector<8x1xf32>
    %108 = vector.extract_strided_slice %3 {offsets = [2, 0], sizes = [1, 256], strides = [1, 1]} : vector<4x256xf32> to vector<1x256xf32>
    %109 = vector.broadcast %107 : vector<8x1xf32> to vector<8x256xf32>
    %110 = vector.broadcast %108 : vector<1x256xf32> to vector<8x256xf32>
    %111 = arith.mulf %109, %110 : vector<8x256xf32>
    %112 = arith.addf %106, %111 : vector<8x256xf32>
    %113 = vector.extract_strided_slice %95 {offsets = [0, 3], sizes = [8, 1], strides = [1, 1]} : vector<8x4xf32> to vector<8x1xf32>
    %114 = vector.extract_strided_slice %3 {offsets = [3, 0], sizes = [1, 256], strides = [1, 1]} : vector<4x256xf32> to vector<1x256xf32>
    %115 = vector.broadcast %113 : vector<8x1xf32> to vector<8x256xf32>
    %116 = vector.broadcast %114 : vector<1x256xf32> to vector<8x256xf32>
    %117 = arith.mulf %115, %116 : vector<8x256xf32>
    %118 = arith.addf %112, %117 : vector<8x256xf32>
    %c0_32 = arith.constant 0 : index
    %c0_33 = arith.constant 0 : index
    %119 = vector.load %arg12[%c0_32, %c0_33] : memref<8x256xf32, #tpu.memory_space<vmem>>, vector<8x256xf32>
    %120 = arith.addf %119, %118 : vector<8x256xf32>
    %c0_34 = arith.constant 0 : index
    %c0_35 = arith.constant 0 : index
    %121 = vector.load %arg12[%c0_34, %c0_35] : memref<8x256xf32, #tpu.memory_space<vmem>>, vector<8x256xf32>
    tpu.vector_store %arg12[%c0_34, %c0_35], %120 {strides = array<i32>} : memref<8x256xf32, #tpu.memory_space<vmem>>, vector<8x256xf32>,
    %c4 = arith.constant 4 : index
    %c0_36 = arith.constant 0 : index
    %c0_37 = arith.constant 0 : index
    %122 = vector.load %arg6[%c4, %c0_36, %c0_37] : memref<9x8x4xf32, #tpu.memory_space<vmem>>, vector<1x8x4xf32>
    %123 = vector.shape_cast %122 : vector<1x8x4xf32> to vector<8x4xf32>
    %124 = vector.extract_strided_slice %123 {offsets = [0, 0], sizes = [8, 1], strides = [1, 1]} : vector<8x4xf32> to vector<8x1xf32>
    %125 = vector.extract_strided_slice %4 {offsets = [0, 0], sizes = [1, 256], strides = [1, 1]} : vector<4x256xf32> to vector<1x256xf32>
    %126 = vector.broadcast %124 : vector<8x1xf32> to vector<8x256xf32>
    %127 = vector.broadcast %125 : vector<1x256xf32> to vector<8x256xf32>
    %128 = arith.mulf %126, %127 : vector<8x256xf32>
    %129 = vector.extract_strided_slice %123 {offsets = [0, 1], sizes = [8, 1], strides = [1, 1]} : vector<8x4xf32> to vector<8x1xf32>
    %130 = vector.extract_strided_slice %4 {offsets = [1, 0], sizes = [1, 256], strides = [1, 1]} : vector<4x256xf32> to vector<1x256xf32>
    %131 = vector.broadcast %129 : vector<8x1xf32> to vector<8x256xf32>
    %132 = vector.broadcast %130 : vector<1x256xf32> to vector<8x256xf32>
    %133 = arith.mulf %131, %132 : vector<8x256xf32>
    %134 = arith.addf %128, %133 : vector<8x256xf32>
    %135 = vector.extract_strided_slice %123 {offsets = [0, 2], sizes = [8, 1], strides = [1, 1]} : vector<8x4xf32> to vector<8x1xf32>
    %136 = vector.extract_strided_slice %4 {offsets = [2, 0], sizes = [1, 256], strides = [1, 1]} : vector<4x256xf32> to vector<1x256xf32>
    %137 = vector.broadcast %135 : vector<8x1xf32> to vector<8x256xf32>
    %138 = vector.broadcast %136 : vector<1x256xf32> to vector<8x256xf32>
    %139 = arith.mulf %137, %138 : vector<8x256xf32>
    %140 = arith.addf %134, %139 : vector<8x256xf32>
    %141 = vector.extract_strided_slice %123 {offsets = [0, 3], sizes = [8, 1], strides = [1, 1]} : vector<8x4xf32> to vector<8x1xf32>
    %142 = vector.extract_strided_slice %4 {offsets = [3, 0], sizes = [1, 256], strides = [1, 1]} : vector<4x256xf32> to vector<1x256xf32>
    %143 = vector.broadcast %141 : vector<8x1xf32> to vector<8x256xf32>
    %144 = vector.broadcast %142 : vector<1x256xf32> to vector<8x256xf32>
    %145 = arith.mulf %143, %144 : vector<8x256xf32>
    %146 = arith.addf %140, %145 : vector<8x256xf32>
    %c0_38 = arith.constant 0 : index
    %c0_39 = arith.constant 0 : index
    %147 = vector.load %arg12[%c0_38, %c0_39] : memref<8x256xf32, #tpu.memory_space<vmem>>, vector<8x256xf32>
    %148 = arith.addf %147, %146 : vector<8x256xf32>
    %c0_40 = arith.constant 0 : index
    %c0_41 = arith.constant 0 : index
    %149 = vector.load %arg12[%c0_40, %c0_41] : memref<8x256xf32, #tpu.memory_space<vmem>>, vector<8x256xf32>
    tpu.vector_store %arg12[%c0_40, %c0_41], %148 {strides = array<i32>} : memref<8x256xf32, #tpu.memory_space<vmem>>, vector<8x256xf32>,
    %c5 = arith.constant 5 : index
    %c0_42 = arith.constant 0 : index
    %c0_43 = arith.constant 0 : index
    %150 = vector.load %arg6[%c5, %c0_42, %c0_43] : memref<9x8x4xf32, #tpu.memory_space<vmem>>, vector<1x8x4xf32>
    %151 = vector.shape_cast %150 : vector<1x8x4xf32> to vector<8x4xf32>
    %152 = vector.extract_strided_slice %3 {offsets = [0, 1], sizes = [4, 255], strides = [1, 1]} : vector<4x256xf32> to vector<4x255xf32>
    %153 = vector.extract_strided_slice %3 {offsets = [0, 0], sizes = [4, 1], strides = [1, 1]} : vector<4x256xf32> to vector<4x1xf32>
    %154 = tpu.concatenate %152, %153 in 1 : vector<4x255xf32>, vector<4x1xf32> -> vector<4x256xf32>
    %155 = vector.extract_strided_slice %151 {offsets = [0, 0], sizes = [8, 1], strides = [1, 1]} : vector<8x4xf32> to vector<8x1xf32>
    %156 = vector.extract_strided_slice %154 {offsets = [0, 0], sizes = [1, 256], strides = [1, 1]} : vector<4x256xf32> to vector<1x256xf32>
    %157 = vector.broadcast %155 : vector<8x1xf32> to vector<8x256xf32>
    %158 = vector.broadcast %156 : vector<1x256xf32> to vector<8x256xf32>
    %159 = arith.mulf %157, %158 : vector<8x256xf32>
    %160 = vector.extract_strided_slice %151 {offsets = [0, 1], sizes = [8, 1], strides = [1, 1]} : vector<8x4xf32> to vector<8x1xf32>
    %161 = vector.extract_strided_slice %154 {offsets = [1, 0], sizes = [1, 256], strides = [1, 1]} : vector<4x256xf32> to vector<1x256xf32>
    %162 = vector.broadcast %160 : vector<8x1xf32> to vector<8x256xf32>
    %163 = vector.broadcast %161 : vector<1x256xf32> to vector<8x256xf32>
    %164 = arith.mulf %162, %163 : vector<8x256xf32>
    %165 = arith.addf %159, %164 : vector<8x256xf32>
    %166 = vector.extract_strided_slice %151 {offsets = [0, 2], sizes = [8, 1], strides = [1, 1]} : vector<8x4xf32> to vector<8x1xf32>
    %167 = vector.extract_strided_slice %154 {offsets = [2, 0], sizes = [1, 256], strides = [1, 1]} : vector<4x256xf32> to vector<1x256xf32>
    %168 = vector.broadcast %166 : vector<8x1xf32> to vector<8x256xf32>
    %169 = vector.broadcast %167 : vector<1x256xf32> to vector<8x256xf32>
    %170 = arith.mulf %168, %169 : vector<8x256xf32>
    %171 = arith.addf %165, %170 : vector<8x256xf32>
    %172 = vector.extract_strided_slice %151 {offsets = [0, 3], sizes = [8, 1], strides = [1, 1]} : vector<8x4xf32> to vector<8x1xf32>
    %173 = vector.extract_strided_slice %154 {offsets = [3, 0], sizes = [1, 256], strides = [1, 1]} : vector<4x256xf32> to vector<1x256xf32>
    %174 = vector.broadcast %172 : vector<8x1xf32> to vector<8x256xf32>
    %175 = vector.broadcast %173 : vector<1x256xf32> to vector<8x256xf32>
    %176 = arith.mulf %174, %175 : vector<8x256xf32>
    %177 = arith.addf %171, %176 : vector<8x256xf32>
    %c0_44 = arith.constant 0 : index
    %c0_45 = arith.constant 0 : index
    %178 = vector.load %arg12[%c0_44, %c0_45] : memref<8x256xf32, #tpu.memory_space<vmem>>, vector<8x256xf32>
    %179 = arith.addf %178, %177 : vector<8x256xf32>
    %c0_46 = arith.constant 0 : index
    %c0_47 = arith.constant 0 : index
    %180 = vector.load %arg12[%c0_46, %c0_47] : memref<8x256xf32, #tpu.memory_space<vmem>>, vector<8x256xf32>
    tpu.vector_store %arg12[%c0_46, %c0_47], %179 {strides = array<i32>} : memref<8x256xf32, #tpu.memory_space<vmem>>, vector<8x256xf32>,
    %c6 = arith.constant 6 : index
    %c0_48 = arith.constant 0 : index
    %c0_49 = arith.constant 0 : index
    %181 = vector.load %arg6[%c6, %c0_48, %c0_49] : memref<9x8x4xf32, #tpu.memory_space<vmem>>, vector<1x8x4xf32>
    %182 = vector.shape_cast %181 : vector<1x8x4xf32> to vector<8x4xf32>
    %183 = vector.extract_strided_slice %1 {offsets = [0, 10], sizes = [4, 246], strides = [1, 1]} : vector<4x256xf32> to vector<4x246xf32>
    %184 = vector.extract_strided_slice %1 {offsets = [0, 0], sizes = [4, 10], strides = [1, 1]} : vector<4x256xf32> to vector<4x10xf32>
    %185 = tpu.concatenate %183, %184 in 1 : vector<4x246xf32>, vector<4x10xf32> -> vector<4x256xf32>
    %186 = vector.extract_strided_slice %182 {offsets = [0, 0], sizes = [8, 1], strides = [1, 1]} : vector<8x4xf32> to vector<8x1xf32>
    %187 = vector.extract_strided_slice %185 {offsets = [0, 0], sizes = [1, 256], strides = [1, 1]} : vector<4x256xf32> to vector<1x256xf32>
    %188 = vector.broadcast %186 : vector<8x1xf32> to vector<8x256xf32>
    %189 = vector.broadcast %187 : vector<1x256xf32> to vector<8x256xf32>
    %190 = arith.mulf %188, %189 : vector<8x256xf32>
    %191 = vector.extract_strided_slice %182 {offsets = [0, 1], sizes = [8, 1], strides = [1, 1]} : vector<8x4xf32> to vector<8x1xf32>
    %192 = vector.extract_strided_slice %185 {offsets = [1, 0], sizes = [1, 256], strides = [1, 1]} : vector<4x256xf32> to vector<1x256xf32>
    %193 = vector.broadcast %191 : vector<8x1xf32> to vector<8x256xf32>
    %194 = vector.broadcast %192 : vector<1x256xf32> to vector<8x256xf32>
    %195 = arith.mulf %193, %194 : vector<8x256xf32>
    %196 = arith.addf %190, %195 : vector<8x256xf32>
    %197 = vector.extract_strided_slice %182 {offsets = [0, 2], sizes = [8, 1], strides = [1, 1]} : vector<8x4xf32> to vector<8x1xf32>
    %198 = vector.extract_strided_slice %185 {offsets = [2, 0], sizes = [1, 256], strides = [1, 1]} : vector<4x256xf32> to vector<1x256xf32>
    %199 = vector.broadcast %197 : vector<8x1xf32> to vector<8x256xf32>
    %200 = vector.broadcast %198 : vector<1x256xf32> to vector<8x256xf32>
    %201 = arith.mulf %199, %200 : vector<8x256xf32>
    %202 = arith.addf %196, %201 : vector<8x256xf32>
    %203 = vector.extract_strided_slice %182 {offsets = [0, 3], sizes = [8, 1], strides = [1, 1]} : vector<8x4xf32> to vector<8x1xf32>
    %204 = vector.extract_strided_slice %185 {offsets = [3, 0], sizes = [1, 256], strides = [1, 1]} : vector<4x256xf32> to vector<1x256xf32>
    %205 = vector.broadcast %203 : vector<8x1xf32> to vector<8x256xf32>
    %206 = vector.broadcast %204 : vector<1x256xf32> to vector<8x256xf32>
    %207 = arith.mulf %205, %206 : vector<8x256xf32>
    %208 = arith.addf %202, %207 : vector<8x256xf32>
    %c0_50 = arith.constant 0 : index
    %c0_51 = arith.constant 0 : index
    %209 = vector.load %arg12[%c0_50, %c0_51] : memref<8x256xf32, #tpu.memory_space<vmem>>, vector<8x256xf32>
    %210 = arith.addf %209, %208 : vector<8x256xf32>
    %c0_52 = arith.constant 0 : index
    %c0_53 = arith.constant 0 : index
    %211 = vector.load %arg12[%c0_52, %c0_53] : memref<8x256xf32, #tpu.memory_space<vmem>>, vector<8x256xf32>
    tpu.vector_store %arg12[%c0_52, %c0_53], %210 {strides = array<i32>} : memref<8x256xf32, #tpu.memory_space<vmem>>, vector<8x256xf32>,
    %c7 = arith.constant 7 : index
    %c0_54 = arith.constant 0 : index
    %c0_55 = arith.constant 0 : index
    %212 = vector.load %arg6[%c7, %c0_54, %c0_55] : memref<9x8x4xf32, #tpu.memory_space<vmem>>, vector<1x8x4xf32>
    %213 = vector.shape_cast %212 : vector<1x8x4xf32> to vector<8x4xf32>
    %214 = vector.extract_strided_slice %2 {offsets = [0, 10], sizes = [4, 246], strides = [1, 1]} : vector<4x256xf32> to vector<4x246xf32>
    %215 = vector.extract_strided_slice %2 {offsets = [0, 0], sizes = [4, 10], strides = [1, 1]} : vector<4x256xf32> to vector<4x10xf32>
    %216 = tpu.concatenate %214, %215 in 1 : vector<4x246xf32>, vector<4x10xf32> -> vector<4x256xf32>
    %217 = vector.extract_strided_slice %213 {offsets = [0, 0], sizes = [8, 1], strides = [1, 1]} : vector<8x4xf32> to vector<8x1xf32>
    %218 = vector.extract_strided_slice %216 {offsets = [0, 0], sizes = [1, 256], strides = [1, 1]} : vector<4x256xf32> to vector<1x256xf32>
    %219 = vector.broadcast %217 : vector<8x1xf32> to vector<8x256xf32>
    %220 = vector.broadcast %218 : vector<1x256xf32> to vector<8x256xf32>
    %221 = arith.mulf %219, %220 : vector<8x256xf32>
    %222 = vector.extract_strided_slice %213 {offsets = [0, 1], sizes = [8, 1], strides = [1, 1]} : vector<8x4xf32> to vector<8x1xf32>
    %223 = vector.extract_strided_slice %216 {offsets = [1, 0], sizes = [1, 256], strides = [1, 1]} : vector<4x256xf32> to vector<1x256xf32>
    %224 = vector.broadcast %222 : vector<8x1xf32> to vector<8x256xf32>
    %225 = vector.broadcast %223 : vector<1x256xf32> to vector<8x256xf32>
    %226 = arith.mulf %224, %225 : vector<8x256xf32>
    %227 = arith.addf %221, %226 : vector<8x256xf32>
    %228 = vector.extract_strided_slice %213 {offsets = [0, 2], sizes = [8, 1], strides = [1, 1]} : vector<8x4xf32> to vector<8x1xf32>
    %229 = vector.extract_strided_slice %216 {offsets = [2, 0], sizes = [1, 256], strides = [1, 1]} : vector<4x256xf32> to vector<1x256xf32>
    %230 = vector.broadcast %228 : vector<8x1xf32> to vector<8x256xf32>
    %231 = vector.broadcast %229 : vector<1x256xf32> to vector<8x256xf32>
    %232 = arith.mulf %230, %231 : vector<8x256xf32>
    %233 = arith.addf %227, %232 : vector<8x256xf32>
    %234 = vector.extract_strided_slice %213 {offsets = [0, 3], sizes = [8, 1], strides = [1, 1]} : vector<8x4xf32> to vector<8x1xf32>
    %235 = vector.extract_strided_slice %216 {offsets = [3, 0], sizes = [1, 256], strides = [1, 1]} : vector<4x256xf32> to vector<1x256xf32>
    %236 = vector.broadcast %234 : vector<8x1xf32> to vector<8x256xf32>
    %237 = vector.broadcast %235 : vector<1x256xf32> to vector<8x256xf32>
    %238 = arith.mulf %236, %237 : vector<8x256xf32>
    %239 = arith.addf %233, %238 : vector<8x256xf32>
    %c0_56 = arith.constant 0 : index
    %c0_57 = arith.constant 0 : index
    %240 = vector.load %arg12[%c0_56, %c0_57] : memref<8x256xf32, #tpu.memory_space<vmem>>, vector<8x256xf32>
    %241 = arith.addf %240, %239 : vector<8x256xf32>
    %c0_58 = arith.constant 0 : index
    %c0_59 = arith.constant 0 : index
    %242 = vector.load %arg12[%c0_58, %c0_59] : memref<8x256xf32, #tpu.memory_space<vmem>>, vector<8x256xf32>
    tpu.vector_store %arg12[%c0_58, %c0_59], %241 {strides = array<i32>} : memref<8x256xf32, #tpu.memory_space<vmem>>, vector<8x256xf32>,
    %c8 = arith.constant 8 : index
    %c0_60 = arith.constant 0 : index
    %c0_61 = arith.constant 0 : index
    %243 = vector.load %arg6[%c8, %c0_60, %c0_61] : memref<9x8x4xf32, #tpu.memory_space<vmem>>, vector<1x8x4xf32>
    %244 = vector.shape_cast %243 : vector<1x8x4xf32> to vector<8x4xf32>
    %245 = vector.extract_strided_slice %1 {offsets = [0, 11], sizes = [4, 245], strides = [1, 1]} : vector<4x256xf32> to vector<4x245xf32>
    %246 = vector.extract_strided_slice %1 {offsets = [0, 0], sizes = [4, 11], strides = [1, 1]} : vector<4x256xf32> to vector<4x11xf32>
    %247 = tpu.concatenate %245, %246 in 1 : vector<4x245xf32>, vector<4x11xf32> -> vector<4x256xf32>
    %248 = vector.extract_strided_slice %244 {offsets = [0, 0], sizes = [8, 1], strides = [1, 1]} : vector<8x4xf32> to vector<8x1xf32>
    %249 = vector.extract_strided_slice %247 {offsets = [0, 0], sizes = [1, 256], strides = [1, 1]} : vector<4x256xf32> to vector<1x256xf32>
    %250 = vector.broadcast %248 : vector<8x1xf32> to vector<8x256xf32>
    %251 = vector.broadcast %249 : vector<1x256xf32> to vector<8x256xf32>
    %252 = arith.mulf %250, %251 : vector<8x256xf32>
    %253 = vector.extract_strided_slice %244 {offsets = [0, 1], sizes = [8, 1], strides = [1, 1]} : vector<8x4xf32> to vector<8x1xf32>
    %254 = vector.extract_strided_slice %247 {offsets = [1, 0], sizes = [1, 256], strides = [1, 1]} : vector<4x256xf32> to vector<1x256xf32>
    %255 = vector.broadcast %253 : vector<8x1xf32> to vector<8x256xf32>
    %256 = vector.broadcast %254 : vector<1x256xf32> to vector<8x256xf32>
    %257 = arith.mulf %255, %256 : vector<8x256xf32>
    %258 = arith.addf %252, %257 : vector<8x256xf32>
    %259 = vector.extract_strided_slice %244 {offsets = [0, 2], sizes = [8, 1], strides = [1, 1]} : vector<8x4xf32> to vector<8x1xf32>
    %260 = vector.extract_strided_slice %247 {offsets = [2, 0], sizes = [1, 256], strides = [1, 1]} : vector<4x256xf32> to vector<1x256xf32>
    %261 = vector.broadcast %259 : vector<8x1xf32> to vector<8x256xf32>
    %262 = vector.broadcast %260 : vector<1x256xf32> to vector<8x256xf32>
    %263 = arith.mulf %261, %262 : vector<8x256xf32>
    %264 = arith.addf %258, %263 : vector<8x256xf32>
    %265 = vector.extract_strided_slice %244 {offsets = [0, 3], sizes = [8, 1], strides = [1, 1]} : vector<8x4xf32> to vector<8x1xf32>
    %266 = vector.extract_strided_slice %247 {offsets = [3, 0], sizes = [1, 256], strides = [1, 1]} : vector<4x256xf32> to vector<1x256xf32>
    %267 = vector.broadcast %265 : vector<8x1xf32> to vector<8x256xf32>
    %268 = vector.broadcast %266 : vector<1x256xf32> to vector<8x256xf32>
    %269 = arith.mulf %267, %268 : vector<8x256xf32>
    %270 = arith.addf %264, %269 : vector<8x256xf32>
    %c0_62 = arith.constant 0 : index
    %c0_63 = arith.constant 0 : index
    %271 = vector.load %arg12[%c0_62, %c0_63] : memref<8x256xf32, #tpu.memory_space<vmem>>, vector<8x256xf32>
    %272 = arith.addf %271, %270 : vector<8x256xf32>
    %c0_64 = arith.constant 0 : index
    %c0_65 = arith.constant 0 : index
    %273 = vector.load %arg12[%c0_64, %c0_65] : memref<8x256xf32, #tpu.memory_space<vmem>>, vector<8x256xf32>
    tpu.vector_store %arg12[%c0_64, %c0_65], %272 {strides = array<i32>} : memref<8x256xf32, #tpu.memory_space<vmem>>, vector<8x256xf32>,
    %c0_66 = arith.constant 0 : index
    %c0_67 = arith.constant 0 : index
    %274 = vector.load %arg12[%c0_66, %c0_67] : memref<8x256xf32, #tpu.memory_space<vmem>>, vector<8x256xf32>
    %275 = arith.mulf %274, %0 : vector<8x256xf32>
    %cst_68 = arith.constant dense<0.000000e+00> : vector<8xf32>
    %276 = vector.multi_reduction <add>, %275, %cst_68 [1] : vector<8x256xf32> to vector<8xf32>
    %277 = vector.shape_cast %276 : vector<8xf32> to vector<8x1xf32>
    %cst_69 = arith.constant 7.812500e-03 : f32
    %278 = vector.broadcast %cst_69 : f32 to vector<8x1xf32>
    %279 = arith.mulf %277, %278 : vector<8x1xf32>
    %280 = vector.broadcast %279 : vector<8x1xf32> to vector<8x256xf32>
    %281 = arith.subf %274, %280 : vector<8x256xf32>
    %282 = arith.mulf %281, %0 : vector<8x256xf32>
    %283 = arith.mulf %282, %282 : vector<8x256xf32>
    %cst_70 = arith.constant dense<0.000000e+00> : vector<8xf32>
    %284 = vector.multi_reduction <add>, %283, %cst_70 [1] : vector<8x256xf32> to vector<8xf32>
    %285 = vector.shape_cast %284 : vector<8xf32> to vector<8x1xf32>
    %cst_71 = arith.constant 7.812500e-03 : f32
    %286 = vector.broadcast %cst_71 : f32 to vector<8x1xf32>
    %287 = arith.mulf %285, %286 : vector<8x1xf32>
    %c0_72 = arith.constant 0 : index
    %c0_73 = arith.constant 0 : index
    %c0_74 = arith.constant 0 : index
    %288 = vector.load %arg9[%c0_72, %c0_73, %c0_74] : memref<3x8x1xf32, #tpu.memory_space<vmem>>, vector<1x8x1xf32>
    %289 = vector.shape_cast %288 : vector<1x8x1xf32> to vector<8x1xf32>
    %cst_75 = arith.constant 9.99999974E-6 : f32
    %290 = vector.broadcast %cst_75 : f32 to vector<8x1xf32>
    %291 = arith.addf %287, %290 : vector<8x1xf32>
    %292 = math.rsqrt %291 : vector<8x1xf32>
    %293 = arith.mulf %289, %292 : vector<8x1xf32>
    %c0_76 = arith.constant 0 : index
    %c0_77 = arith.constant 0 : index
    %c0_78 = arith.constant 0 : index
    %294 = vector.load %arg10[%c0_76, %c0_77, %c0_78] : memref<3x8x1xf32, #tpu.memory_space<vmem>>, vector<1x8x1xf32>
    %295 = vector.shape_cast %294 : vector<1x8x1xf32> to vector<8x1xf32>
    %296 = arith.mulf %279, %293 : vector<8x1xf32>
    %297 = arith.subf %295, %296 : vector<8x1xf32>
    %298 = vector.broadcast %293 : vector<8x1xf32> to vector<8x256xf32>
    %299 = arith.mulf %274, %298 : vector<8x256xf32>
    %300 = vector.broadcast %297 : vector<8x1xf32> to vector<8x256xf32>
    %301 = arith.addf %299, %300 : vector<8x256xf32>
    %cst_79 = arith.constant 0.000000e+00 : f32
    %302 = vector.broadcast %cst_79 : f32 to vector<8x256xf32>
    %303 = arith.maximumf %301, %302 : vector<8x256xf32>
    %304 = arith.mulf %303, %0 : vector<8x256xf32>
    %c0_80 = arith.constant 0 : index
    %c0_81 = arith.constant 0 : index
    %305 = vector.load %arg13[%c0_80, %c0_81] : memref<8x256xf32, #tpu.memory_space<vmem>>, vector<8x256xf32>
    tpu.vector_store %arg13[%c0_80, %c0_81], %304 {strides = array<i32>} : memref<8x256xf32, #tpu.memory_space<vmem>>, vector<8x256xf32>,
    %c0_82 = arith.constant 0 : index
    %c0_83 = arith.constant 0 : index
    %306 = vector.load %arg13[%c0_82, %c0_83] : memref<8x256xf32, #tpu.memory_space<vmem>>, vector<8x256xf32>
    %cst_84 = arith.constant 0.000000e+00 : f32
    %307 = vector.broadcast %cst_84 : f32 to vector<8x256xf32>
    %c0_85 = arith.constant 0 : index
    %c0_86 = arith.constant 0 : index
    %308 = vector.load %arg12[%c0_85, %c0_86] : memref<8x256xf32, #tpu.memory_space<vmem>>, vector<8x256xf32>
    tpu.vector_store %arg12[%c0_85, %c0_86], %307 {strides = array<i32>} : memref<8x256xf32, #tpu.memory_space<vmem>>, vector<8x256xf32>,
    %c0_87 = arith.constant 0 : index
    %c0_88 = arith.constant 0 : index
    %c0_89 = arith.constant 0 : index
    %309 = vector.load %arg7[%c0_87, %c0_88, %c0_89] : memref<9x8x8xf32, #tpu.memory_space<vmem>>, vector<1x8x8xf32>
    %310 = vector.shape_cast %309 : vector<1x8x8xf32> to vector<8x8xf32>
    %311 = vector.extract_strided_slice %306 {offsets = [0, 245], sizes = [8, 11], strides = [1, 1]} : vector<8x256xf32> to vector<8x11xf32>
    %312 = vector.extract_strided_slice %306 {offsets = [0, 0], sizes = [8, 245], strides = [1, 1]} : vector<8x256xf32> to vector<8x245xf32>
    %313 = tpu.concatenate %311, %312 in 1 : vector<8x11xf32>, vector<8x245xf32> -> vector<8x256xf32>
    %314 = vector.extract_strided_slice %310 {offsets = [0, 0], sizes = [8, 1], strides = [1, 1]} : vector<8x8xf32> to vector<8x1xf32>
    %315 = vector.extract_strided_slice %313 {offsets = [0, 0], sizes = [1, 256], strides = [1, 1]} : vector<8x256xf32> to vector<1x256xf32>
    %316 = vector.broadcast %314 : vector<8x1xf32> to vector<8x256xf32>
    %317 = vector.broadcast %315 : vector<1x256xf32> to vector<8x256xf32>
    %318 = arith.mulf %316, %317 : vector<8x256xf32>
    %319 = vector.extract_strided_slice %310 {offsets = [0, 1], sizes = [8, 1], strides = [1, 1]} : vector<8x8xf32> to vector<8x1xf32>
    %320 = vector.extract_strided_slice %313 {offsets = [1, 0], sizes = [1, 256], strides = [1, 1]} : vector<8x256xf32> to vector<1x256xf32>
    %321 = vector.broadcast %319 : vector<8x1xf32> to vector<8x256xf32>
    %322 = vector.broadcast %320 : vector<1x256xf32> to vector<8x256xf32>
    %323 = arith.mulf %321, %322 : vector<8x256xf32>
    %324 = arith.addf %318, %323 : vector<8x256xf32>
    %325 = vector.extract_strided_slice %310 {offsets = [0, 2], sizes = [8, 1], strides = [1, 1]} : vector<8x8xf32> to vector<8x1xf32>
    %326 = vector.extract_strided_slice %313 {offsets = [2, 0], sizes = [1, 256], strides = [1, 1]} : vector<8x256xf32> to vector<1x256xf32>
    %327 = vector.broadcast %325 : vector<8x1xf32> to vector<8x256xf32>
    %328 = vector.broadcast %326 : vector<1x256xf32> to vector<8x256xf32>
    %329 = arith.mulf %327, %328 : vector<8x256xf32>
    %330 = arith.addf %324, %329 : vector<8x256xf32>
    %331 = vector.extract_strided_slice %310 {offsets = [0, 3], sizes = [8, 1], strides = [1, 1]} : vector<8x8xf32> to vector<8x1xf32>
    %332 = vector.extract_strided_slice %313 {offsets = [3, 0], sizes = [1, 256], strides = [1, 1]} : vector<8x256xf32> to vector<1x256xf32>
    %333 = vector.broadcast %331 : vector<8x1xf32> to vector<8x256xf32>
    %334 = vector.broadcast %332 : vector<1x256xf32> to vector<8x256xf32>
    %335 = arith.mulf %333, %334 : vector<8x256xf32>
    %336 = arith.addf %330, %335 : vector<8x256xf32>
    %337 = vector.extract_strided_slice %310 {offsets = [0, 4], sizes = [8, 1], strides = [1, 1]} : vector<8x8xf32> to vector<8x1xf32>
    %338 = vector.extract_strided_slice %313 {offsets = [4, 0], sizes = [1, 256], strides = [1, 1]} : vector<8x256xf32> to vector<1x256xf32>
    %339 = vector.broadcast %337 : vector<8x1xf32> to vector<8x256xf32>
    %340 = vector.broadcast %338 : vector<1x256xf32> to vector<8x256xf32>
    %341 = arith.mulf %339, %340 : vector<8x256xf32>
    %342 = arith.addf %336, %341 : vector<8x256xf32>
    %343 = vector.extract_strided_slice %310 {offsets = [0, 5], sizes = [8, 1], strides = [1, 1]} : vector<8x8xf32> to vector<8x1xf32>
    %344 = vector.extract_strided_slice %313 {offsets = [5, 0], sizes = [1, 256], strides = [1, 1]} : vector<8x256xf32> to vector<1x256xf32>
    %345 = vector.broadcast %343 : vector<8x1xf32> to vector<8x256xf32>
    %346 = vector.broadcast %344 : vector<1x256xf32> to vector<8x256xf32>
    %347 = arith.mulf %345, %346 : vector<8x256xf32>
    %348 = arith.addf %342, %347 : vector<8x256xf32>
    %349 = vector.extract_strided_slice %310 {offsets = [0, 6], sizes = [8, 1], strides = [1, 1]} : vector<8x8xf32> to vector<8x1xf32>
    %350 = vector.extract_strided_slice %313 {offsets = [6, 0], sizes = [1, 256], strides = [1, 1]} : vector<8x256xf32> to vector<1x256xf32>
    %351 = vector.broadcast %349 : vector<8x1xf32> to vector<8x256xf32>
    %352 = vector.broadcast %350 : vector<1x256xf32> to vector<8x256xf32>
    %353 = arith.mulf %351, %352 : vector<8x256xf32>
    %354 = arith.addf %348, %353 : vector<8x256xf32>
    %355 = vector.extract_strided_slice %310 {offsets = [0, 7], sizes = [8, 1], strides = [1, 1]} : vector<8x8xf32> to vector<8x1xf32>
    %356 = vector.extract_strided_slice %313 {offsets = [7, 0], sizes = [1, 256], strides = [1, 1]} : vector<8x256xf32> to vector<1x256xf32>
    %357 = vector.broadcast %355 : vector<8x1xf32> to vector<8x256xf32>
    %358 = vector.broadcast %356 : vector<1x256xf32> to vector<8x256xf32>
    %359 = arith.mulf %357, %358 : vector<8x256xf32>
    %360 = arith.addf %354, %359 : vector<8x256xf32>
    %c0_90 = arith.constant 0 : index
    %c0_91 = arith.constant 0 : index
    %361 = vector.load %arg12[%c0_90, %c0_91] : memref<8x256xf32, #tpu.memory_space<vmem>>, vector<8x256xf32>
    %362 = arith.addf %361, %360 : vector<8x256xf32>
    %c0_92 = arith.constant 0 : index
    %c0_93 = arith.constant 0 : index
    %363 = vector.load %arg12[%c0_92, %c0_93] : memref<8x256xf32, #tpu.memory_space<vmem>>, vector<8x256xf32>
    tpu.vector_store %arg12[%c0_92, %c0_93], %362 {strides = array<i32>} : memref<8x256xf32, #tpu.memory_space<vmem>>, vector<8x256xf32>,
    %c1_94 = arith.constant 1 : index
    %c0_95 = arith.constant 0 : index
    %c0_96 = arith.constant 0 : index
    %364 = vector.load %arg7[%c1_94, %c0_95, %c0_96] : memref<9x8x8xf32, #tpu.memory_space<vmem>>, vector<1x8x8xf32>
    %365 = vector.shape_cast %364 : vector<1x8x8xf32> to vector<8x8xf32>
    %366 = vector.extract_strided_slice %306 {offsets = [0, 246], sizes = [8, 10], strides = [1, 1]} : vector<8x256xf32> to vector<8x10xf32>
    %367 = vector.extract_strided_slice %306 {offsets = [0, 0], sizes = [8, 246], strides = [1, 1]} : vector<8x256xf32> to vector<8x246xf32>
    %368 = tpu.concatenate %366, %367 in 1 : vector<8x10xf32>, vector<8x246xf32> -> vector<8x256xf32>
    %369 = vector.extract_strided_slice %365 {offsets = [0, 0], sizes = [8, 1], strides = [1, 1]} : vector<8x8xf32> to vector<8x1xf32>
    %370 = vector.extract_strided_slice %368 {offsets = [0, 0], sizes = [1, 256], strides = [1, 1]} : vector<8x256xf32> to vector<1x256xf32>
    %371 = vector.broadcast %369 : vector<8x1xf32> to vector<8x256xf32>
    %372 = vector.broadcast %370 : vector<1x256xf32> to vector<8x256xf32>
    %373 = arith.mulf %371, %372 : vector<8x256xf32>
    %374 = vector.extract_strided_slice %365 {offsets = [0, 1], sizes = [8, 1], strides = [1, 1]} : vector<8x8xf32> to vector<8x1xf32>
    %375 = vector.extract_strided_slice %368 {offsets = [1, 0], sizes = [1, 256], strides = [1, 1]} : vector<8x256xf32> to vector<1x256xf32>
    %376 = vector.broadcast %374 : vector<8x1xf32> to vector<8x256xf32>
    %377 = vector.broadcast %375 : vector<1x256xf32> to vector<8x256xf32>
    %378 = arith.mulf %376, %377 : vector<8x256xf32>
    %379 = arith.addf %373, %378 : vector<8x256xf32>
    %380 = vector.extract_strided_slice %365 {offsets = [0, 2], sizes = [8, 1], strides = [1, 1]} : vector<8x8xf32> to vector<8x1xf32>
    %381 = vector.extract_strided_slice %368 {offsets = [2, 0], sizes = [1, 256], strides = [1, 1]} : vector<8x256xf32> to vector<1x256xf32>
    %382 = vector.broadcast %380 : vector<8x1xf32> to vector<8x256xf32>
    %383 = vector.broadcast %381 : vector<1x256xf32> to vector<8x256xf32>
    %384 = arith.mulf %382, %383 : vector<8x256xf32>
    %385 = arith.addf %379, %384 : vector<8x256xf32>
    %386 = vector.extract_strided_slice %365 {offsets = [0, 3], sizes = [8, 1], strides = [1, 1]} : vector<8x8xf32> to vector<8x1xf32>
    %387 = vector.extract_strided_slice %368 {offsets = [3, 0], sizes = [1, 256], strides = [1, 1]} : vector<8x256xf32> to vector<1x256xf32>
    %388 = vector.broadcast %386 : vector<8x1xf32> to vector<8x256xf32>
    %389 = vector.broadcast %387 : vector<1x256xf32> to vector<8x256xf32>
    %390 = arith.mulf %388, %389 : vector<8x256xf32>
    %391 = arith.addf %385, %390 : vector<8x256xf32>
    %392 = vector.extract_strided_slice %365 {offsets = [0, 4], sizes = [8, 1], strides = [1, 1]} : vector<8x8xf32> to vector<8x1xf32>
    %393 = vector.extract_strided_slice %368 {offsets = [4, 0], sizes = [1, 256], strides = [1, 1]} : vector<8x256xf32> to vector<1x256xf32>
    %394 = vector.broadcast %392 : vector<8x1xf32> to vector<8x256xf32>
    %395 = vector.broadcast %393 : vector<1x256xf32> to vector<8x256xf32>
    %396 = arith.mulf %394, %395 : vector<8x256xf32>
    %397 = arith.addf %391, %396 : vector<8x256xf32>
    %398 = vector.extract_strided_slice %365 {offsets = [0, 5], sizes = [8, 1], strides = [1, 1]} : vector<8x8xf32> to vector<8x1xf32>
    %399 = vector.extract_strided_slice %368 {offsets = [5, 0], sizes = [1, 256], strides = [1, 1]} : vector<8x256xf32> to vector<1x256xf32>
    %400 = vector.broadcast %398 : vector<8x1xf32> to vector<8x256xf32>
    %401 = vector.broadcast %399 : vector<1x256xf32> to vector<8x256xf32>
    %402 = arith.mulf %400, %401 : vector<8x256xf32>
    %403 = arith.addf %397, %402 : vector<8x256xf32>
    %404 = vector.extract_strided_slice %365 {offsets = [0, 6], sizes = [8, 1], strides = [1, 1]} : vector<8x8xf32> to vector<8x1xf32>
    %405 = vector.extract_strided_slice %368 {offsets = [6, 0], sizes = [1, 256], strides = [1, 1]} : vector<8x256xf32> to vector<1x256xf32>
    %406 = vector.broadcast %404 : vector<8x1xf32> to vector<8x256xf32>
    %407 = vector.broadcast %405 : vector<1x256xf32> to vector<8x256xf32>
    %408 = arith.mulf %406, %407 : vector<8x256xf32>
    %409 = arith.addf %403, %408 : vector<8x256xf32>
    %410 = vector.extract_strided_slice %365 {offsets = [0, 7], sizes = [8, 1], strides = [1, 1]} : vector<8x8xf32> to vector<8x1xf32>
    %411 = vector.extract_strided_slice %368 {offsets = [7, 0], sizes = [1, 256], strides = [1, 1]} : vector<8x256xf32> to vector<1x256xf32>
    %412 = vector.broadcast %410 : vector<8x1xf32> to vector<8x256xf32>
    %413 = vector.broadcast %411 : vector<1x256xf32> to vector<8x256xf32>
    %414 = arith.mulf %412, %413 : vector<8x256xf32>
    %415 = arith.addf %409, %414 : vector<8x256xf32>
    %c0_97 = arith.constant 0 : index
    %c0_98 = arith.constant 0 : index
    %416 = vector.load %arg12[%c0_97, %c0_98] : memref<8x256xf32, #tpu.memory_space<vmem>>, vector<8x256xf32>
    %417 = arith.addf %416, %415 : vector<8x256xf32>
    %c0_99 = arith.constant 0 : index
    %c0_100 = arith.constant 0 : index
    %418 = vector.load %arg12[%c0_99, %c0_100] : memref<8x256xf32, #tpu.memory_space<vmem>>, vector<8x256xf32>
    tpu.vector_store %arg12[%c0_99, %c0_100], %417 {strides = array<i32>} : memref<8x256xf32, #tpu.memory_space<vmem>>, vector<8x256xf32>,
    %c2_101 = arith.constant 2 : index
    %c0_102 = arith.constant 0 : index
    %c0_103 = arith.constant 0 : index
    %419 = vector.load %arg7[%c2_101, %c0_102, %c0_103] : memref<9x8x8xf32, #tpu.memory_space<vmem>>, vector<1x8x8xf32>
    %420 = vector.shape_cast %419 : vector<1x8x8xf32> to vector<8x8xf32>
    %421 = vector.extract_strided_slice %306 {offsets = [0, 247], sizes = [8, 9], strides = [1, 1]} : vector<8x256xf32> to vector<8x9xf32>
    %422 = vector.extract_strided_slice %306 {offsets = [0, 0], sizes = [8, 247], strides = [1, 1]} : vector<8x256xf32> to vector<8x247xf32>
    %423 = tpu.concatenate %421, %422 in 1 : vector<8x9xf32>, vector<8x247xf32> -> vector<8x256xf32>
    %424 = vector.extract_strided_slice %420 {offsets = [0, 0], sizes = [8, 1], strides = [1, 1]} : vector<8x8xf32> to vector<8x1xf32>
    %425 = vector.extract_strided_slice %423 {offsets = [0, 0], sizes = [1, 256], strides = [1, 1]} : vector<8x256xf32> to vector<1x256xf32>
    %426 = vector.broadcast %424 : vector<8x1xf32> to vector<8x256xf32>
    %427 = vector.broadcast %425 : vector<1x256xf32> to vector<8x256xf32>
    %428 = arith.mulf %426, %427 : vector<8x256xf32>
    %429 = vector.extract_strided_slice %420 {offsets = [0, 1], sizes = [8, 1], strides = [1, 1]} : vector<8x8xf32> to vector<8x1xf32>
    %430 = vector.extract_strided_slice %423 {offsets = [1, 0], sizes = [1, 256], strides = [1, 1]} : vector<8x256xf32> to vector<1x256xf32>
    %431 = vector.broadcast %429 : vector<8x1xf32> to vector<8x256xf32>
    %432 = vector.broadcast %430 : vector<1x256xf32> to vector<8x256xf32>
    %433 = arith.mulf %431, %432 : vector<8x256xf32>
    %434 = arith.addf %428, %433 : vector<8x256xf32>
    %435 = vector.extract_strided_slice %420 {offsets = [0, 2], sizes = [8, 1], strides = [1, 1]} : vector<8x8xf32> to vector<8x1xf32>
    %436 = vector.extract_strided_slice %423 {offsets = [2, 0], sizes = [1, 256], strides = [1, 1]} : vector<8x256xf32> to vector<1x256xf32>
    %437 = vector.broadcast %435 : vector<8x1xf32> to vector<8x256xf32>
    %438 = vector.broadcast %436 : vector<1x256xf32> to vector<8x256xf32>
    %439 = arith.mulf %437, %438 : vector<8x256xf32>
    %440 = arith.addf %434, %439 : vector<8x256xf32>
    %441 = vector.extract_strided_slice %420 {offsets = [0, 3], sizes = [8, 1], strides = [1, 1]} : vector<8x8xf32> to vector<8x1xf32>
    %442 = vector.extract_strided_slice %423 {offsets = [3, 0], sizes = [1, 256], strides = [1, 1]} : vector<8x256xf32> to vector<1x256xf32>
    %443 = vector.broadcast %441 : vector<8x1xf32> to vector<8x256xf32>
    %444 = vector.broadcast %442 : vector<1x256xf32> to vector<8x256xf32>
    %445 = arith.mulf %443, %444 : vector<8x256xf32>
    %446 = arith.addf %440, %445 : vector<8x256xf32>
    %447 = vector.extract_strided_slice %420 {offsets = [0, 4], sizes = [8, 1], strides = [1, 1]} : vector<8x8xf32> to vector<8x1xf32>
    %448 = vector.extract_strided_slice %423 {offsets = [4, 0], sizes = [1, 256], strides = [1, 1]} : vector<8x256xf32> to vector<1x256xf32>
    %449 = vector.broadcast %447 : vector<8x1xf32> to vector<8x256xf32>
    %450 = vector.broadcast %448 : vector<1x256xf32> to vector<8x256xf32>
    %451 = arith.mulf %449, %450 : vector<8x256xf32>
    %452 = arith.addf %446, %451 : vector<8x256xf32>
    %453 = vector.extract_strided_slice %420 {offsets = [0, 5], sizes = [8, 1], strides = [1, 1]} : vector<8x8xf32> to vector<8x1xf32>
    %454 = vector.extract_strided_slice %423 {offsets = [5, 0], sizes = [1, 256], strides = [1, 1]} : vector<8x256xf32> to vector<1x256xf32>
    %455 = vector.broadcast %453 : vector<8x1xf32> to vector<8x256xf32>
    %456 = vector.broadcast %454 : vector<1x256xf32> to vector<8x256xf32>
    %457 = arith.mulf %455, %456 : vector<8x256xf32>
    %458 = arith.addf %452, %457 : vector<8x256xf32>
    %459 = vector.extract_strided_slice %420 {offsets = [0, 6], sizes = [8, 1], strides = [1, 1]} : vector<8x8xf32> to vector<8x1xf32>
    %460 = vector.extract_strided_slice %423 {offsets = [6, 0], sizes = [1, 256], strides = [1, 1]} : vector<8x256xf32> to vector<1x256xf32>
    %461 = vector.broadcast %459 : vector<8x1xf32> to vector<8x256xf32>
    %462 = vector.broadcast %460 : vector<1x256xf32> to vector<8x256xf32>
    %463 = arith.mulf %461, %462 : vector<8x256xf32>
    %464 = arith.addf %458, %463 : vector<8x256xf32>
    %465 = vector.extract_strided_slice %420 {offsets = [0, 7], sizes = [8, 1], strides = [1, 1]} : vector<8x8xf32> to vector<8x1xf32>
    %466 = vector.extract_strided_slice %423 {offsets = [7, 0], sizes = [1, 256], strides = [1, 1]} : vector<8x256xf32> to vector<1x256xf32>
    %467 = vector.broadcast %465 : vector<8x1xf32> to vector<8x256xf32>
    %468 = vector.broadcast %466 : vector<1x256xf32> to vector<8x256xf32>
    %469 = arith.mulf %467, %468 : vector<8x256xf32>
    %470 = arith.addf %464, %469 : vector<8x256xf32>
    %c0_104 = arith.constant 0 : index
    %c0_105 = arith.constant 0 : index
    %471 = vector.load %arg12[%c0_104, %c0_105] : memref<8x256xf32, #tpu.memory_space<vmem>>, vector<8x256xf32>
    %472 = arith.addf %471, %470 : vector<8x256xf32>
    %c0_106 = arith.constant 0 : index
    %c0_107 = arith.constant 0 : index
    %473 = vector.load %arg12[%c0_106, %c0_107] : memref<8x256xf32, #tpu.memory_space<vmem>>, vector<8x256xf32>
    tpu.vector_store %arg12[%c0_106, %c0_107], %472 {strides = array<i32>} : memref<8x256xf32, #tpu.memory_space<vmem>>, vector<8x256xf32>,
    %c3_108 = arith.constant 3 : index
    %c0_109 = arith.constant 0 : index
    %c0_110 = arith.constant 0 : index
    %474 = vector.load %arg7[%c3_108, %c0_109, %c0_110] : memref<9x8x8xf32, #tpu.memory_space<vmem>>, vector<1x8x8xf32>
    %475 = vector.shape_cast %474 : vector<1x8x8xf32> to vector<8x8xf32>
    %476 = vector.extract_strided_slice %306 {offsets = [0, 255], sizes = [8, 1], strides = [1, 1]} : vector<8x256xf32> to vector<8x1xf32>
    %477 = vector.extract_strided_slice %306 {offsets = [0, 0], sizes = [8, 255], strides = [1, 1]} : vector<8x256xf32> to vector<8x255xf32>
    %478 = tpu.concatenate %476, %477 in 1 : vector<8x1xf32>, vector<8x255xf32> -> vector<8x256xf32>
    %479 = vector.extract_strided_slice %475 {offsets = [0, 0], sizes = [8, 1], strides = [1, 1]} : vector<8x8xf32> to vector<8x1xf32>
    %480 = vector.extract_strided_slice %478 {offsets = [0, 0], sizes = [1, 256], strides = [1, 1]} : vector<8x256xf32> to vector<1x256xf32>
    %481 = vector.broadcast %479 : vector<8x1xf32> to vector<8x256xf32>
    %482 = vector.broadcast %480 : vector<1x256xf32> to vector<8x256xf32>
    %483 = arith.mulf %481, %482 : vector<8x256xf32>
    %484 = vector.extract_strided_slice %475 {offsets = [0, 1], sizes = [8, 1], strides = [1, 1]} : vector<8x8xf32> to vector<8x1xf32>
    %485 = vector.extract_strided_slice %478 {offsets = [1, 0], sizes = [1, 256], strides = [1, 1]} : vector<8x256xf32> to vector<1x256xf32>
    %486 = vector.broadcast %484 : vector<8x1xf32> to vector<8x256xf32>
    %487 = vector.broadcast %485 : vector<1x256xf32> to vector<8x256xf32>
    %488 = arith.mulf %486, %487 : vector<8x256xf32>
    %489 = arith.addf %483, %488 : vector<8x256xf32>
    %490 = vector.extract_strided_slice %475 {offsets = [0, 2], sizes = [8, 1], strides = [1, 1]} : vector<8x8xf32> to vector<8x1xf32>
    %491 = vector.extract_strided_slice %478 {offsets = [2, 0], sizes = [1, 256], strides = [1, 1]} : vector<8x256xf32> to vector<1x256xf32>
    %492 = vector.broadcast %490 : vector<8x1xf32> to vector<8x256xf32>
    %493 = vector.broadcast %491 : vector<1x256xf32> to vector<8x256xf32>
    %494 = arith.mulf %492, %493 : vector<8x256xf32>
    %495 = arith.addf %489, %494 : vector<8x256xf32>
    %496 = vector.extract_strided_slice %475 {offsets = [0, 3], sizes = [8, 1], strides = [1, 1]} : vector<8x8xf32> to vector<8x1xf32>
    %497 = vector.extract_strided_slice %478 {offsets = [3, 0], sizes = [1, 256], strides = [1, 1]} : vector<8x256xf32> to vector<1x256xf32>
    %498 = vector.broadcast %496 : vector<8x1xf32> to vector<8x256xf32>
    %499 = vector.broadcast %497 : vector<1x256xf32> to vector<8x256xf32>
    %500 = arith.mulf %498, %499 : vector<8x256xf32>
    %501 = arith.addf %495, %500 : vector<8x256xf32>
    %502 = vector.extract_strided_slice %475 {offsets = [0, 4], sizes = [8, 1], strides = [1, 1]} : vector<8x8xf32> to vector<8x1xf32>
    %503 = vector.extract_strided_slice %478 {offsets = [4, 0], sizes = [1, 256], strides = [1, 1]} : vector<8x256xf32> to vector<1x256xf32>
    %504 = vector.broadcast %502 : vector<8x1xf32> to vector<8x256xf32>
    %505 = vector.broadcast %503 : vector<1x256xf32> to vector<8x256xf32>
    %506 = arith.mulf %504, %505 : vector<8x256xf32>
    %507 = arith.addf %501, %506 : vector<8x256xf32>
    %508 = vector.extract_strided_slice %475 {offsets = [0, 5], sizes = [8, 1], strides = [1, 1]} : vector<8x8xf32> to vector<8x1xf32>
    %509 = vector.extract_strided_slice %478 {offsets = [5, 0], sizes = [1, 256], strides = [1, 1]} : vector<8x256xf32> to vector<1x256xf32>
    %510 = vector.broadcast %508 : vector<8x1xf32> to vector<8x256xf32>
    %511 = vector.broadcast %509 : vector<1x256xf32> to vector<8x256xf32>
    %512 = arith.mulf %510, %511 : vector<8x256xf32>
    %513 = arith.addf %507, %512 : vector<8x256xf32>
    %514 = vector.extract_strided_slice %475 {offsets = [0, 6], sizes = [8, 1], strides = [1, 1]} : vector<8x8xf32> to vector<8x1xf32>
    %515 = vector.extract_strided_slice %478 {offsets = [6, 0], sizes = [1, 256], strides = [1, 1]} : vector<8x256xf32> to vector<1x256xf32>
    %516 = vector.broadcast %514 : vector<8x1xf32> to vector<8x256xf32>
    %517 = vector.broadcast %515 : vector<1x256xf32> to vector<8x256xf32>
    %518 = arith.mulf %516, %517 : vector<8x256xf32>
    %519 = arith.addf %513, %518 : vector<8x256xf32>
    %520 = vector.extract_strided_slice %475 {offsets = [0, 7], sizes = [8, 1], strides = [1, 1]} : vector<8x8xf32> to vector<8x1xf32>
    %521 = vector.extract_strided_slice %478 {offsets = [7, 0], sizes = [1, 256], strides = [1, 1]} : vector<8x256xf32> to vector<1x256xf32>
    %522 = vector.broadcast %520 : vector<8x1xf32> to vector<8x256xf32>
    %523 = vector.broadcast %521 : vector<1x256xf32> to vector<8x256xf32>
    %524 = arith.mulf %522, %523 : vector<8x256xf32>
    %525 = arith.addf %519, %524 : vector<8x256xf32>
    %c0_111 = arith.constant 0 : index
    %c0_112 = arith.constant 0 : index
    %526 = vector.load %arg12[%c0_111, %c0_112] : memref<8x256xf32, #tpu.memory_space<vmem>>, vector<8x256xf32>
    %527 = arith.addf %526, %525 : vector<8x256xf32>
    %c0_113 = arith.constant 0 : index
    %c0_114 = arith.constant 0 : index
    %528 = vector.load %arg12[%c0_113, %c0_114] : memref<8x256xf32, #tpu.memory_space<vmem>>, vector<8x256xf32>
    tpu.vector_store %arg12[%c0_113, %c0_114], %527 {strides = array<i32>} : memref<8x256xf32, #tpu.memory_space<vmem>>, vector<8x256xf32>,
    %c4_115 = arith.constant 4 : index
    %c0_116 = arith.constant 0 : index
    %c0_117 = arith.constant 0 : index
    %529 = vector.load %arg7[%c4_115, %c0_116, %c0_117] : memref<9x8x8xf32, #tpu.memory_space<vmem>>, vector<1x8x8xf32>
    %530 = vector.shape_cast %529 : vector<1x8x8xf32> to vector<8x8xf32>
    %531 = vector.extract_strided_slice %530 {offsets = [0, 0], sizes = [8, 1], strides = [1, 1]} : vector<8x8xf32> to vector<8x1xf32>
    %532 = vector.extract_strided_slice %306 {offsets = [0, 0], sizes = [1, 256], strides = [1, 1]} : vector<8x256xf32> to vector<1x256xf32>
    %533 = vector.broadcast %531 : vector<8x1xf32> to vector<8x256xf32>
    %534 = vector.broadcast %532 : vector<1x256xf32> to vector<8x256xf32>
    %535 = arith.mulf %533, %534 : vector<8x256xf32>
    %536 = vector.extract_strided_slice %530 {offsets = [0, 1], sizes = [8, 1], strides = [1, 1]} : vector<8x8xf32> to vector<8x1xf32>
    %537 = vector.extract_strided_slice %306 {offsets = [1, 0], sizes = [1, 256], strides = [1, 1]} : vector<8x256xf32> to vector<1x256xf32>
    %538 = vector.broadcast %536 : vector<8x1xf32> to vector<8x256xf32>
    %539 = vector.broadcast %537 : vector<1x256xf32> to vector<8x256xf32>
    %540 = arith.mulf %538, %539 : vector<8x256xf32>
    %541 = arith.addf %535, %540 : vector<8x256xf32>
    %542 = vector.extract_strided_slice %530 {offsets = [0, 2], sizes = [8, 1], strides = [1, 1]} : vector<8x8xf32> to vector<8x1xf32>
    %543 = vector.extract_strided_slice %306 {offsets = [2, 0], sizes = [1, 256], strides = [1, 1]} : vector<8x256xf32> to vector<1x256xf32>
    %544 = vector.broadcast %542 : vector<8x1xf32> to vector<8x256xf32>
    %545 = vector.broadcast %543 : vector<1x256xf32> to vector<8x256xf32>
    %546 = arith.mulf %544, %545 : vector<8x256xf32>
    %547 = arith.addf %541, %546 : vector<8x256xf32>
    %548 = vector.extract_strided_slice %530 {offsets = [0, 3], sizes = [8, 1], strides = [1, 1]} : vector<8x8xf32> to vector<8x1xf32>
    %549 = vector.extract_strided_slice %306 {offsets = [3, 0], sizes = [1, 256], strides = [1, 1]} : vector<8x256xf32> to vector<1x256xf32>
    %550 = vector.broadcast %548 : vector<8x1xf32> to vector<8x256xf32>
    %551 = vector.broadcast %549 : vector<1x256xf32> to vector<8x256xf32>
    %552 = arith.mulf %550, %551 : vector<8x256xf32>
    %553 = arith.addf %547, %552 : vector<8x256xf32>
    %554 = vector.extract_strided_slice %530 {offsets = [0, 4], sizes = [8, 1], strides = [1, 1]} : vector<8x8xf32> to vector<8x1xf32>
    %555 = vector.extract_strided_slice %306 {offsets = [4, 0], sizes = [1, 256], strides = [1, 1]} : vector<8x256xf32> to vector<1x256xf32>
    %556 = vector.broadcast %554 : vector<8x1xf32> to vector<8x256xf32>
    %557 = vector.broadcast %555 : vector<1x256xf32> to vector<8x256xf32>
    %558 = arith.mulf %556, %557 : vector<8x256xf32>
    %559 = arith.addf %553, %558 : vector<8x256xf32>
    %560 = vector.extract_strided_slice %530 {offsets = [0, 5], sizes = [8, 1], strides = [1, 1]} : vector<8x8xf32> to vector<8x1xf32>
    %561 = vector.extract_strided_slice %306 {offsets = [5, 0], sizes = [1, 256], strides = [1, 1]} : vector<8x256xf32> to vector<1x256xf32>
    %562 = vector.broadcast %560 : vector<8x1xf32> to vector<8x256xf32>
    %563 = vector.broadcast %561 : vector<1x256xf32> to vector<8x256xf32>
    %564 = arith.mulf %562, %563 : vector<8x256xf32>
    %565 = arith.addf %559, %564 : vector<8x256xf32>
    %566 = vector.extract_strided_slice %530 {offsets = [0, 6], sizes = [8, 1], strides = [1, 1]} : vector<8x8xf32> to vector<8x1xf32>
    %567 = vector.extract_strided_slice %306 {offsets = [6, 0], sizes = [1, 256], strides = [1, 1]} : vector<8x256xf32> to vector<1x256xf32>
    %568 = vector.broadcast %566 : vector<8x1xf32> to vector<8x256xf32>
    %569 = vector.broadcast %567 : vector<1x256xf32> to vector<8x256xf32>
    %570 = arith.mulf %568, %569 : vector<8x256xf32>
    %571 = arith.addf %565, %570 : vector<8x256xf32>
    %572 = vector.extract_strided_slice %530 {offsets = [0, 7], sizes = [8, 1], strides = [1, 1]} : vector<8x8xf32> to vector<8x1xf32>
    %573 = vector.extract_strided_slice %306 {offsets = [7, 0], sizes = [1, 256], strides = [1, 1]} : vector<8x256xf32> to vector<1x256xf32>
    %574 = vector.broadcast %572 : vector<8x1xf32> to vector<8x256xf32>
    %575 = vector.broadcast %573 : vector<1x256xf32> to vector<8x256xf32>
    %576 = arith.mulf %574, %575 : vector<8x256xf32>
    %577 = arith.addf %571, %576 : vector<8x256xf32>
    %c0_118 = arith.constant 0 : index
    %c0_119 = arith.constant 0 : index
    %578 = vector.load %arg12[%c0_118, %c0_119] : memref<8x256xf32, #tpu.memory_space<vmem>>, vector<8x256xf32>
    %579 = arith.addf %578, %577 : vector<8x256xf32>
    %c0_120 = arith.constant 0 : index
    %c0_121 = arith.constant 0 : index
    %580 = vector.load %arg12[%c0_120, %c0_121] : memref<8x256xf32, #tpu.memory_space<vmem>>, vector<8x256xf32>
    tpu.vector_store %arg12[%c0_120, %c0_121], %579 {strides = array<i32>} : memref<8x256xf32, #tpu.memory_space<vmem>>, vector<8x256xf32>,
    %c5_122 = arith.constant 5 : index
    %c0_123 = arith.constant 0 : index
    %c0_124 = arith.constant 0 : index
    %581 = vector.load %arg7[%c5_122, %c0_123, %c0_124] : memref<9x8x8xf32, #tpu.memory_space<vmem>>, vector<1x8x8xf32>
    %582 = vector.shape_cast %581 : vector<1x8x8xf32> to vector<8x8xf32>
    %583 = vector.extract_strided_slice %306 {offsets = [0, 1], sizes = [8, 255], strides = [1, 1]} : vector<8x256xf32> to vector<8x255xf32>
    %584 = vector.extract_strided_slice %306 {offsets = [0, 0], sizes = [8, 1], strides = [1, 1]} : vector<8x256xf32> to vector<8x1xf32>
    %585 = tpu.concatenate %583, %584 in 1 : vector<8x255xf32>, vector<8x1xf32> -> vector<8x256xf32>
    %586 = vector.extract_strided_slice %582 {offsets = [0, 0], sizes = [8, 1], strides = [1, 1]} : vector<8x8xf32> to vector<8x1xf32>
    %587 = vector.extract_strided_slice %585 {offsets = [0, 0], sizes = [1, 256], strides = [1, 1]} : vector<8x256xf32> to vector<1x256xf32>
    %588 = vector.broadcast %586 : vector<8x1xf32> to vector<8x256xf32>
    %589 = vector.broadcast %587 : vector<1x256xf32> to vector<8x256xf32>
    %590 = arith.mulf %588, %589 : vector<8x256xf32>
    %591 = vector.extract_strided_slice %582 {offsets = [0, 1], sizes = [8, 1], strides = [1, 1]} : vector<8x8xf32> to vector<8x1xf32>
    %592 = vector.extract_strided_slice %585 {offsets = [1, 0], sizes = [1, 256], strides = [1, 1]} : vector<8x256xf32> to vector<1x256xf32>
    %593 = vector.broadcast %591 : vector<8x1xf32> to vector<8x256xf32>
    %594 = vector.broadcast %592 : vector<1x256xf32> to vector<8x256xf32>
    %595 = arith.mulf %593, %594 : vector<8x256xf32>
    %596 = arith.addf %590, %595 : vector<8x256xf32>
    %597 = vector.extract_strided_slice %582 {offsets = [0, 2], sizes = [8, 1], strides = [1, 1]} : vector<8x8xf32> to vector<8x1xf32>
    %598 = vector.extract_strided_slice %585 {offsets = [2, 0], sizes = [1, 256], strides = [1, 1]} : vector<8x256xf32> to vector<1x256xf32>
    %599 = vector.broadcast %597 : vector<8x1xf32> to vector<8x256xf32>
    %600 = vector.broadcast %598 : vector<1x256xf32> to vector<8x256xf32>
    %601 = arith.mulf %599, %600 : vector<8x256xf32>
    %602 = arith.addf %596, %601 : vector<8x256xf32>
    %603 = vector.extract_strided_slice %582 {offsets = [0, 3], sizes = [8, 1], strides = [1, 1]} : vector<8x8xf32> to vector<8x1xf32>
    %604 = vector.extract_strided_slice %585 {offsets = [3, 0], sizes = [1, 256], strides = [1, 1]} : vector<8x256xf32> to vector<1x256xf32>
    %605 = vector.broadcast %603 : vector<8x1xf32> to vector<8x256xf32>
    %606 = vector.broadcast %604 : vector<1x256xf32> to vector<8x256xf32>
    %607 = arith.mulf %605, %606 : vector<8x256xf32>
    %608 = arith.addf %602, %607 : vector<8x256xf32>
    %609 = vector.extract_strided_slice %582 {offsets = [0, 4], sizes = [8, 1], strides = [1, 1]} : vector<8x8xf32> to vector<8x1xf32>
    %610 = vector.extract_strided_slice %585 {offsets = [4, 0], sizes = [1, 256], strides = [1, 1]} : vector<8x256xf32> to vector<1x256xf32>
    %611 = vector.broadcast %609 : vector<8x1xf32> to vector<8x256xf32>
    %612 = vector.broadcast %610 : vector<1x256xf32> to vector<8x256xf32>
    %613 = arith.mulf %611, %612 : vector<8x256xf32>
    %614 = arith.addf %608, %613 : vector<8x256xf32>
    %615 = vector.extract_strided_slice %582 {offsets = [0, 5], sizes = [8, 1], strides = [1, 1]} : vector<8x8xf32> to vector<8x1xf32>
    %616 = vector.extract_strided_slice %585 {offsets = [5, 0], sizes = [1, 256], strides = [1, 1]} : vector<8x256xf32> to vector<1x256xf32>
    %617 = vector.broadcast %615 : vector<8x1xf32> to vector<8x256xf32>
    %618 = vector.broadcast %616 : vector<1x256xf32> to vector<8x256xf32>
    %619 = arith.mulf %617, %618 : vector<8x256xf32>
    %620 = arith.addf %614, %619 : vector<8x256xf32>
    %621 = vector.extract_strided_slice %582 {offsets = [0, 6], sizes = [8, 1], strides = [1, 1]} : vector<8x8xf32> to vector<8x1xf32>
    %622 = vector.extract_strided_slice %585 {offsets = [6, 0], sizes = [1, 256], strides = [1, 1]} : vector<8x256xf32> to vector<1x256xf32>
    %623 = vector.broadcast %621 : vector<8x1xf32> to vector<8x256xf32>
    %624 = vector.broadcast %622 : vector<1x256xf32> to vector<8x256xf32>
    %625 = arith.mulf %623, %624 : vector<8x256xf32>
    %626 = arith.addf %620, %625 : vector<8x256xf32>
    %627 = vector.extract_strided_slice %582 {offsets = [0, 7], sizes = [8, 1], strides = [1, 1]} : vector<8x8xf32> to vector<8x1xf32>
    %628 = vector.extract_strided_slice %585 {offsets = [7, 0], sizes = [1, 256], strides = [1, 1]} : vector<8x256xf32> to vector<1x256xf32>
    %629 = vector.broadcast %627 : vector<8x1xf32> to vector<8x256xf32>
    %630 = vector.broadcast %628 : vector<1x256xf32> to vector<8x256xf32>
    %631 = arith.mulf %629, %630 : vector<8x256xf32>
    %632 = arith.addf %626, %631 : vector<8x256xf32>
    %c0_125 = arith.constant 0 : index
    %c0_126 = arith.constant 0 : index
    %633 = vector.load %arg12[%c0_125, %c0_126] : memref<8x256xf32, #tpu.memory_space<vmem>>, vector<8x256xf32>
    %634 = arith.addf %633, %632 : vector<8x256xf32>
    %c0_127 = arith.constant 0 : index
    %c0_128 = arith.constant 0 : index
    %635 = vector.load %arg12[%c0_127, %c0_128] : memref<8x256xf32, #tpu.memory_space<vmem>>, vector<8x256xf32>
    tpu.vector_store %arg12[%c0_127, %c0_128], %634 {strides = array<i32>} : memref<8x256xf32, #tpu.memory_space<vmem>>, vector<8x256xf32>,
    %c6_129 = arith.constant 6 : index
    %c0_130 = arith.constant 0 : index
    %c0_131 = arith.constant 0 : index
    %636 = vector.load %arg7[%c6_129, %c0_130, %c0_131] : memref<9x8x8xf32, #tpu.memory_space<vmem>>, vector<1x8x8xf32>
    %637 = vector.shape_cast %636 : vector<1x8x8xf32> to vector<8x8xf32>
    %638 = vector.extract_strided_slice %306 {offsets = [0, 9], sizes = [8, 247], strides = [1, 1]} : vector<8x256xf32> to vector<8x247xf32>
    %639 = vector.extract_strided_slice %306 {offsets = [0, 0], sizes = [8, 9], strides = [1, 1]} : vector<8x256xf32> to vector<8x9xf32>
    %640 = tpu.concatenate %638, %639 in 1 : vector<8x247xf32>, vector<8x9xf32> -> vector<8x256xf32>
    %641 = vector.extract_strided_slice %637 {offsets = [0, 0], sizes = [8, 1], strides = [1, 1]} : vector<8x8xf32> to vector<8x1xf32>
    %642 = vector.extract_strided_slice %640 {offsets = [0, 0], sizes = [1, 256], strides = [1, 1]} : vector<8x256xf32> to vector<1x256xf32>
    %643 = vector.broadcast %641 : vector<8x1xf32> to vector<8x256xf32>
    %644 = vector.broadcast %642 : vector<1x256xf32> to vector<8x256xf32>
    %645 = arith.mulf %643, %644 : vector<8x256xf32>
    %646 = vector.extract_strided_slice %637 {offsets = [0, 1], sizes = [8, 1], strides = [1, 1]} : vector<8x8xf32> to vector<8x1xf32>
    %647 = vector.extract_strided_slice %640 {offsets = [1, 0], sizes = [1, 256], strides = [1, 1]} : vector<8x256xf32> to vector<1x256xf32>
    %648 = vector.broadcast %646 : vector<8x1xf32> to vector<8x256xf32>
    %649 = vector.broadcast %647 : vector<1x256xf32> to vector<8x256xf32>
    %650 = arith.mulf %648, %649 : vector<8x256xf32>
    %651 = arith.addf %645, %650 : vector<8x256xf32>
    %652 = vector.extract_strided_slice %637 {offsets = [0, 2], sizes = [8, 1], strides = [1, 1]} : vector<8x8xf32> to vector<8x1xf32>
    %653 = vector.extract_strided_slice %640 {offsets = [2, 0], sizes = [1, 256], strides = [1, 1]} : vector<8x256xf32> to vector<1x256xf32>
    %654 = vector.broadcast %652 : vector<8x1xf32> to vector<8x256xf32>
    %655 = vector.broadcast %653 : vector<1x256xf32> to vector<8x256xf32>
    %656 = arith.mulf %654, %655 : vector<8x256xf32>
    %657 = arith.addf %651, %656 : vector<8x256xf32>
    %658 = vector.extract_strided_slice %637 {offsets = [0, 3], sizes = [8, 1], strides = [1, 1]} : vector<8x8xf32> to vector<8x1xf32>
    %659 = vector.extract_strided_slice %640 {offsets = [3, 0], sizes = [1, 256], strides = [1, 1]} : vector<8x256xf32> to vector<1x256xf32>
    %660 = vector.broadcast %658 : vector<8x1xf32> to vector<8x256xf32>
    %661 = vector.broadcast %659 : vector<1x256xf32> to vector<8x256xf32>
    %662 = arith.mulf %660, %661 : vector<8x256xf32>
    %663 = arith.addf %657, %662 : vector<8x256xf32>
    %664 = vector.extract_strided_slice %637 {offsets = [0, 4], sizes = [8, 1], strides = [1, 1]} : vector<8x8xf32> to vector<8x1xf32>
    %665 = vector.extract_strided_slice %640 {offsets = [4, 0], sizes = [1, 256], strides = [1, 1]} : vector<8x256xf32> to vector<1x256xf32>
    %666 = vector.broadcast %664 : vector<8x1xf32> to vector<8x256xf32>
    %667 = vector.broadcast %665 : vector<1x256xf32> to vector<8x256xf32>
    %668 = arith.mulf %666, %667 : vector<8x256xf32>
    %669 = arith.addf %663, %668 : vector<8x256xf32>
    %670 = vector.extract_strided_slice %637 {offsets = [0, 5], sizes = [8, 1], strides = [1, 1]} : vector<8x8xf32> to vector<8x1xf32>
    %671 = vector.extract_strided_slice %640 {offsets = [5, 0], sizes = [1, 256], strides = [1, 1]} : vector<8x256xf32> to vector<1x256xf32>
    %672 = vector.broadcast %670 : vector<8x1xf32> to vector<8x256xf32>
    %673 = vector.broadcast %671 : vector<1x256xf32> to vector<8x256xf32>
    %674 = arith.mulf %672, %673 : vector<8x256xf32>
    %675 = arith.addf %669, %674 : vector<8x256xf32>
    %676 = vector.extract_strided_slice %637 {offsets = [0, 6], sizes = [8, 1], strides = [1, 1]} : vector<8x8xf32> to vector<8x1xf32>
    %677 = vector.extract_strided_slice %640 {offsets = [6, 0], sizes = [1, 256], strides = [1, 1]} : vector<8x256xf32> to vector<1x256xf32>
    %678 = vector.broadcast %676 : vector<8x1xf32> to vector<8x256xf32>
    %679 = vector.broadcast %677 : vector<1x256xf32> to vector<8x256xf32>
    %680 = arith.mulf %678, %679 : vector<8x256xf32>
    %681 = arith.addf %675, %680 : vector<8x256xf32>
    %682 = vector.extract_strided_slice %637 {offsets = [0, 7], sizes = [8, 1], strides = [1, 1]} : vector<8x8xf32> to vector<8x1xf32>
    %683 = vector.extract_strided_slice %640 {offsets = [7, 0], sizes = [1, 256], strides = [1, 1]} : vector<8x256xf32> to vector<1x256xf32>
    %684 = vector.broadcast %682 : vector<8x1xf32> to vector<8x256xf32>
    %685 = vector.broadcast %683 : vector<1x256xf32> to vector<8x256xf32>
    %686 = arith.mulf %684, %685 : vector<8x256xf32>
    %687 = arith.addf %681, %686 : vector<8x256xf32>
    %c0_132 = arith.constant 0 : index
    %c0_133 = arith.constant 0 : index
    %688 = vector.load %arg12[%c0_132, %c0_133] : memref<8x256xf32, #tpu.memory_space<vmem>>, vector<8x256xf32>
    %689 = arith.addf %688, %687 : vector<8x256xf32>
    %c0_134 = arith.constant 0 : index
    %c0_135 = arith.constant 0 : index
    %690 = vector.load %arg12[%c0_134, %c0_135] : memref<8x256xf32, #tpu.memory_space<vmem>>, vector<8x256xf32>
    tpu.vector_store %arg12[%c0_134, %c0_135], %689 {strides = array<i32>} : memref<8x256xf32, #tpu.memory_space<vmem>>, vector<8x256xf32>,
    %c7_136 = arith.constant 7 : index
    %c0_137 = arith.constant 0 : index
    %c0_138 = arith.constant 0 : index
    %691 = vector.load %arg7[%c7_136, %c0_137, %c0_138] : memref<9x8x8xf32, #tpu.memory_space<vmem>>, vector<1x8x8xf32>
    %692 = vector.shape_cast %691 : vector<1x8x8xf32> to vector<8x8xf32>
    %693 = vector.extract_strided_slice %306 {offsets = [0, 10], sizes = [8, 246], strides = [1, 1]} : vector<8x256xf32> to vector<8x246xf32>
    %694 = vector.extract_strided_slice %306 {offsets = [0, 0], sizes = [8, 10], strides = [1, 1]} : vector<8x256xf32> to vector<8x10xf32>
    %695 = tpu.concatenate %693, %694 in 1 : vector<8x246xf32>, vector<8x10xf32> -> vector<8x256xf32>
    %696 = vector.extract_strided_slice %692 {offsets = [0, 0], sizes = [8, 1], strides = [1, 1]} : vector<8x8xf32> to vector<8x1xf32>
    %697 = vector.extract_strided_slice %695 {offsets = [0, 0], sizes = [1, 256], strides = [1, 1]} : vector<8x256xf32> to vector<1x256xf32>
    %698 = vector.broadcast %696 : vector<8x1xf32> to vector<8x256xf32>
    %699 = vector.broadcast %697 : vector<1x256xf32> to vector<8x256xf32>
    %700 = arith.mulf %698, %699 : vector<8x256xf32>
    %701 = vector.extract_strided_slice %692 {offsets = [0, 1], sizes = [8, 1], strides = [1, 1]} : vector<8x8xf32> to vector<8x1xf32>
    %702 = vector.extract_strided_slice %695 {offsets = [1, 0], sizes = [1, 256], strides = [1, 1]} : vector<8x256xf32> to vector<1x256xf32>
    %703 = vector.broadcast %701 : vector<8x1xf32> to vector<8x256xf32>
    %704 = vector.broadcast %702 : vector<1x256xf32> to vector<8x256xf32>
    %705 = arith.mulf %703, %704 : vector<8x256xf32>
    %706 = arith.addf %700, %705 : vector<8x256xf32>
    %707 = vector.extract_strided_slice %692 {offsets = [0, 2], sizes = [8, 1], strides = [1, 1]} : vector<8x8xf32> to vector<8x1xf32>
    %708 = vector.extract_strided_slice %695 {offsets = [2, 0], sizes = [1, 256], strides = [1, 1]} : vector<8x256xf32> to vector<1x256xf32>
    %709 = vector.broadcast %707 : vector<8x1xf32> to vector<8x256xf32>
    %710 = vector.broadcast %708 : vector<1x256xf32> to vector<8x256xf32>
    %711 = arith.mulf %709, %710 : vector<8x256xf32>
    %712 = arith.addf %706, %711 : vector<8x256xf32>
    %713 = vector.extract_strided_slice %692 {offsets = [0, 3], sizes = [8, 1], strides = [1, 1]} : vector<8x8xf32> to vector<8x1xf32>
    %714 = vector.extract_strided_slice %695 {offsets = [3, 0], sizes = [1, 256], strides = [1, 1]} : vector<8x256xf32> to vector<1x256xf32>
    %715 = vector.broadcast %713 : vector<8x1xf32> to vector<8x256xf32>
    %716 = vector.broadcast %714 : vector<1x256xf32> to vector<8x256xf32>
    %717 = arith.mulf %715, %716 : vector<8x256xf32>
    %718 = arith.addf %712, %717 : vector<8x256xf32>
    %719 = vector.extract_strided_slice %692 {offsets = [0, 4], sizes = [8, 1], strides = [1, 1]} : vector<8x8xf32> to vector<8x1xf32>
    %720 = vector.extract_strided_slice %695 {offsets = [4, 0], sizes = [1, 256], strides = [1, 1]} : vector<8x256xf32> to vector<1x256xf32>
    %721 = vector.broadcast %719 : vector<8x1xf32> to vector<8x256xf32>
    %722 = vector.broadcast %720 : vector<1x256xf32> to vector<8x256xf32>
    %723 = arith.mulf %721, %722 : vector<8x256xf32>
    %724 = arith.addf %718, %723 : vector<8x256xf32>
    %725 = vector.extract_strided_slice %692 {offsets = [0, 5], sizes = [8, 1], strides = [1, 1]} : vector<8x8xf32> to vector<8x1xf32>
    %726 = vector.extract_strided_slice %695 {offsets = [5, 0], sizes = [1, 256], strides = [1, 1]} : vector<8x256xf32> to vector<1x256xf32>
    %727 = vector.broadcast %725 : vector<8x1xf32> to vector<8x256xf32>
    %728 = vector.broadcast %726 : vector<1x256xf32> to vector<8x256xf32>
    %729 = arith.mulf %727, %728 : vector<8x256xf32>
    %730 = arith.addf %724, %729 : vector<8x256xf32>
    %731 = vector.extract_strided_slice %692 {offsets = [0, 6], sizes = [8, 1], strides = [1, 1]} : vector<8x8xf32> to vector<8x1xf32>
    %732 = vector.extract_strided_slice %695 {offsets = [6, 0], sizes = [1, 256], strides = [1, 1]} : vector<8x256xf32> to vector<1x256xf32>
    %733 = vector.broadcast %731 : vector<8x1xf32> to vector<8x256xf32>
    %734 = vector.broadcast %732 : vector<1x256xf32> to vector<8x256xf32>
    %735 = arith.mulf %733, %734 : vector<8x256xf32>
    %736 = arith.addf %730, %735 : vector<8x256xf32>
    %737 = vector.extract_strided_slice %692 {offsets = [0, 7], sizes = [8, 1], strides = [1, 1]} : vector<8x8xf32> to vector<8x1xf32>
    %738 = vector.extract_strided_slice %695 {offsets = [7, 0], sizes = [1, 256], strides = [1, 1]} : vector<8x256xf32> to vector<1x256xf32>
    %739 = vector.broadcast %737 : vector<8x1xf32> to vector<8x256xf32>
    %740 = vector.broadcast %738 : vector<1x256xf32> to vector<8x256xf32>
    %741 = arith.mulf %739, %740 : vector<8x256xf32>
    %742 = arith.addf %736, %741 : vector<8x256xf32>
    %c0_139 = arith.constant 0 : index
    %c0_140 = arith.constant 0 : index
    %743 = vector.load %arg12[%c0_139, %c0_140] : memref<8x256xf32, #tpu.memory_space<vmem>>, vector<8x256xf32>
    %744 = arith.addf %743, %742 : vector<8x256xf32>
    %c0_141 = arith.constant 0 : index
    %c0_142 = arith.constant 0 : index
    %745 = vector.load %arg12[%c0_141, %c0_142] : memref<8x256xf32, #tpu.memory_space<vmem>>, vector<8x256xf32>
    tpu.vector_store %arg12[%c0_141, %c0_142], %744 {strides = array<i32>} : memref<8x256xf32, #tpu.memory_space<vmem>>, vector<8x256xf32>,
    %c8_143 = arith.constant 8 : index
    %c0_144 = arith.constant 0 : index
    %c0_145 = arith.constant 0 : index
    %746 = vector.load %arg7[%c8_143, %c0_144, %c0_145] : memref<9x8x8xf32, #tpu.memory_space<vmem>>, vector<1x8x8xf32>
    %747 = vector.shape_cast %746 : vector<1x8x8xf32> to vector<8x8xf32>
    %748 = vector.extract_strided_slice %306 {offsets = [0, 11], sizes = [8, 245], strides = [1, 1]} : vector<8x256xf32> to vector<8x245xf32>
    %749 = vector.extract_strided_slice %306 {offsets = [0, 0], sizes = [8, 11], strides = [1, 1]} : vector<8x256xf32> to vector<8x11xf32>
    %750 = tpu.concatenate %748, %749 in 1 : vector<8x245xf32>, vector<8x11xf32> -> vector<8x256xf32>
    %751 = vector.extract_strided_slice %747 {offsets = [0, 0], sizes = [8, 1], strides = [1, 1]} : vector<8x8xf32> to vector<8x1xf32>
    %752 = vector.extract_strided_slice %750 {offsets = [0, 0], sizes = [1, 256], strides = [1, 1]} : vector<8x256xf32> to vector<1x256xf32>
    %753 = vector.broadcast %751 : vector<8x1xf32> to vector<8x256xf32>
    %754 = vector.broadcast %752 : vector<1x256xf32> to vector<8x256xf32>
    %755 = arith.mulf %753, %754 : vector<8x256xf32>
    %756 = vector.extract_strided_slice %747 {offsets = [0, 1], sizes = [8, 1], strides = [1, 1]} : vector<8x8xf32> to vector<8x1xf32>
    %757 = vector.extract_strided_slice %750 {offsets = [1, 0], sizes = [1, 256], strides = [1, 1]} : vector<8x256xf32> to vector<1x256xf32>
    %758 = vector.broadcast %756 : vector<8x1xf32> to vector<8x256xf32>
    %759 = vector.broadcast %757 : vector<1x256xf32> to vector<8x256xf32>
    %760 = arith.mulf %758, %759 : vector<8x256xf32>
    %761 = arith.addf %755, %760 : vector<8x256xf32>
    %762 = vector.extract_strided_slice %747 {offsets = [0, 2], sizes = [8, 1], strides = [1, 1]} : vector<8x8xf32> to vector<8x1xf32>
    %763 = vector.extract_strided_slice %750 {offsets = [2, 0], sizes = [1, 256], strides = [1, 1]} : vector<8x256xf32> to vector<1x256xf32>
    %764 = vector.broadcast %762 : vector<8x1xf32> to vector<8x256xf32>
    %765 = vector.broadcast %763 : vector<1x256xf32> to vector<8x256xf32>
    %766 = arith.mulf %764, %765 : vector<8x256xf32>
    %767 = arith.addf %761, %766 : vector<8x256xf32>
    %768 = vector.extract_strided_slice %747 {offsets = [0, 3], sizes = [8, 1], strides = [1, 1]} : vector<8x8xf32> to vector<8x1xf32>
    %769 = vector.extract_strided_slice %750 {offsets = [3, 0], sizes = [1, 256], strides = [1, 1]} : vector<8x256xf32> to vector<1x256xf32>
    %770 = vector.broadcast %768 : vector<8x1xf32> to vector<8x256xf32>
    %771 = vector.broadcast %769 : vector<1x256xf32> to vector<8x256xf32>
    %772 = arith.mulf %770, %771 : vector<8x256xf32>
    %773 = arith.addf %767, %772 : vector<8x256xf32>
    %774 = vector.extract_strided_slice %747 {offsets = [0, 4], sizes = [8, 1], strides = [1, 1]} : vector<8x8xf32> to vector<8x1xf32>
    %775 = vector.extract_strided_slice %750 {offsets = [4, 0], sizes = [1, 256], strides = [1, 1]} : vector<8x256xf32> to vector<1x256xf32>
    %776 = vector.broadcast %774 : vector<8x1xf32> to vector<8x256xf32>
    %777 = vector.broadcast %775 : vector<1x256xf32> to vector<8x256xf32>
    %778 = arith.mulf %776, %777 : vector<8x256xf32>
    %779 = arith.addf %773, %778 : vector<8x256xf32>
    %780 = vector.extract_strided_slice %747 {offsets = [0, 5], sizes = [8, 1], strides = [1, 1]} : vector<8x8xf32> to vector<8x1xf32>
    %781 = vector.extract_strided_slice %750 {offsets = [5, 0], sizes = [1, 256], strides = [1, 1]} : vector<8x256xf32> to vector<1x256xf32>
    %782 = vector.broadcast %780 : vector<8x1xf32> to vector<8x256xf32>
    %783 = vector.broadcast %781 : vector<1x256xf32> to vector<8x256xf32>
    %784 = arith.mulf %782, %783 : vector<8x256xf32>
    %785 = arith.addf %779, %784 : vector<8x256xf32>
    %786 = vector.extract_strided_slice %747 {offsets = [0, 6], sizes = [8, 1], strides = [1, 1]} : vector<8x8xf32> to vector<8x1xf32>
    %787 = vector.extract_strided_slice %750 {offsets = [6, 0], sizes = [1, 256], strides = [1, 1]} : vector<8x256xf32> to vector<1x256xf32>
    %788 = vector.broadcast %786 : vector<8x1xf32> to vector<8x256xf32>
    %789 = vector.broadcast %787 : vector<1x256xf32> to vector<8x256xf32>
    %790 = arith.mulf %788, %789 : vector<8x256xf32>
    %791 = arith.addf %785, %790 : vector<8x256xf32>
    %792 = vector.extract_strided_slice %747 {offsets = [0, 7], sizes = [8, 1], strides = [1, 1]} : vector<8x8xf32> to vector<8x1xf32>
    %793 = vector.extract_strided_slice %750 {offsets = [7, 0], sizes = [1, 256], strides = [1, 1]} : vector<8x256xf32> to vector<1x256xf32>
    %794 = vector.broadcast %792 : vector<8x1xf32> to vector<8x256xf32>
    %795 = vector.broadcast %793 : vector<1x256xf32> to vector<8x256xf32>
    %796 = arith.mulf %794, %795 : vector<8x256xf32>
    %797 = arith.addf %791, %796 : vector<8x256xf32>
    %c0_146 = arith.constant 0 : index
    %c0_147 = arith.constant 0 : index
    %798 = vector.load %arg12[%c0_146, %c0_147] : memref<8x256xf32, #tpu.memory_space<vmem>>, vector<8x256xf32>
    %799 = arith.addf %798, %797 : vector<8x256xf32>
    %c0_148 = arith.constant 0 : index
    %c0_149 = arith.constant 0 : index
    %800 = vector.load %arg12[%c0_148, %c0_149] : memref<8x256xf32, #tpu.memory_space<vmem>>, vector<8x256xf32>
    tpu.vector_store %arg12[%c0_148, %c0_149], %799 {strides = array<i32>} : memref<8x256xf32, #tpu.memory_space<vmem>>, vector<8x256xf32>,
    %c0_150 = arith.constant 0 : index
    %c0_151 = arith.constant 0 : index
    %801 = vector.load %arg12[%c0_150, %c0_151] : memref<8x256xf32, #tpu.memory_space<vmem>>, vector<8x256xf32>
    %802 = arith.mulf %801, %0 : vector<8x256xf32>
    %cst_152 = arith.constant dense<0.000000e+00> : vector<8xf32>
    %803 = vector.multi_reduction <add>, %802, %cst_152 [1] : vector<8x256xf32> to vector<8xf32>
    %804 = vector.shape_cast %803 : vector<8xf32> to vector<8x1xf32>
    %cst_153 = arith.constant 7.812500e-03 : f32
    %805 = vector.broadcast %cst_153 : f32 to vector<8x1xf32>
    %806 = arith.mulf %804, %805 : vector<8x1xf32>
    %807 = vector.broadcast %806 : vector<8x1xf32> to vector<8x256xf32>
    %808 = arith.subf %801, %807 : vector<8x256xf32>
    %809 = arith.mulf %808, %0 : vector<8x256xf32>
    %810 = arith.mulf %809, %809 : vector<8x256xf32>
    %cst_154 = arith.constant dense<0.000000e+00> : vector<8xf32>
    %811 = vector.multi_reduction <add>, %810, %cst_154 [1] : vector<8x256xf32> to vector<8xf32>
    %812 = vector.shape_cast %811 : vector<8xf32> to vector<8x1xf32>
    %cst_155 = arith.constant 7.812500e-03 : f32
    %813 = vector.broadcast %cst_155 : f32 to vector<8x1xf32>
    %814 = arith.mulf %812, %813 : vector<8x1xf32>
    %c1_156 = arith.constant 1 : index
    %c0_157 = arith.constant 0 : index
    %c0_158 = arith.constant 0 : index
    %815 = vector.load %arg9[%c1_156, %c0_157, %c0_158] : memref<3x8x1xf32, #tpu.memory_space<vmem>>, vector<1x8x1xf32>
    %816 = vector.shape_cast %815 : vector<1x8x1xf32> to vector<8x1xf32>
    %cst_159 = arith.constant 9.99999974E-6 : f32
    %817 = vector.broadcast %cst_159 : f32 to vector<8x1xf32>
    %818 = arith.addf %814, %817 : vector<8x1xf32>
    %819 = math.rsqrt %818 : vector<8x1xf32>
    %820 = arith.mulf %816, %819 : vector<8x1xf32>
    %c1_160 = arith.constant 1 : index
    %c0_161 = arith.constant 0 : index
    %c0_162 = arith.constant 0 : index
    %821 = vector.load %arg10[%c1_160, %c0_161, %c0_162] : memref<3x8x1xf32, #tpu.memory_space<vmem>>, vector<1x8x1xf32>
    %822 = vector.shape_cast %821 : vector<1x8x1xf32> to vector<8x1xf32>
    %823 = arith.mulf %806, %820 : vector<8x1xf32>
    %824 = arith.subf %822, %823 : vector<8x1xf32>
    %825 = vector.broadcast %820 : vector<8x1xf32> to vector<8x256xf32>
    %826 = arith.mulf %801, %825 : vector<8x256xf32>
    %827 = vector.broadcast %824 : vector<8x1xf32> to vector<8x256xf32>
    %828 = arith.addf %826, %827 : vector<8x256xf32>
    %cst_163 = arith.constant 0.000000e+00 : f32
    %829 = vector.broadcast %cst_163 : f32 to vector<8x256xf32>
    %830 = arith.maximumf %828, %829 : vector<8x256xf32>
    %831 = arith.mulf %830, %0 : vector<8x256xf32>
    %c0_164 = arith.constant 0 : index
    %c0_165 = arith.constant 0 : index
    %832 = vector.load %arg14[%c0_164, %c0_165] : memref<8x256xf32, #tpu.memory_space<vmem>>, vector<8x256xf32>
    tpu.vector_store %arg14[%c0_164, %c0_165], %831 {strides = array<i32>} : memref<8x256xf32, #tpu.memory_space<vmem>>, vector<8x256xf32>,
    %c0_166 = arith.constant 0 : index
    %c0_167 = arith.constant 0 : index
    %833 = vector.load %arg14[%c0_166, %c0_167] : memref<8x256xf32, #tpu.memory_space<vmem>>, vector<8x256xf32>
    %cst_168 = arith.constant 0.000000e+00 : f32
    %834 = vector.broadcast %cst_168 : f32 to vector<8x256xf32>
    %c0_169 = arith.constant 0 : index
    %c0_170 = arith.constant 0 : index
    %835 = vector.load %arg12[%c0_169, %c0_170] : memref<8x256xf32, #tpu.memory_space<vmem>>, vector<8x256xf32>
    tpu.vector_store %arg12[%c0_169, %c0_170], %834 {strides = array<i32>} : memref<8x256xf32, #tpu.memory_space<vmem>>, vector<8x256xf32>,
    %c0_171 = arith.constant 0 : index
    %c0_172 = arith.constant 0 : index
    %c0_173 = arith.constant 0 : index
    %836 = vector.load %arg8[%c0_171, %c0_172, %c0_173] : memref<9x8x8xf32, #tpu.memory_space<vmem>>, vector<1x8x8xf32>
    %837 = vector.shape_cast %836 : vector<1x8x8xf32> to vector<8x8xf32>
    %838 = vector.extract_strided_slice %833 {offsets = [0, 245], sizes = [8, 11], strides = [1, 1]} : vector<8x256xf32> to vector<8x11xf32>
    %839 = vector.extract_strided_slice %833 {offsets = [0, 0], sizes = [8, 245], strides = [1, 1]} : vector<8x256xf32> to vector<8x245xf32>
    %840 = tpu.concatenate %838, %839 in 1 : vector<8x11xf32>, vector<8x245xf32> -> vector<8x256xf32>
    %841 = vector.extract_strided_slice %837 {offsets = [0, 0], sizes = [8, 1], strides = [1, 1]} : vector<8x8xf32> to vector<8x1xf32>
    %842 = vector.extract_strided_slice %840 {offsets = [0, 0], sizes = [1, 256], strides = [1, 1]} : vector<8x256xf32> to vector<1x256xf32>
    %843 = vector.broadcast %841 : vector<8x1xf32> to vector<8x256xf32>
    %844 = vector.broadcast %842 : vector<1x256xf32> to vector<8x256xf32>
    %845 = arith.mulf %843, %844 : vector<8x256xf32>
    %846 = vector.extract_strided_slice %837 {offsets = [0, 1], sizes = [8, 1], strides = [1, 1]} : vector<8x8xf32> to vector<8x1xf32>
    %847 = vector.extract_strided_slice %840 {offsets = [1, 0], sizes = [1, 256], strides = [1, 1]} : vector<8x256xf32> to vector<1x256xf32>
    %848 = vector.broadcast %846 : vector<8x1xf32> to vector<8x256xf32>
    %849 = vector.broadcast %847 : vector<1x256xf32> to vector<8x256xf32>
    %850 = arith.mulf %848, %849 : vector<8x256xf32>
    %851 = arith.addf %845, %850 : vector<8x256xf32>
    %852 = vector.extract_strided_slice %837 {offsets = [0, 2], sizes = [8, 1], strides = [1, 1]} : vector<8x8xf32> to vector<8x1xf32>
    %853 = vector.extract_strided_slice %840 {offsets = [2, 0], sizes = [1, 256], strides = [1, 1]} : vector<8x256xf32> to vector<1x256xf32>
    %854 = vector.broadcast %852 : vector<8x1xf32> to vector<8x256xf32>
    %855 = vector.broadcast %853 : vector<1x256xf32> to vector<8x256xf32>
    %856 = arith.mulf %854, %855 : vector<8x256xf32>
    %857 = arith.addf %851, %856 : vector<8x256xf32>
    %858 = vector.extract_strided_slice %837 {offsets = [0, 3], sizes = [8, 1], strides = [1, 1]} : vector<8x8xf32> to vector<8x1xf32>
    %859 = vector.extract_strided_slice %840 {offsets = [3, 0], sizes = [1, 256], strides = [1, 1]} : vector<8x256xf32> to vector<1x256xf32>
    %860 = vector.broadcast %858 : vector<8x1xf32> to vector<8x256xf32>
    %861 = vector.broadcast %859 : vector<1x256xf32> to vector<8x256xf32>
    %862 = arith.mulf %860, %861 : vector<8x256xf32>
    %863 = arith.addf %857, %862 : vector<8x256xf32>
    %864 = vector.extract_strided_slice %837 {offsets = [0, 4], sizes = [8, 1], strides = [1, 1]} : vector<8x8xf32> to vector<8x1xf32>
    %865 = vector.extract_strided_slice %840 {offsets = [4, 0], sizes = [1, 256], strides = [1, 1]} : vector<8x256xf32> to vector<1x256xf32>
    %866 = vector.broadcast %864 : vector<8x1xf32> to vector<8x256xf32>
    %867 = vector.broadcast %865 : vector<1x256xf32> to vector<8x256xf32>
    %868 = arith.mulf %866, %867 : vector<8x256xf32>
    %869 = arith.addf %863, %868 : vector<8x256xf32>
    %870 = vector.extract_strided_slice %837 {offsets = [0, 5], sizes = [8, 1], strides = [1, 1]} : vector<8x8xf32> to vector<8x1xf32>
    %871 = vector.extract_strided_slice %840 {offsets = [5, 0], sizes = [1, 256], strides = [1, 1]} : vector<8x256xf32> to vector<1x256xf32>
    %872 = vector.broadcast %870 : vector<8x1xf32> to vector<8x256xf32>
    %873 = vector.broadcast %871 : vector<1x256xf32> to vector<8x256xf32>
    %874 = arith.mulf %872, %873 : vector<8x256xf32>
    %875 = arith.addf %869, %874 : vector<8x256xf32>
    %876 = vector.extract_strided_slice %837 {offsets = [0, 6], sizes = [8, 1], strides = [1, 1]} : vector<8x8xf32> to vector<8x1xf32>
    %877 = vector.extract_strided_slice %840 {offsets = [6, 0], sizes = [1, 256], strides = [1, 1]} : vector<8x256xf32> to vector<1x256xf32>
    %878 = vector.broadcast %876 : vector<8x1xf32> to vector<8x256xf32>
    %879 = vector.broadcast %877 : vector<1x256xf32> to vector<8x256xf32>
    %880 = arith.mulf %878, %879 : vector<8x256xf32>
    %881 = arith.addf %875, %880 : vector<8x256xf32>
    %882 = vector.extract_strided_slice %837 {offsets = [0, 7], sizes = [8, 1], strides = [1, 1]} : vector<8x8xf32> to vector<8x1xf32>
    %883 = vector.extract_strided_slice %840 {offsets = [7, 0], sizes = [1, 256], strides = [1, 1]} : vector<8x256xf32> to vector<1x256xf32>
    %884 = vector.broadcast %882 : vector<8x1xf32> to vector<8x256xf32>
    %885 = vector.broadcast %883 : vector<1x256xf32> to vector<8x256xf32>
    %886 = arith.mulf %884, %885 : vector<8x256xf32>
    %887 = arith.addf %881, %886 : vector<8x256xf32>
    %c0_174 = arith.constant 0 : index
    %c0_175 = arith.constant 0 : index
    %888 = vector.load %arg12[%c0_174, %c0_175] : memref<8x256xf32, #tpu.memory_space<vmem>>, vector<8x256xf32>
    %889 = arith.addf %888, %887 : vector<8x256xf32>
    %c0_176 = arith.constant 0 : index
    %c0_177 = arith.constant 0 : index
    %890 = vector.load %arg12[%c0_176, %c0_177] : memref<8x256xf32, #tpu.memory_space<vmem>>, vector<8x256xf32>
    tpu.vector_store %arg12[%c0_176, %c0_177], %889 {strides = array<i32>} : memref<8x256xf32, #tpu.memory_space<vmem>>, vector<8x256xf32>,
    %c1_178 = arith.constant 1 : index
    %c0_179 = arith.constant 0 : index
    %c0_180 = arith.constant 0 : index
    %891 = vector.load %arg8[%c1_178, %c0_179, %c0_180] : memref<9x8x8xf32, #tpu.memory_space<vmem>>, vector<1x8x8xf32>
    %892 = vector.shape_cast %891 : vector<1x8x8xf32> to vector<8x8xf32>
    %893 = vector.extract_strided_slice %833 {offsets = [0, 246], sizes = [8, 10], strides = [1, 1]} : vector<8x256xf32> to vector<8x10xf32>
    %894 = vector.extract_strided_slice %833 {offsets = [0, 0], sizes = [8, 246], strides = [1, 1]} : vector<8x256xf32> to vector<8x246xf32>
    %895 = tpu.concatenate %893, %894 in 1 : vector<8x10xf32>, vector<8x246xf32> -> vector<8x256xf32>
    %896 = vector.extract_strided_slice %892 {offsets = [0, 0], sizes = [8, 1], strides = [1, 1]} : vector<8x8xf32> to vector<8x1xf32>
    %897 = vector.extract_strided_slice %895 {offsets = [0, 0], sizes = [1, 256], strides = [1, 1]} : vector<8x256xf32> to vector<1x256xf32>
    %898 = vector.broadcast %896 : vector<8x1xf32> to vector<8x256xf32>
    %899 = vector.broadcast %897 : vector<1x256xf32> to vector<8x256xf32>
    %900 = arith.mulf %898, %899 : vector<8x256xf32>
    %901 = vector.extract_strided_slice %892 {offsets = [0, 1], sizes = [8, 1], strides = [1, 1]} : vector<8x8xf32> to vector<8x1xf32>
    %902 = vector.extract_strided_slice %895 {offsets = [1, 0], sizes = [1, 256], strides = [1, 1]} : vector<8x256xf32> to vector<1x256xf32>
    %903 = vector.broadcast %901 : vector<8x1xf32> to vector<8x256xf32>
    %904 = vector.broadcast %902 : vector<1x256xf32> to vector<8x256xf32>
    %905 = arith.mulf %903, %904 : vector<8x256xf32>
    %906 = arith.addf %900, %905 : vector<8x256xf32>
    %907 = vector.extract_strided_slice %892 {offsets = [0, 2], sizes = [8, 1], strides = [1, 1]} : vector<8x8xf32> to vector<8x1xf32>
    %908 = vector.extract_strided_slice %895 {offsets = [2, 0], sizes = [1, 256], strides = [1, 1]} : vector<8x256xf32> to vector<1x256xf32>
    %909 = vector.broadcast %907 : vector<8x1xf32> to vector<8x256xf32>
    %910 = vector.broadcast %908 : vector<1x256xf32> to vector<8x256xf32>
    %911 = arith.mulf %909, %910 : vector<8x256xf32>
    %912 = arith.addf %906, %911 : vector<8x256xf32>
    %913 = vector.extract_strided_slice %892 {offsets = [0, 3], sizes = [8, 1], strides = [1, 1]} : vector<8x8xf32> to vector<8x1xf32>
    %914 = vector.extract_strided_slice %895 {offsets = [3, 0], sizes = [1, 256], strides = [1, 1]} : vector<8x256xf32> to vector<1x256xf32>
    %915 = vector.broadcast %913 : vector<8x1xf32> to vector<8x256xf32>
    %916 = vector.broadcast %914 : vector<1x256xf32> to vector<8x256xf32>
    %917 = arith.mulf %915, %916 : vector<8x256xf32>
    %918 = arith.addf %912, %917 : vector<8x256xf32>
    %919 = vector.extract_strided_slice %892 {offsets = [0, 4], sizes = [8, 1], strides = [1, 1]} : vector<8x8xf32> to vector<8x1xf32>
    %920 = vector.extract_strided_slice %895 {offsets = [4, 0], sizes = [1, 256], strides = [1, 1]} : vector<8x256xf32> to vector<1x256xf32>
    %921 = vector.broadcast %919 : vector<8x1xf32> to vector<8x256xf32>
    %922 = vector.broadcast %920 : vector<1x256xf32> to vector<8x256xf32>
    %923 = arith.mulf %921, %922 : vector<8x256xf32>
    %924 = arith.addf %918, %923 : vector<8x256xf32>
    %925 = vector.extract_strided_slice %892 {offsets = [0, 5], sizes = [8, 1], strides = [1, 1]} : vector<8x8xf32> to vector<8x1xf32>
    %926 = vector.extract_strided_slice %895 {offsets = [5, 0], sizes = [1, 256], strides = [1, 1]} : vector<8x256xf32> to vector<1x256xf32>
    %927 = vector.broadcast %925 : vector<8x1xf32> to vector<8x256xf32>
    %928 = vector.broadcast %926 : vector<1x256xf32> to vector<8x256xf32>
    %929 = arith.mulf %927, %928 : vector<8x256xf32>
    %930 = arith.addf %924, %929 : vector<8x256xf32>
    %931 = vector.extract_strided_slice %892 {offsets = [0, 6], sizes = [8, 1], strides = [1, 1]} : vector<8x8xf32> to vector<8x1xf32>
    %932 = vector.extract_strided_slice %895 {offsets = [6, 0], sizes = [1, 256], strides = [1, 1]} : vector<8x256xf32> to vector<1x256xf32>
    %933 = vector.broadcast %931 : vector<8x1xf32> to vector<8x256xf32>
    %934 = vector.broadcast %932 : vector<1x256xf32> to vector<8x256xf32>
    %935 = arith.mulf %933, %934 : vector<8x256xf32>
    %936 = arith.addf %930, %935 : vector<8x256xf32>
    %937 = vector.extract_strided_slice %892 {offsets = [0, 7], sizes = [8, 1], strides = [1, 1]} : vector<8x8xf32> to vector<8x1xf32>
    %938 = vector.extract_strided_slice %895 {offsets = [7, 0], sizes = [1, 256], strides = [1, 1]} : vector<8x256xf32> to vector<1x256xf32>
    %939 = vector.broadcast %937 : vector<8x1xf32> to vector<8x256xf32>
    %940 = vector.broadcast %938 : vector<1x256xf32> to vector<8x256xf32>
    %941 = arith.mulf %939, %940 : vector<8x256xf32>
    %942 = arith.addf %936, %941 : vector<8x256xf32>
    %c0_181 = arith.constant 0 : index
    %c0_182 = arith.constant 0 : index
    %943 = vector.load %arg12[%c0_181, %c0_182] : memref<8x256xf32, #tpu.memory_space<vmem>>, vector<8x256xf32>
    %944 = arith.addf %943, %942 : vector<8x256xf32>
    %c0_183 = arith.constant 0 : index
    %c0_184 = arith.constant 0 : index
    %945 = vector.load %arg12[%c0_183, %c0_184] : memref<8x256xf32, #tpu.memory_space<vmem>>, vector<8x256xf32>
    tpu.vector_store %arg12[%c0_183, %c0_184], %944 {strides = array<i32>} : memref<8x256xf32, #tpu.memory_space<vmem>>, vector<8x256xf32>,
    %c2_185 = arith.constant 2 : index
    %c0_186 = arith.constant 0 : index
    %c0_187 = arith.constant 0 : index
    %946 = vector.load %arg8[%c2_185, %c0_186, %c0_187] : memref<9x8x8xf32, #tpu.memory_space<vmem>>, vector<1x8x8xf32>
    %947 = vector.shape_cast %946 : vector<1x8x8xf32> to vector<8x8xf32>
    %948 = vector.extract_strided_slice %833 {offsets = [0, 247], sizes = [8, 9], strides = [1, 1]} : vector<8x256xf32> to vector<8x9xf32>
    %949 = vector.extract_strided_slice %833 {offsets = [0, 0], sizes = [8, 247], strides = [1, 1]} : vector<8x256xf32> to vector<8x247xf32>
    %950 = tpu.concatenate %948, %949 in 1 : vector<8x9xf32>, vector<8x247xf32> -> vector<8x256xf32>
    %951 = vector.extract_strided_slice %947 {offsets = [0, 0], sizes = [8, 1], strides = [1, 1]} : vector<8x8xf32> to vector<8x1xf32>
    %952 = vector.extract_strided_slice %950 {offsets = [0, 0], sizes = [1, 256], strides = [1, 1]} : vector<8x256xf32> to vector<1x256xf32>
    %953 = vector.broadcast %951 : vector<8x1xf32> to vector<8x256xf32>
    %954 = vector.broadcast %952 : vector<1x256xf32> to vector<8x256xf32>
    %955 = arith.mulf %953, %954 : vector<8x256xf32>
    %956 = vector.extract_strided_slice %947 {offsets = [0, 1], sizes = [8, 1], strides = [1, 1]} : vector<8x8xf32> to vector<8x1xf32>
    %957 = vector.extract_strided_slice %950 {offsets = [1, 0], sizes = [1, 256], strides = [1, 1]} : vector<8x256xf32> to vector<1x256xf32>
    %958 = vector.broadcast %956 : vector<8x1xf32> to vector<8x256xf32>
    %959 = vector.broadcast %957 : vector<1x256xf32> to vector<8x256xf32>
    %960 = arith.mulf %958, %959 : vector<8x256xf32>
    %961 = arith.addf %955, %960 : vector<8x256xf32>
    %962 = vector.extract_strided_slice %947 {offsets = [0, 2], sizes = [8, 1], strides = [1, 1]} : vector<8x8xf32> to vector<8x1xf32>
    %963 = vector.extract_strided_slice %950 {offsets = [2, 0], sizes = [1, 256], strides = [1, 1]} : vector<8x256xf32> to vector<1x256xf32>
    %964 = vector.broadcast %962 : vector<8x1xf32> to vector<8x256xf32>
    %965 = vector.broadcast %963 : vector<1x256xf32> to vector<8x256xf32>
    %966 = arith.mulf %964, %965 : vector<8x256xf32>
    %967 = arith.addf %961, %966 : vector<8x256xf32>
    %968 = vector.extract_strided_slice %947 {offsets = [0, 3], sizes = [8, 1], strides = [1, 1]} : vector<8x8xf32> to vector<8x1xf32>
    %969 = vector.extract_strided_slice %950 {offsets = [3, 0], sizes = [1, 256], strides = [1, 1]} : vector<8x256xf32> to vector<1x256xf32>
    %970 = vector.broadcast %968 : vector<8x1xf32> to vector<8x256xf32>
    %971 = vector.broadcast %969 : vector<1x256xf32> to vector<8x256xf32>
    %972 = arith.mulf %970, %971 : vector<8x256xf32>
    %973 = arith.addf %967, %972 : vector<8x256xf32>
    %974 = vector.extract_strided_slice %947 {offsets = [0, 4], sizes = [8, 1], strides = [1, 1]} : vector<8x8xf32> to vector<8x1xf32>
    %975 = vector.extract_strided_slice %950 {offsets = [4, 0], sizes = [1, 256], strides = [1, 1]} : vector<8x256xf32> to vector<1x256xf32>
    %976 = vector.broadcast %974 : vector<8x1xf32> to vector<8x256xf32>
    %977 = vector.broadcast %975 : vector<1x256xf32> to vector<8x256xf32>
    %978 = arith.mulf %976, %977 : vector<8x256xf32>
    %979 = arith.addf %973, %978 : vector<8x256xf32>
    %980 = vector.extract_strided_slice %947 {offsets = [0, 5], sizes = [8, 1], strides = [1, 1]} : vector<8x8xf32> to vector<8x1xf32>
    %981 = vector.extract_strided_slice %950 {offsets = [5, 0], sizes = [1, 256], strides = [1, 1]} : vector<8x256xf32> to vector<1x256xf32>
    %982 = vector.broadcast %980 : vector<8x1xf32> to vector<8x256xf32>
    %983 = vector.broadcast %981 : vector<1x256xf32> to vector<8x256xf32>
    %984 = arith.mulf %982, %983 : vector<8x256xf32>
    %985 = arith.addf %979, %984 : vector<8x256xf32>
    %986 = vector.extract_strided_slice %947 {offsets = [0, 6], sizes = [8, 1], strides = [1, 1]} : vector<8x8xf32> to vector<8x1xf32>
    %987 = vector.extract_strided_slice %950 {offsets = [6, 0], sizes = [1, 256], strides = [1, 1]} : vector<8x256xf32> to vector<1x256xf32>
    %988 = vector.broadcast %986 : vector<8x1xf32> to vector<8x256xf32>
    %989 = vector.broadcast %987 : vector<1x256xf32> to vector<8x256xf32>
    %990 = arith.mulf %988, %989 : vector<8x256xf32>
    %991 = arith.addf %985, %990 : vector<8x256xf32>
    %992 = vector.extract_strided_slice %947 {offsets = [0, 7], sizes = [8, 1], strides = [1, 1]} : vector<8x8xf32> to vector<8x1xf32>
    %993 = vector.extract_strided_slice %950 {offsets = [7, 0], sizes = [1, 256], strides = [1, 1]} : vector<8x256xf32> to vector<1x256xf32>
    %994 = vector.broadcast %992 : vector<8x1xf32> to vector<8x256xf32>
    %995 = vector.broadcast %993 : vector<1x256xf32> to vector<8x256xf32>
    %996 = arith.mulf %994, %995 : vector<8x256xf32>
    %997 = arith.addf %991, %996 : vector<8x256xf32>
    %c0_188 = arith.constant 0 : index
    %c0_189 = arith.constant 0 : index
    %998 = vector.load %arg12[%c0_188, %c0_189] : memref<8x256xf32, #tpu.memory_space<vmem>>, vector<8x256xf32>
    %999 = arith.addf %998, %997 : vector<8x256xf32>
    %c0_190 = arith.constant 0 : index
    %c0_191 = arith.constant 0 : index
    %1000 = vector.load %arg12[%c0_190, %c0_191] : memref<8x256xf32, #tpu.memory_space<vmem>>, vector<8x256xf32>
    tpu.vector_store %arg12[%c0_190, %c0_191], %999 {strides = array<i32>} : memref<8x256xf32, #tpu.memory_space<vmem>>, vector<8x256xf32>,
    %c3_192 = arith.constant 3 : index
    %c0_193 = arith.constant 0 : index
    %c0_194 = arith.constant 0 : index
    %1001 = vector.load %arg8[%c3_192, %c0_193, %c0_194] : memref<9x8x8xf32, #tpu.memory_space<vmem>>, vector<1x8x8xf32>
    %1002 = vector.shape_cast %1001 : vector<1x8x8xf32> to vector<8x8xf32>
    %1003 = vector.extract_strided_slice %833 {offsets = [0, 255], sizes = [8, 1], strides = [1, 1]} : vector<8x256xf32> to vector<8x1xf32>
    %1004 = vector.extract_strided_slice %833 {offsets = [0, 0], sizes = [8, 255], strides = [1, 1]} : vector<8x256xf32> to vector<8x255xf32>
    %1005 = tpu.concatenate %1003, %1004 in 1 : vector<8x1xf32>, vector<8x255xf32> -> vector<8x256xf32>
    %1006 = vector.extract_strided_slice %1002 {offsets = [0, 0], sizes = [8, 1], strides = [1, 1]} : vector<8x8xf32> to vector<8x1xf32>
    %1007 = vector.extract_strided_slice %1005 {offsets = [0, 0], sizes = [1, 256], strides = [1, 1]} : vector<8x256xf32> to vector<1x256xf32>
    %1008 = vector.broadcast %1006 : vector<8x1xf32> to vector<8x256xf32>
    %1009 = vector.broadcast %1007 : vector<1x256xf32> to vector<8x256xf32>
    %1010 = arith.mulf %1008, %1009 : vector<8x256xf32>
    %1011 = vector.extract_strided_slice %1002 {offsets = [0, 1], sizes = [8, 1], strides = [1, 1]} : vector<8x8xf32> to vector<8x1xf32>
    %1012 = vector.extract_strided_slice %1005 {offsets = [1, 0], sizes = [1, 256], strides = [1, 1]} : vector<8x256xf32> to vector<1x256xf32>
    %1013 = vector.broadcast %1011 : vector<8x1xf32> to vector<8x256xf32>
    %1014 = vector.broadcast %1012 : vector<1x256xf32> to vector<8x256xf32>
    %1015 = arith.mulf %1013, %1014 : vector<8x256xf32>
    %1016 = arith.addf %1010, %1015 : vector<8x256xf32>
    %1017 = vector.extract_strided_slice %1002 {offsets = [0, 2], sizes = [8, 1], strides = [1, 1]} : vector<8x8xf32> to vector<8x1xf32>
    %1018 = vector.extract_strided_slice %1005 {offsets = [2, 0], sizes = [1, 256], strides = [1, 1]} : vector<8x256xf32> to vector<1x256xf32>
    %1019 = vector.broadcast %1017 : vector<8x1xf32> to vector<8x256xf32>
    %1020 = vector.broadcast %1018 : vector<1x256xf32> to vector<8x256xf32>
    %1021 = arith.mulf %1019, %1020 : vector<8x256xf32>
    %1022 = arith.addf %1016, %1021 : vector<8x256xf32>
    %1023 = vector.extract_strided_slice %1002 {offsets = [0, 3], sizes = [8, 1], strides = [1, 1]} : vector<8x8xf32> to vector<8x1xf32>
    %1024 = vector.extract_strided_slice %1005 {offsets = [3, 0], sizes = [1, 256], strides = [1, 1]} : vector<8x256xf32> to vector<1x256xf32>
    %1025 = vector.broadcast %1023 : vector<8x1xf32> to vector<8x256xf32>
    %1026 = vector.broadcast %1024 : vector<1x256xf32> to vector<8x256xf32>
    %1027 = arith.mulf %1025, %1026 : vector<8x256xf32>
    %1028 = arith.addf %1022, %1027 : vector<8x256xf32>
    %1029 = vector.extract_strided_slice %1002 {offsets = [0, 4], sizes = [8, 1], strides = [1, 1]} : vector<8x8xf32> to vector<8x1xf32>
    %1030 = vector.extract_strided_slice %1005 {offsets = [4, 0], sizes = [1, 256], strides = [1, 1]} : vector<8x256xf32> to vector<1x256xf32>
    %1031 = vector.broadcast %1029 : vector<8x1xf32> to vector<8x256xf32>
    %1032 = vector.broadcast %1030 : vector<1x256xf32> to vector<8x256xf32>
    %1033 = arith.mulf %1031, %1032 : vector<8x256xf32>
    %1034 = arith.addf %1028, %1033 : vector<8x256xf32>
    %1035 = vector.extract_strided_slice %1002 {offsets = [0, 5], sizes = [8, 1], strides = [1, 1]} : vector<8x8xf32> to vector<8x1xf32>
    %1036 = vector.extract_strided_slice %1005 {offsets = [5, 0], sizes = [1, 256], strides = [1, 1]} : vector<8x256xf32> to vector<1x256xf32>
    %1037 = vector.broadcast %1035 : vector<8x1xf32> to vector<8x256xf32>
    %1038 = vector.broadcast %1036 : vector<1x256xf32> to vector<8x256xf32>
    %1039 = arith.mulf %1037, %1038 : vector<8x256xf32>
    %1040 = arith.addf %1034, %1039 : vector<8x256xf32>
    %1041 = vector.extract_strided_slice %1002 {offsets = [0, 6], sizes = [8, 1], strides = [1, 1]} : vector<8x8xf32> to vector<8x1xf32>
    %1042 = vector.extract_strided_slice %1005 {offsets = [6, 0], sizes = [1, 256], strides = [1, 1]} : vector<8x256xf32> to vector<1x256xf32>
    %1043 = vector.broadcast %1041 : vector<8x1xf32> to vector<8x256xf32>
    %1044 = vector.broadcast %1042 : vector<1x256xf32> to vector<8x256xf32>
    %1045 = arith.mulf %1043, %1044 : vector<8x256xf32>
    %1046 = arith.addf %1040, %1045 : vector<8x256xf32>
    %1047 = vector.extract_strided_slice %1002 {offsets = [0, 7], sizes = [8, 1], strides = [1, 1]} : vector<8x8xf32> to vector<8x1xf32>
    %1048 = vector.extract_strided_slice %1005 {offsets = [7, 0], sizes = [1, 256], strides = [1, 1]} : vector<8x256xf32> to vector<1x256xf32>
    %1049 = vector.broadcast %1047 : vector<8x1xf32> to vector<8x256xf32>
    %1050 = vector.broadcast %1048 : vector<1x256xf32> to vector<8x256xf32>
    %1051 = arith.mulf %1049, %1050 : vector<8x256xf32>
    %1052 = arith.addf %1046, %1051 : vector<8x256xf32>
    %c0_195 = arith.constant 0 : index
    %c0_196 = arith.constant 0 : index
    %1053 = vector.load %arg12[%c0_195, %c0_196] : memref<8x256xf32, #tpu.memory_space<vmem>>, vector<8x256xf32>
    %1054 = arith.addf %1053, %1052 : vector<8x256xf32>
    %c0_197 = arith.constant 0 : index
    %c0_198 = arith.constant 0 : index
    %1055 = vector.load %arg12[%c0_197, %c0_198] : memref<8x256xf32, #tpu.memory_space<vmem>>, vector<8x256xf32>
    tpu.vector_store %arg12[%c0_197, %c0_198], %1054 {strides = array<i32>} : memref<8x256xf32, #tpu.memory_space<vmem>>, vector<8x256xf32>,
    %c4_199 = arith.constant 4 : index
    %c0_200 = arith.constant 0 : index
    %c0_201 = arith.constant 0 : index
    %1056 = vector.load %arg8[%c4_199, %c0_200, %c0_201] : memref<9x8x8xf32, #tpu.memory_space<vmem>>, vector<1x8x8xf32>
    %1057 = vector.shape_cast %1056 : vector<1x8x8xf32> to vector<8x8xf32>
    %1058 = vector.extract_strided_slice %1057 {offsets = [0, 0], sizes = [8, 1], strides = [1, 1]} : vector<8x8xf32> to vector<8x1xf32>
    %1059 = vector.extract_strided_slice %833 {offsets = [0, 0], sizes = [1, 256], strides = [1, 1]} : vector<8x256xf32> to vector<1x256xf32>
    %1060 = vector.broadcast %1058 : vector<8x1xf32> to vector<8x256xf32>
    %1061 = vector.broadcast %1059 : vector<1x256xf32> to vector<8x256xf32>
    %1062 = arith.mulf %1060, %1061 : vector<8x256xf32>
    %1063 = vector.extract_strided_slice %1057 {offsets = [0, 1], sizes = [8, 1], strides = [1, 1]} : vector<8x8xf32> to vector<8x1xf32>
    %1064 = vector.extract_strided_slice %833 {offsets = [1, 0], sizes = [1, 256], strides = [1, 1]} : vector<8x256xf32> to vector<1x256xf32>
    %1065 = vector.broadcast %1063 : vector<8x1xf32> to vector<8x256xf32>
    %1066 = vector.broadcast %1064 : vector<1x256xf32> to vector<8x256xf32>
    %1067 = arith.mulf %1065, %1066 : vector<8x256xf32>
    %1068 = arith.addf %1062, %1067 : vector<8x256xf32>
    %1069 = vector.extract_strided_slice %1057 {offsets = [0, 2], sizes = [8, 1], strides = [1, 1]} : vector<8x8xf32> to vector<8x1xf32>
    %1070 = vector.extract_strided_slice %833 {offsets = [2, 0], sizes = [1, 256], strides = [1, 1]} : vector<8x256xf32> to vector<1x256xf32>
    %1071 = vector.broadcast %1069 : vector<8x1xf32> to vector<8x256xf32>
    %1072 = vector.broadcast %1070 : vector<1x256xf32> to vector<8x256xf32>
    %1073 = arith.mulf %1071, %1072 : vector<8x256xf32>
    %1074 = arith.addf %1068, %1073 : vector<8x256xf32>
    %1075 = vector.extract_strided_slice %1057 {offsets = [0, 3], sizes = [8, 1], strides = [1, 1]} : vector<8x8xf32> to vector<8x1xf32>
    %1076 = vector.extract_strided_slice %833 {offsets = [3, 0], sizes = [1, 256], strides = [1, 1]} : vector<8x256xf32> to vector<1x256xf32>
    %1077 = vector.broadcast %1075 : vector<8x1xf32> to vector<8x256xf32>
    %1078 = vector.broadcast %1076 : vector<1x256xf32> to vector<8x256xf32>
    %1079 = arith.mulf %1077, %1078 : vector<8x256xf32>
    %1080 = arith.addf %1074, %1079 : vector<8x256xf32>
    %1081 = vector.extract_strided_slice %1057 {offsets = [0, 4], sizes = [8, 1], strides = [1, 1]} : vector<8x8xf32> to vector<8x1xf32>
    %1082 = vector.extract_strided_slice %833 {offsets = [4, 0], sizes = [1, 256], strides = [1, 1]} : vector<8x256xf32> to vector<1x256xf32>
    %1083 = vector.broadcast %1081 : vector<8x1xf32> to vector<8x256xf32>
    %1084 = vector.broadcast %1082 : vector<1x256xf32> to vector<8x256xf32>
    %1085 = arith.mulf %1083, %1084 : vector<8x256xf32>
    %1086 = arith.addf %1080, %1085 : vector<8x256xf32>
    %1087 = vector.extract_strided_slice %1057 {offsets = [0, 5], sizes = [8, 1], strides = [1, 1]} : vector<8x8xf32> to vector<8x1xf32>
    %1088 = vector.extract_strided_slice %833 {offsets = [5, 0], sizes = [1, 256], strides = [1, 1]} : vector<8x256xf32> to vector<1x256xf32>
    %1089 = vector.broadcast %1087 : vector<8x1xf32> to vector<8x256xf32>
    %1090 = vector.broadcast %1088 : vector<1x256xf32> to vector<8x256xf32>
    %1091 = arith.mulf %1089, %1090 : vector<8x256xf32>
    %1092 = arith.addf %1086, %1091 : vector<8x256xf32>
    %1093 = vector.extract_strided_slice %1057 {offsets = [0, 6], sizes = [8, 1], strides = [1, 1]} : vector<8x8xf32> to vector<8x1xf32>
    %1094 = vector.extract_strided_slice %833 {offsets = [6, 0], sizes = [1, 256], strides = [1, 1]} : vector<8x256xf32> to vector<1x256xf32>
    %1095 = vector.broadcast %1093 : vector<8x1xf32> to vector<8x256xf32>
    %1096 = vector.broadcast %1094 : vector<1x256xf32> to vector<8x256xf32>
    %1097 = arith.mulf %1095, %1096 : vector<8x256xf32>
    %1098 = arith.addf %1092, %1097 : vector<8x256xf32>
    %1099 = vector.extract_strided_slice %1057 {offsets = [0, 7], sizes = [8, 1], strides = [1, 1]} : vector<8x8xf32> to vector<8x1xf32>
    %1100 = vector.extract_strided_slice %833 {offsets = [7, 0], sizes = [1, 256], strides = [1, 1]} : vector<8x256xf32> to vector<1x256xf32>
    %1101 = vector.broadcast %1099 : vector<8x1xf32> to vector<8x256xf32>
    %1102 = vector.broadcast %1100 : vector<1x256xf32> to vector<8x256xf32>
    %1103 = arith.mulf %1101, %1102 : vector<8x256xf32>
    %1104 = arith.addf %1098, %1103 : vector<8x256xf32>
    %c0_202 = arith.constant 0 : index
    %c0_203 = arith.constant 0 : index
    %1105 = vector.load %arg12[%c0_202, %c0_203] : memref<8x256xf32, #tpu.memory_space<vmem>>, vector<8x256xf32>
    %1106 = arith.addf %1105, %1104 : vector<8x256xf32>
    %c0_204 = arith.constant 0 : index
    %c0_205 = arith.constant 0 : index
    %1107 = vector.load %arg12[%c0_204, %c0_205] : memref<8x256xf32, #tpu.memory_space<vmem>>, vector<8x256xf32>
    tpu.vector_store %arg12[%c0_204, %c0_205], %1106 {strides = array<i32>} : memref<8x256xf32, #tpu.memory_space<vmem>>, vector<8x256xf32>,
    %c5_206 = arith.constant 5 : index
    %c0_207 = arith.constant 0 : index
    %c0_208 = arith.constant 0 : index
    %1108 = vector.load %arg8[%c5_206, %c0_207, %c0_208] : memref<9x8x8xf32, #tpu.memory_space<vmem>>, vector<1x8x8xf32>
    %1109 = vector.shape_cast %1108 : vector<1x8x8xf32> to vector<8x8xf32>
    %1110 = vector.extract_strided_slice %833 {offsets = [0, 1], sizes = [8, 255], strides = [1, 1]} : vector<8x256xf32> to vector<8x255xf32>
    %1111 = vector.extract_strided_slice %833 {offsets = [0, 0], sizes = [8, 1], strides = [1, 1]} : vector<8x256xf32> to vector<8x1xf32>
    %1112 = tpu.concatenate %1110, %1111 in 1 : vector<8x255xf32>, vector<8x1xf32> -> vector<8x256xf32>
    %1113 = vector.extract_strided_slice %1109 {offsets = [0, 0], sizes = [8, 1], strides = [1, 1]} : vector<8x8xf32> to vector<8x1xf32>
    %1114 = vector.extract_strided_slice %1112 {offsets = [0, 0], sizes = [1, 256], strides = [1, 1]} : vector<8x256xf32> to vector<1x256xf32>
    %1115 = vector.broadcast %1113 : vector<8x1xf32> to vector<8x256xf32>
    %1116 = vector.broadcast %1114 : vector<1x256xf32> to vector<8x256xf32>
    %1117 = arith.mulf %1115, %1116 : vector<8x256xf32>
    %1118 = vector.extract_strided_slice %1109 {offsets = [0, 1], sizes = [8, 1], strides = [1, 1]} : vector<8x8xf32> to vector<8x1xf32>
    %1119 = vector.extract_strided_slice %1112 {offsets = [1, 0], sizes = [1, 256], strides = [1, 1]} : vector<8x256xf32> to vector<1x256xf32>
    %1120 = vector.broadcast %1118 : vector<8x1xf32> to vector<8x256xf32>
    %1121 = vector.broadcast %1119 : vector<1x256xf32> to vector<8x256xf32>
    %1122 = arith.mulf %1120, %1121 : vector<8x256xf32>
    %1123 = arith.addf %1117, %1122 : vector<8x256xf32>
    %1124 = vector.extract_strided_slice %1109 {offsets = [0, 2], sizes = [8, 1], strides = [1, 1]} : vector<8x8xf32> to vector<8x1xf32>
    %1125 = vector.extract_strided_slice %1112 {offsets = [2, 0], sizes = [1, 256], strides = [1, 1]} : vector<8x256xf32> to vector<1x256xf32>
    %1126 = vector.broadcast %1124 : vector<8x1xf32> to vector<8x256xf32>
    %1127 = vector.broadcast %1125 : vector<1x256xf32> to vector<8x256xf32>
    %1128 = arith.mulf %1126, %1127 : vector<8x256xf32>
    %1129 = arith.addf %1123, %1128 : vector<8x256xf32>
    %1130 = vector.extract_strided_slice %1109 {offsets = [0, 3], sizes = [8, 1], strides = [1, 1]} : vector<8x8xf32> to vector<8x1xf32>
    %1131 = vector.extract_strided_slice %1112 {offsets = [3, 0], sizes = [1, 256], strides = [1, 1]} : vector<8x256xf32> to vector<1x256xf32>
    %1132 = vector.broadcast %1130 : vector<8x1xf32> to vector<8x256xf32>
    %1133 = vector.broadcast %1131 : vector<1x256xf32> to vector<8x256xf32>
    %1134 = arith.mulf %1132, %1133 : vector<8x256xf32>
    %1135 = arith.addf %1129, %1134 : vector<8x256xf32>
    %1136 = vector.extract_strided_slice %1109 {offsets = [0, 4], sizes = [8, 1], strides = [1, 1]} : vector<8x8xf32> to vector<8x1xf32>
    %1137 = vector.extract_strided_slice %1112 {offsets = [4, 0], sizes = [1, 256], strides = [1, 1]} : vector<8x256xf32> to vector<1x256xf32>
    %1138 = vector.broadcast %1136 : vector<8x1xf32> to vector<8x256xf32>
    %1139 = vector.broadcast %1137 : vector<1x256xf32> to vector<8x256xf32>
    %1140 = arith.mulf %1138, %1139 : vector<8x256xf32>
    %1141 = arith.addf %1135, %1140 : vector<8x256xf32>
    %1142 = vector.extract_strided_slice %1109 {offsets = [0, 5], sizes = [8, 1], strides = [1, 1]} : vector<8x8xf32> to vector<8x1xf32>
    %1143 = vector.extract_strided_slice %1112 {offsets = [5, 0], sizes = [1, 256], strides = [1, 1]} : vector<8x256xf32> to vector<1x256xf32>
    %1144 = vector.broadcast %1142 : vector<8x1xf32> to vector<8x256xf32>
    %1145 = vector.broadcast %1143 : vector<1x256xf32> to vector<8x256xf32>
    %1146 = arith.mulf %1144, %1145 : vector<8x256xf32>
    %1147 = arith.addf %1141, %1146 : vector<8x256xf32>
    %1148 = vector.extract_strided_slice %1109 {offsets = [0, 6], sizes = [8, 1], strides = [1, 1]} : vector<8x8xf32> to vector<8x1xf32>
    %1149 = vector.extract_strided_slice %1112 {offsets = [6, 0], sizes = [1, 256], strides = [1, 1]} : vector<8x256xf32> to vector<1x256xf32>
    %1150 = vector.broadcast %1148 : vector<8x1xf32> to vector<8x256xf32>
    %1151 = vector.broadcast %1149 : vector<1x256xf32> to vector<8x256xf32>
    %1152 = arith.mulf %1150, %1151 : vector<8x256xf32>
    %1153 = arith.addf %1147, %1152 : vector<8x256xf32>
    %1154 = vector.extract_strided_slice %1109 {offsets = [0, 7], sizes = [8, 1], strides = [1, 1]} : vector<8x8xf32> to vector<8x1xf32>
    %1155 = vector.extract_strided_slice %1112 {offsets = [7, 0], sizes = [1, 256], strides = [1, 1]} : vector<8x256xf32> to vector<1x256xf32>
    %1156 = vector.broadcast %1154 : vector<8x1xf32> to vector<8x256xf32>
    %1157 = vector.broadcast %1155 : vector<1x256xf32> to vector<8x256xf32>
    %1158 = arith.mulf %1156, %1157 : vector<8x256xf32>
    %1159 = arith.addf %1153, %1158 : vector<8x256xf32>
    %c0_209 = arith.constant 0 : index
    %c0_210 = arith.constant 0 : index
    %1160 = vector.load %arg12[%c0_209, %c0_210] : memref<8x256xf32, #tpu.memory_space<vmem>>, vector<8x256xf32>
    %1161 = arith.addf %1160, %1159 : vector<8x256xf32>
    %c0_211 = arith.constant 0 : index
    %c0_212 = arith.constant 0 : index
    %1162 = vector.load %arg12[%c0_211, %c0_212] : memref<8x256xf32, #tpu.memory_space<vmem>>, vector<8x256xf32>
    tpu.vector_store %arg12[%c0_211, %c0_212], %1161 {strides = array<i32>} : memref<8x256xf32, #tpu.memory_space<vmem>>, vector<8x256xf32>,
    %c6_213 = arith.constant 6 : index
    %c0_214 = arith.constant 0 : index
    %c0_215 = arith.constant 0 : index
    %1163 = vector.load %arg8[%c6_213, %c0_214, %c0_215] : memref<9x8x8xf32, #tpu.memory_space<vmem>>, vector<1x8x8xf32>
    %1164 = vector.shape_cast %1163 : vector<1x8x8xf32> to vector<8x8xf32>
    %1165 = vector.extract_strided_slice %833 {offsets = [0, 9], sizes = [8, 247], strides = [1, 1]} : vector<8x256xf32> to vector<8x247xf32>
    %1166 = vector.extract_strided_slice %833 {offsets = [0, 0], sizes = [8, 9], strides = [1, 1]} : vector<8x256xf32> to vector<8x9xf32>
    %1167 = tpu.concatenate %1165, %1166 in 1 : vector<8x247xf32>, vector<8x9xf32> -> vector<8x256xf32>
    %1168 = vector.extract_strided_slice %1164 {offsets = [0, 0], sizes = [8, 1], strides = [1, 1]} : vector<8x8xf32> to vector<8x1xf32>
    %1169 = vector.extract_strided_slice %1167 {offsets = [0, 0], sizes = [1, 256], strides = [1, 1]} : vector<8x256xf32> to vector<1x256xf32>
    %1170 = vector.broadcast %1168 : vector<8x1xf32> to vector<8x256xf32>
    %1171 = vector.broadcast %1169 : vector<1x256xf32> to vector<8x256xf32>
    %1172 = arith.mulf %1170, %1171 : vector<8x256xf32>
    %1173 = vector.extract_strided_slice %1164 {offsets = [0, 1], sizes = [8, 1], strides = [1, 1]} : vector<8x8xf32> to vector<8x1xf32>
    %1174 = vector.extract_strided_slice %1167 {offsets = [1, 0], sizes = [1, 256], strides = [1, 1]} : vector<8x256xf32> to vector<1x256xf32>
    %1175 = vector.broadcast %1173 : vector<8x1xf32> to vector<8x256xf32>
    %1176 = vector.broadcast %1174 : vector<1x256xf32> to vector<8x256xf32>
    %1177 = arith.mulf %1175, %1176 : vector<8x256xf32>
    %1178 = arith.addf %1172, %1177 : vector<8x256xf32>
    %1179 = vector.extract_strided_slice %1164 {offsets = [0, 2], sizes = [8, 1], strides = [1, 1]} : vector<8x8xf32> to vector<8x1xf32>
    %1180 = vector.extract_strided_slice %1167 {offsets = [2, 0], sizes = [1, 256], strides = [1, 1]} : vector<8x256xf32> to vector<1x256xf32>
    %1181 = vector.broadcast %1179 : vector<8x1xf32> to vector<8x256xf32>
    %1182 = vector.broadcast %1180 : vector<1x256xf32> to vector<8x256xf32>
    %1183 = arith.mulf %1181, %1182 : vector<8x256xf32>
    %1184 = arith.addf %1178, %1183 : vector<8x256xf32>
    %1185 = vector.extract_strided_slice %1164 {offsets = [0, 3], sizes = [8, 1], strides = [1, 1]} : vector<8x8xf32> to vector<8x1xf32>
    %1186 = vector.extract_strided_slice %1167 {offsets = [3, 0], sizes = [1, 256], strides = [1, 1]} : vector<8x256xf32> to vector<1x256xf32>
    %1187 = vector.broadcast %1185 : vector<8x1xf32> to vector<8x256xf32>
    %1188 = vector.broadcast %1186 : vector<1x256xf32> to vector<8x256xf32>
    %1189 = arith.mulf %1187, %1188 : vector<8x256xf32>
    %1190 = arith.addf %1184, %1189 : vector<8x256xf32>
    %1191 = vector.extract_strided_slice %1164 {offsets = [0, 4], sizes = [8, 1], strides = [1, 1]} : vector<8x8xf32> to vector<8x1xf32>
    %1192 = vector.extract_strided_slice %1167 {offsets = [4, 0], sizes = [1, 256], strides = [1, 1]} : vector<8x256xf32> to vector<1x256xf32>
    %1193 = vector.broadcast %1191 : vector<8x1xf32> to vector<8x256xf32>
    %1194 = vector.broadcast %1192 : vector<1x256xf32> to vector<8x256xf32>
    %1195 = arith.mulf %1193, %1194 : vector<8x256xf32>
    %1196 = arith.addf %1190, %1195 : vector<8x256xf32>
    %1197 = vector.extract_strided_slice %1164 {offsets = [0, 5], sizes = [8, 1], strides = [1, 1]} : vector<8x8xf32> to vector<8x1xf32>
    %1198 = vector.extract_strided_slice %1167 {offsets = [5, 0], sizes = [1, 256], strides = [1, 1]} : vector<8x256xf32> to vector<1x256xf32>
    %1199 = vector.broadcast %1197 : vector<8x1xf32> to vector<8x256xf32>
    %1200 = vector.broadcast %1198 : vector<1x256xf32> to vector<8x256xf32>
    %1201 = arith.mulf %1199, %1200 : vector<8x256xf32>
    %1202 = arith.addf %1196, %1201 : vector<8x256xf32>
    %1203 = vector.extract_strided_slice %1164 {offsets = [0, 6], sizes = [8, 1], strides = [1, 1]} : vector<8x8xf32> to vector<8x1xf32>
    %1204 = vector.extract_strided_slice %1167 {offsets = [6, 0], sizes = [1, 256], strides = [1, 1]} : vector<8x256xf32> to vector<1x256xf32>
    %1205 = vector.broadcast %1203 : vector<8x1xf32> to vector<8x256xf32>
    %1206 = vector.broadcast %1204 : vector<1x256xf32> to vector<8x256xf32>
    %1207 = arith.mulf %1205, %1206 : vector<8x256xf32>
    %1208 = arith.addf %1202, %1207 : vector<8x256xf32>
    %1209 = vector.extract_strided_slice %1164 {offsets = [0, 7], sizes = [8, 1], strides = [1, 1]} : vector<8x8xf32> to vector<8x1xf32>
    %1210 = vector.extract_strided_slice %1167 {offsets = [7, 0], sizes = [1, 256], strides = [1, 1]} : vector<8x256xf32> to vector<1x256xf32>
    %1211 = vector.broadcast %1209 : vector<8x1xf32> to vector<8x256xf32>
    %1212 = vector.broadcast %1210 : vector<1x256xf32> to vector<8x256xf32>
    %1213 = arith.mulf %1211, %1212 : vector<8x256xf32>
    %1214 = arith.addf %1208, %1213 : vector<8x256xf32>
    %c0_216 = arith.constant 0 : index
    %c0_217 = arith.constant 0 : index
    %1215 = vector.load %arg12[%c0_216, %c0_217] : memref<8x256xf32, #tpu.memory_space<vmem>>, vector<8x256xf32>
    %1216 = arith.addf %1215, %1214 : vector<8x256xf32>
    %c0_218 = arith.constant 0 : index
    %c0_219 = arith.constant 0 : index
    %1217 = vector.load %arg12[%c0_218, %c0_219] : memref<8x256xf32, #tpu.memory_space<vmem>>, vector<8x256xf32>
    tpu.vector_store %arg12[%c0_218, %c0_219], %1216 {strides = array<i32>} : memref<8x256xf32, #tpu.memory_space<vmem>>, vector<8x256xf32>,
    %c7_220 = arith.constant 7 : index
    %c0_221 = arith.constant 0 : index
    %c0_222 = arith.constant 0 : index
    %1218 = vector.load %arg8[%c7_220, %c0_221, %c0_222] : memref<9x8x8xf32, #tpu.memory_space<vmem>>, vector<1x8x8xf32>
    %1219 = vector.shape_cast %1218 : vector<1x8x8xf32> to vector<8x8xf32>
    %1220 = vector.extract_strided_slice %833 {offsets = [0, 10], sizes = [8, 246], strides = [1, 1]} : vector<8x256xf32> to vector<8x246xf32>
    %1221 = vector.extract_strided_slice %833 {offsets = [0, 0], sizes = [8, 10], strides = [1, 1]} : vector<8x256xf32> to vector<8x10xf32>
    %1222 = tpu.concatenate %1220, %1221 in 1 : vector<8x246xf32>, vector<8x10xf32> -> vector<8x256xf32>
    %1223 = vector.extract_strided_slice %1219 {offsets = [0, 0], sizes = [8, 1], strides = [1, 1]} : vector<8x8xf32> to vector<8x1xf32>
    %1224 = vector.extract_strided_slice %1222 {offsets = [0, 0], sizes = [1, 256], strides = [1, 1]} : vector<8x256xf32> to vector<1x256xf32>
    %1225 = vector.broadcast %1223 : vector<8x1xf32> to vector<8x256xf32>
    %1226 = vector.broadcast %1224 : vector<1x256xf32> to vector<8x256xf32>
    %1227 = arith.mulf %1225, %1226 : vector<8x256xf32>
    %1228 = vector.extract_strided_slice %1219 {offsets = [0, 1], sizes = [8, 1], strides = [1, 1]} : vector<8x8xf32> to vector<8x1xf32>
    %1229 = vector.extract_strided_slice %1222 {offsets = [1, 0], sizes = [1, 256], strides = [1, 1]} : vector<8x256xf32> to vector<1x256xf32>
    %1230 = vector.broadcast %1228 : vector<8x1xf32> to vector<8x256xf32>
    %1231 = vector.broadcast %1229 : vector<1x256xf32> to vector<8x256xf32>
    %1232 = arith.mulf %1230, %1231 : vector<8x256xf32>
    %1233 = arith.addf %1227, %1232 : vector<8x256xf32>
    %1234 = vector.extract_strided_slice %1219 {offsets = [0, 2], sizes = [8, 1], strides = [1, 1]} : vector<8x8xf32> to vector<8x1xf32>
    %1235 = vector.extract_strided_slice %1222 {offsets = [2, 0], sizes = [1, 256], strides = [1, 1]} : vector<8x256xf32> to vector<1x256xf32>
    %1236 = vector.broadcast %1234 : vector<8x1xf32> to vector<8x256xf32>
    %1237 = vector.broadcast %1235 : vector<1x256xf32> to vector<8x256xf32>
    %1238 = arith.mulf %1236, %1237 : vector<8x256xf32>
    %1239 = arith.addf %1233, %1238 : vector<8x256xf32>
    %1240 = vector.extract_strided_slice %1219 {offsets = [0, 3], sizes = [8, 1], strides = [1, 1]} : vector<8x8xf32> to vector<8x1xf32>
    %1241 = vector.extract_strided_slice %1222 {offsets = [3, 0], sizes = [1, 256], strides = [1, 1]} : vector<8x256xf32> to vector<1x256xf32>
    %1242 = vector.broadcast %1240 : vector<8x1xf32> to vector<8x256xf32>
    %1243 = vector.broadcast %1241 : vector<1x256xf32> to vector<8x256xf32>
    %1244 = arith.mulf %1242, %1243 : vector<8x256xf32>
    %1245 = arith.addf %1239, %1244 : vector<8x256xf32>
    %1246 = vector.extract_strided_slice %1219 {offsets = [0, 4], sizes = [8, 1], strides = [1, 1]} : vector<8x8xf32> to vector<8x1xf32>
    %1247 = vector.extract_strided_slice %1222 {offsets = [4, 0], sizes = [1, 256], strides = [1, 1]} : vector<8x256xf32> to vector<1x256xf32>
    %1248 = vector.broadcast %1246 : vector<8x1xf32> to vector<8x256xf32>
    %1249 = vector.broadcast %1247 : vector<1x256xf32> to vector<8x256xf32>
    %1250 = arith.mulf %1248, %1249 : vector<8x256xf32>
    %1251 = arith.addf %1245, %1250 : vector<8x256xf32>
    %1252 = vector.extract_strided_slice %1219 {offsets = [0, 5], sizes = [8, 1], strides = [1, 1]} : vector<8x8xf32> to vector<8x1xf32>
    %1253 = vector.extract_strided_slice %1222 {offsets = [5, 0], sizes = [1, 256], strides = [1, 1]} : vector<8x256xf32> to vector<1x256xf32>
    %1254 = vector.broadcast %1252 : vector<8x1xf32> to vector<8x256xf32>
    %1255 = vector.broadcast %1253 : vector<1x256xf32> to vector<8x256xf32>
    %1256 = arith.mulf %1254, %1255 : vector<8x256xf32>
    %1257 = arith.addf %1251, %1256 : vector<8x256xf32>
    %1258 = vector.extract_strided_slice %1219 {offsets = [0, 6], sizes = [8, 1], strides = [1, 1]} : vector<8x8xf32> to vector<8x1xf32>
    %1259 = vector.extract_strided_slice %1222 {offsets = [6, 0], sizes = [1, 256], strides = [1, 1]} : vector<8x256xf32> to vector<1x256xf32>
    %1260 = vector.broadcast %1258 : vector<8x1xf32> to vector<8x256xf32>
    %1261 = vector.broadcast %1259 : vector<1x256xf32> to vector<8x256xf32>
    %1262 = arith.mulf %1260, %1261 : vector<8x256xf32>
    %1263 = arith.addf %1257, %1262 : vector<8x256xf32>
    %1264 = vector.extract_strided_slice %1219 {offsets = [0, 7], sizes = [8, 1], strides = [1, 1]} : vector<8x8xf32> to vector<8x1xf32>
    %1265 = vector.extract_strided_slice %1222 {offsets = [7, 0], sizes = [1, 256], strides = [1, 1]} : vector<8x256xf32> to vector<1x256xf32>
    %1266 = vector.broadcast %1264 : vector<8x1xf32> to vector<8x256xf32>
    %1267 = vector.broadcast %1265 : vector<1x256xf32> to vector<8x256xf32>
    %1268 = arith.mulf %1266, %1267 : vector<8x256xf32>
    %1269 = arith.addf %1263, %1268 : vector<8x256xf32>
    %c0_223 = arith.constant 0 : index
    %c0_224 = arith.constant 0 : index
    %1270 = vector.load %arg12[%c0_223, %c0_224] : memref<8x256xf32, #tpu.memory_space<vmem>>, vector<8x256xf32>
    %1271 = arith.addf %1270, %1269 : vector<8x256xf32>
    %c0_225 = arith.constant 0 : index
    %c0_226 = arith.constant 0 : index
    %1272 = vector.load %arg12[%c0_225, %c0_226] : memref<8x256xf32, #tpu.memory_space<vmem>>, vector<8x256xf32>
    tpu.vector_store %arg12[%c0_225, %c0_226], %1271 {strides = array<i32>} : memref<8x256xf32, #tpu.memory_space<vmem>>, vector<8x256xf32>,
    %c8_227 = arith.constant 8 : index
    %c0_228 = arith.constant 0 : index
    %c0_229 = arith.constant 0 : index
    %1273 = vector.load %arg8[%c8_227, %c0_228, %c0_229] : memref<9x8x8xf32, #tpu.memory_space<vmem>>, vector<1x8x8xf32>
    %1274 = vector.shape_cast %1273 : vector<1x8x8xf32> to vector<8x8xf32>
    %1275 = vector.extract_strided_slice %833 {offsets = [0, 11], sizes = [8, 245], strides = [1, 1]} : vector<8x256xf32> to vector<8x245xf32>
    %1276 = vector.extract_strided_slice %833 {offsets = [0, 0], sizes = [8, 11], strides = [1, 1]} : vector<8x256xf32> to vector<8x11xf32>
    %1277 = tpu.concatenate %1275, %1276 in 1 : vector<8x245xf32>, vector<8x11xf32> -> vector<8x256xf32>
    %1278 = vector.extract_strided_slice %1274 {offsets = [0, 0], sizes = [8, 1], strides = [1, 1]} : vector<8x8xf32> to vector<8x1xf32>
    %1279 = vector.extract_strided_slice %1277 {offsets = [0, 0], sizes = [1, 256], strides = [1, 1]} : vector<8x256xf32> to vector<1x256xf32>
    %1280 = vector.broadcast %1278 : vector<8x1xf32> to vector<8x256xf32>
    %1281 = vector.broadcast %1279 : vector<1x256xf32> to vector<8x256xf32>
    %1282 = arith.mulf %1280, %1281 : vector<8x256xf32>
    %1283 = vector.extract_strided_slice %1274 {offsets = [0, 1], sizes = [8, 1], strides = [1, 1]} : vector<8x8xf32> to vector<8x1xf32>
    %1284 = vector.extract_strided_slice %1277 {offsets = [1, 0], sizes = [1, 256], strides = [1, 1]} : vector<8x256xf32> to vector<1x256xf32>
    %1285 = vector.broadcast %1283 : vector<8x1xf32> to vector<8x256xf32>
    %1286 = vector.broadcast %1284 : vector<1x256xf32> to vector<8x256xf32>
    %1287 = arith.mulf %1285, %1286 : vector<8x256xf32>
    %1288 = arith.addf %1282, %1287 : vector<8x256xf32>
    %1289 = vector.extract_strided_slice %1274 {offsets = [0, 2], sizes = [8, 1], strides = [1, 1]} : vector<8x8xf32> to vector<8x1xf32>
    %1290 = vector.extract_strided_slice %1277 {offsets = [2, 0], sizes = [1, 256], strides = [1, 1]} : vector<8x256xf32> to vector<1x256xf32>
    %1291 = vector.broadcast %1289 : vector<8x1xf32> to vector<8x256xf32>
    %1292 = vector.broadcast %1290 : vector<1x256xf32> to vector<8x256xf32>
    %1293 = arith.mulf %1291, %1292 : vector<8x256xf32>
    %1294 = arith.addf %1288, %1293 : vector<8x256xf32>
    %1295 = vector.extract_strided_slice %1274 {offsets = [0, 3], sizes = [8, 1], strides = [1, 1]} : vector<8x8xf32> to vector<8x1xf32>
    %1296 = vector.extract_strided_slice %1277 {offsets = [3, 0], sizes = [1, 256], strides = [1, 1]} : vector<8x256xf32> to vector<1x256xf32>
    %1297 = vector.broadcast %1295 : vector<8x1xf32> to vector<8x256xf32>
    %1298 = vector.broadcast %1296 : vector<1x256xf32> to vector<8x256xf32>
    %1299 = arith.mulf %1297, %1298 : vector<8x256xf32>
    %1300 = arith.addf %1294, %1299 : vector<8x256xf32>
    %1301 = vector.extract_strided_slice %1274 {offsets = [0, 4], sizes = [8, 1], strides = [1, 1]} : vector<8x8xf32> to vector<8x1xf32>
    %1302 = vector.extract_strided_slice %1277 {offsets = [4, 0], sizes = [1, 256], strides = [1, 1]} : vector<8x256xf32> to vector<1x256xf32>
    %1303 = vector.broadcast %1301 : vector<8x1xf32> to vector<8x256xf32>
    %1304 = vector.broadcast %1302 : vector<1x256xf32> to vector<8x256xf32>
    %1305 = arith.mulf %1303, %1304 : vector<8x256xf32>
    %1306 = arith.addf %1300, %1305 : vector<8x256xf32>
    %1307 = vector.extract_strided_slice %1274 {offsets = [0, 5], sizes = [8, 1], strides = [1, 1]} : vector<8x8xf32> to vector<8x1xf32>
    %1308 = vector.extract_strided_slice %1277 {offsets = [5, 0], sizes = [1, 256], strides = [1, 1]} : vector<8x256xf32> to vector<1x256xf32>
    %1309 = vector.broadcast %1307 : vector<8x1xf32> to vector<8x256xf32>
    %1310 = vector.broadcast %1308 : vector<1x256xf32> to vector<8x256xf32>
    %1311 = arith.mulf %1309, %1310 : vector<8x256xf32>
    %1312 = arith.addf %1306, %1311 : vector<8x256xf32>
    %1313 = vector.extract_strided_slice %1274 {offsets = [0, 6], sizes = [8, 1], strides = [1, 1]} : vector<8x8xf32> to vector<8x1xf32>
    %1314 = vector.extract_strided_slice %1277 {offsets = [6, 0], sizes = [1, 256], strides = [1, 1]} : vector<8x256xf32> to vector<1x256xf32>
    %1315 = vector.broadcast %1313 : vector<8x1xf32> to vector<8x256xf32>
    %1316 = vector.broadcast %1314 : vector<1x256xf32> to vector<8x256xf32>
    %1317 = arith.mulf %1315, %1316 : vector<8x256xf32>
    %1318 = arith.addf %1312, %1317 : vector<8x256xf32>
    %1319 = vector.extract_strided_slice %1274 {offsets = [0, 7], sizes = [8, 1], strides = [1, 1]} : vector<8x8xf32> to vector<8x1xf32>
    %1320 = vector.extract_strided_slice %1277 {offsets = [7, 0], sizes = [1, 256], strides = [1, 1]} : vector<8x256xf32> to vector<1x256xf32>
    %1321 = vector.broadcast %1319 : vector<8x1xf32> to vector<8x256xf32>
    %1322 = vector.broadcast %1320 : vector<1x256xf32> to vector<8x256xf32>
    %1323 = arith.mulf %1321, %1322 : vector<8x256xf32>
    %1324 = arith.addf %1318, %1323 : vector<8x256xf32>
    %c0_230 = arith.constant 0 : index
    %c0_231 = arith.constant 0 : index
    %1325 = vector.load %arg12[%c0_230, %c0_231] : memref<8x256xf32, #tpu.memory_space<vmem>>, vector<8x256xf32>
    %1326 = arith.addf %1325, %1324 : vector<8x256xf32>
    %c0_232 = arith.constant 0 : index
    %c0_233 = arith.constant 0 : index
    %1327 = vector.load %arg12[%c0_232, %c0_233] : memref<8x256xf32, #tpu.memory_space<vmem>>, vector<8x256xf32>
    tpu.vector_store %arg12[%c0_232, %c0_233], %1326 {strides = array<i32>} : memref<8x256xf32, #tpu.memory_space<vmem>>, vector<8x256xf32>,
    %c0_234 = arith.constant 0 : index
    %c0_235 = arith.constant 0 : index
    %1328 = vector.load %arg12[%c0_234, %c0_235] : memref<8x256xf32, #tpu.memory_space<vmem>>, vector<8x256xf32>
    %1329 = arith.mulf %1328, %0 : vector<8x256xf32>
    %cst_236 = arith.constant dense<0.000000e+00> : vector<8xf32>
    %1330 = vector.multi_reduction <add>, %1329, %cst_236 [1] : vector<8x256xf32> to vector<8xf32>
    %1331 = vector.shape_cast %1330 : vector<8xf32> to vector<8x1xf32>
    %cst_237 = arith.constant 7.812500e-03 : f32
    %1332 = vector.broadcast %cst_237 : f32 to vector<8x1xf32>
    %1333 = arith.mulf %1331, %1332 : vector<8x1xf32>
    %1334 = vector.broadcast %1333 : vector<8x1xf32> to vector<8x256xf32>
    %1335 = arith.subf %1328, %1334 : vector<8x256xf32>
    %1336 = arith.mulf %1335, %0 : vector<8x256xf32>
    %1337 = arith.mulf %1336, %1336 : vector<8x256xf32>
    %cst_238 = arith.constant dense<0.000000e+00> : vector<8xf32>
    %1338 = vector.multi_reduction <add>, %1337, %cst_238 [1] : vector<8x256xf32> to vector<8xf32>
    %1339 = vector.shape_cast %1338 : vector<8xf32> to vector<8x1xf32>
    %cst_239 = arith.constant 7.812500e-03 : f32
    %1340 = vector.broadcast %cst_239 : f32 to vector<8x1xf32>
    %1341 = arith.mulf %1339, %1340 : vector<8x1xf32>
    %c2_240 = arith.constant 2 : index
    %c0_241 = arith.constant 0 : index
    %c0_242 = arith.constant 0 : index
    %1342 = vector.load %arg9[%c2_240, %c0_241, %c0_242] : memref<3x8x1xf32, #tpu.memory_space<vmem>>, vector<1x8x1xf32>
    %1343 = vector.shape_cast %1342 : vector<1x8x1xf32> to vector<8x1xf32>
    %cst_243 = arith.constant 9.99999974E-6 : f32
    %1344 = vector.broadcast %cst_243 : f32 to vector<8x1xf32>
    %1345 = arith.addf %1341, %1344 : vector<8x1xf32>
    %1346 = math.rsqrt %1345 : vector<8x1xf32>
    %1347 = arith.mulf %1343, %1346 : vector<8x1xf32>
    %c2_244 = arith.constant 2 : index
    %c0_245 = arith.constant 0 : index
    %c0_246 = arith.constant 0 : index
    %1348 = vector.load %arg10[%c2_244, %c0_245, %c0_246] : memref<3x8x1xf32, #tpu.memory_space<vmem>>, vector<1x8x1xf32>
    %1349 = vector.shape_cast %1348 : vector<1x8x1xf32> to vector<8x1xf32>
    %1350 = arith.mulf %1333, %1347 : vector<8x1xf32>
    %1351 = arith.subf %1349, %1350 : vector<8x1xf32>
    %1352 = vector.broadcast %1347 : vector<8x1xf32> to vector<8x256xf32>
    %1353 = arith.mulf %1328, %1352 : vector<8x256xf32>
    %1354 = vector.broadcast %1351 : vector<8x1xf32> to vector<8x256xf32>
    %1355 = arith.addf %1353, %1354 : vector<8x256xf32>
    %cst_247 = arith.constant 0.000000e+00 : f32
    %1356 = vector.broadcast %cst_247 : f32 to vector<8x256xf32>
    %1357 = arith.maximumf %1355, %1356 : vector<8x256xf32>
    %1358 = arith.mulf %1357, %0 : vector<8x256xf32>
    %c0_248 = arith.constant 0 : index
    %c0_249 = arith.constant 0 : index
    %1359 = vector.load %arg11[%c0_248, %c0_249] : memref<8x256xf32, #tpu.memory_space<vmem>>, vector<8x256xf32>
    tpu.vector_store %arg11[%c0_248, %c0_249], %1358 {strides = array<i32>} : memref<8x256xf32, #tpu.memory_space<vmem>>, vector<8x256xf32>,
    return
  }
  func.func @transform_0(%arg0: i32) -> (i32, i32) {
    %c0_i32 = arith.constant 0 : i32
    %c0_i32_0 = arith.constant 0 : i32
    %c0_i32_1 = arith.constant 0 : i32
    return %c0_i32, %c0_i32_0 : i32, i32
  }
  func.func @transform_1(%arg0: i32) -> (i32, i32) {
    %c0_i32 = arith.constant 0 : i32
    %c0_i32_0 = arith.constant 0 : i32
    %c0_i32_1 = arith.constant 0 : i32
    return %c0_i32, %c0_i32_0 : i32, i32
  }
  func.func @transform_2(%arg0: i32) -> (i32, i32) {
    %c0_i32 = arith.constant 0 : i32
    %c0_i32_0 = arith.constant 0 : i32
    %c0_i32_1 = arith.constant 0 : i32
    return %c0_i32, %c0_i32_0 : i32, i32
  }
  func.func @transform_3(%arg0: i32) -> (i32, i32) {
    %c0_i32 = arith.constant 0 : i32
    %c0_i32_0 = arith.constant 0 : i32
    %c0_i32_1 = arith.constant 0 : i32
    return %c0_i32, %c0_i32_0 : i32, i32
  }
  func.func @transform_4(%arg0: i32) -> (i32, i32) {
    %c0_i32 = arith.constant 0 : i32
    %c0_i32_0 = arith.constant 0 : i32
    %c0_i32_1 = arith.constant 0 : i32
    return %c0_i32, %c0_i32_0 : i32, i32
  }
  func.func @transform_5(%arg0: i32) -> (i32, i32, i32) {
    %c0_i32 = arith.constant 0 : i32
    %c0_i32_0 = arith.constant 0 : i32
    %c0_i32_1 = arith.constant 0 : i32
    %c0_i32_2 = arith.constant 0 : i32
    return %c0_i32, %c0_i32_0, %c0_i32_1 : i32, i32, i32
  }
  func.func @transform_6(%arg0: i32) -> (i32, i32, i32) {
    %c0_i32 = arith.constant 0 : i32
    %c0_i32_0 = arith.constant 0 : i32
    %c0_i32_1 = arith.constant 0 : i32
    %c0_i32_2 = arith.constant 0 : i32
    return %c0_i32, %c0_i32_0, %c0_i32_1 : i32, i32, i32
  }
  func.func @transform_7(%arg0: i32) -> (i32, i32, i32) {
    %c0_i32 = arith.constant 0 : i32
    %c0_i32_0 = arith.constant 0 : i32
    %c0_i32_1 = arith.constant 0 : i32
    %c0_i32_2 = arith.constant 0 : i32
    return %c0_i32, %c0_i32_0, %c0_i32_1 : i32, i32, i32
  }
  func.func @transform_8(%arg0: i32) -> (i32, i32, i32) {
    %c0_i32 = arith.constant 0 : i32
    %c0_i32_0 = arith.constant 0 : i32
    %c0_i32_1 = arith.constant 0 : i32
    %c0_i32_2 = arith.constant 0 : i32
    return %c0_i32, %c0_i32_0, %c0_i32_1 : i32, i32, i32
  }
  func.func @transform_9(%arg0: i32) -> (i32, i32, i32) {
    %c0_i32 = arith.constant 0 : i32
    %c0_i32_0 = arith.constant 0 : i32
    %c0_i32_1 = arith.constant 0 : i32
    %c0_i32_2 = arith.constant 0 : i32
    return %c0_i32, %c0_i32_0, %c0_i32_1 : i32, i32, i32
  }
  func.func @transform_10(%arg0: i32) -> (i32, i32) {
    %c0_i32 = arith.constant 0 : i32
    %c0_i32_0 = arith.constant 0 : i32
    %c0_i32_1 = arith.constant 0 : i32
    return %c0_i32, %c0_i32_0 : i32, i32
  }
}

</mosaic_0001>

<llo_original>
// kernel: tile.6
$region0: #{tile.6}
  #allocation0 [shape = 's32[1]{0}', space=sflag, size = 0x4, scoped, tag = 'scoped memory for tile.6']
  %s0 = inlined_call_operand.vmem [shape: f32[100], index: 0, kind: input, shape index: {}]
  %s1 = inlined_call_operand.vmem [shape: f32[2,100], index: 1, kind: output, shape index: {}]
  // Predicated region
  $region2: #{tile.6} parent=0 // pred_check
    _
  $region3: #{tile.6} parent=0 // pred_check_branch
    %3 = sbr.rel (0) target = $region5
  $region4: #{tile.6} parent=0 // pred_region
    _
  $region5: #{tile.6} parent=0 // pred_fallthru
    _
  %v4 = vld [vmem:[%s0] ss:$0 sm:$0xff]
  %5 = vst [vmem:[%s1] sm:$0x3] %v4

// kernel: tile.7
$region0: #{tile.7}
  %s0 = inlined_call_operand.vmem [shape: f32[2,100], index: 0, kind: input, shape index: {}]
  %s1 = inlined_call_operand.vmem [shape: f32[200], index: 1, kind: output, shape index: {}]
  $region1: #{tile.7} parent=0
    #allocation0 [shape = 'u8[4096]{0}', space=vmem, size = 0x1000, scoped, tag = 'scoped mem for output reshape']
    #allocation1 [shape = 'u8[4096]{0}', space=vmem, size = 0x1000, scoped, tag = 'scoped mem for input reshape']
    %s3 = ssub.s32 4, 1
    %v4 = vld [vmem:[%s0] sm:%s3]
    %5 = vst [vmem:[#allocation1] sm:%s3] %v4
    %v6 = vld [vmem:[#allocation1] sm:$0x1]
    %vm7 = vcmask 818176
    %8 = vst.msk [vmem:[#allocation0] sm:$0x1] %vm7, %v6
    %s9 = scalar_lea.vmem [#allocation1], 1
    %v10 = vld [vmem:[%s9] sm:$0x1]
    %s11 = scalar_lea.vmem [#allocation1], 1
    %v12 = vld [vmem:[%s11] sm:$0x1]
    %vm13 = vcmask 228352
    %v14 = vsel %vm13, %v12, %v10
    %15 = vrot.lane.b32.xlu0 %v14, 100
    %v16 = vpop.permute.xlu0 %15
    %vm17 = vcmask 588800
    %s18 = scalar_lea.vmem [#allocation0], 1
    %19 = vst.msk [vmem:[%s18] sm:$0x1] %vm17, %v16
    %vm20 = vcmask 1048352
    %21 = vst.msk [vmem:[#allocation0] sm:$0x1] %vm20, %v16
    %s23 = ssub.s32 4, 1
    %v24 = vld [vmem:[#allocation0] sm:%s23]
    %s26 = ssub.s32 4, 1
    %27 = vst [vmem:[%s1] sm:%s26] %v24

// kernel: exact_conv_forward.1
$region0: #{exact_conv_forward.1}
  #allocation0 [shape = 'u32[]', space=smem, size = 0x4, offset = 0x4, fixed_abs, tag = 'smem constant byte address 0x4 - core index']
  #allocation1 [shape = 'u32[72,128]{1,0:T(1,128)}', space=vmem, size = 0x9000, scoped, tag = 'internal scratch']
  #allocation2 [shape = 'f32[8,256]{1,0:T(8,128)}', space=vmem, size = 0x2000, scoped, tag = 'scratch operand']
  #allocation3 [shape = 'f32[8,256]{1,0:T(8,128)}', space=vmem, size = 0x2000, scoped, tag = 'scratch operand']
  #allocation4 [shape = 'f32[8,256]{1,0:T(8,128)}', space=vmem, size = 0x2000, scoped, tag = 'scratch operand']
  %s0 = inlined_call_operand.vmem [shape: f32[4,256], index: 0, kind: input, shape index: {}]
  %s1 = inlined_call_operand.vmem [shape: f32[4,256], index: 1, kind: input, shape index: {}]
  %s2 = inlined_call_operand.vmem [shape: f32[4,256], index: 2, kind: input, shape index: {}]
  %s3 = inlined_call_operand.vmem [shape: f32[4,256], index: 3, kind: input, shape index: {}]
  %s4 = inlined_call_operand.vmem [shape: f32[8,256], index: 4, kind: input, shape index: {}]
  %s5 = inlined_call_operand.vmem [shape: f32[9,8,4], index: 5, kind: input, shape index: {}]
  %s6 = inlined_call_operand.vmem [shape: f32[9,8,8], index: 6, kind: input, shape index: {}]
  %s7 = inlined_call_operand.vmem [shape: f32[9,8,8], index: 7, kind: input, shape index: {}]
  %s8 = inlined_call_operand.vmem [shape: f32[3,8,1], index: 8, kind: input, shape index: {}]
  %s9 = inlined_call_operand.vmem [shape: f32[3,8,1], index: 9, kind: input, shape index: {}]
  %s10 = inlined_call_operand.vmem [shape: f32[8,256], index: 10, kind: output, shape index: {}]
  %s11 = sld [smem:[#allocation0]]
  $region50: #{exact_conv_forward.1} parent=0
    _
  %s13 = ssub.s32 1, %s11
  %s14 = scalar_select 0, %s13, %s11
  // Predicated region
  $region2: #{exact_conv_forward.1} parent=0 // pred_check
    _
  $region3: #{exact_conv_forward.1} parent=0 // pred_check_branch
    %16 = sbr.rel (0) target = $region5
  $region4: #{exact_conv_forward.1} parent=0 // pred_region
    _
  $region5: #{exact_conv_forward.1} parent=0 // pred_fallthru
    _
  // Predicated region
  $region6: #{exact_conv_forward.1} parent=0 // pred_check
    _
  $region7: #{exact_conv_forward.1} parent=0 // pred_check_branch
    %18 = sbr.rel (0) target = $region9
  $region8: #{exact_conv_forward.1} parent=0 // pred_region
    _
  $region9: #{exact_conv_forward.1} parent=0 // pred_fallthru
    _
  // Predicated region
  $region10: #{exact_conv_forward.1} parent=0 // pred_check
    _
  $region11: #{exact_conv_forward.1} parent=0 // pred_check_branch
    %20 = sbr.rel (0) target = $region13
  $region12: #{exact_conv_forward.1} parent=0 // pred_region
    _
  $region13: #{exact_conv_forward.1} parent=0 // pred_fallthru
    _
  // Predicated region
  $region14: #{exact_conv_forward.1} parent=0 // pred_check
    _
  $region15: #{exact_conv_forward.1} parent=0 // pred_check_branch
    %22 = sbr.rel (0) target = $region17
  $region16: #{exact_conv_forward.1} parent=0 // pred_region
    _
  $region17: #{exact_conv_forward.1} parent=0 // pred_fallthru
    _
  // Predicated region
  $region18: #{exact_conv_forward.1} parent=0 // pred_check
    _
  $region19: #{exact_conv_forward.1} parent=0 // pred_check_branch
    %24 = sbr.rel (0) target = $region21
  $region20: #{exact_conv_forward.1} parent=0 // pred_region
    _
  $region21: #{exact_conv_forward.1} parent=0 // pred_fallthru
    _
  // Predicated region
  $region22: #{exact_conv_forward.1} parent=0 // pred_check
    _
  $region23: #{exact_conv_forward.1} parent=0 // pred_check_branch
    %26 = sbr.rel (0) target = $region25
  $region24: #{exact_conv_forward.1} parent=0 // pred_region
    _
  $region25: #{exact_conv_forward.1} parent=0 // pred_fallthru
    _
  // Predicated region
  $region26: #{exact_conv_forward.1} parent=0 // pred_check
    _
  $region27: #{exact_conv_forward.1} parent=0 // pred_check_branch
    %28 = sbr.rel (0) target = $region29
  $region28: #{exact_conv_forward.1} parent=0 // pred_region
    _
  $region29: #{exact_conv_forward.1} parent=0 // pred_fallthru
    _
  // Predicated region
  $region30: #{exact_conv_forward.1} parent=0 // pred_check
    _
  $region31: #{exact_conv_forward.1} parent=0 // pred_check_branch
    %30 = sbr.rel (0) target = $region33
  $region32: #{exact_conv_forward.1} parent=0 // pred_region
    _
  $region33: #{exact_conv_forward.1} parent=0 // pred_fallthru
    _
  // Predicated region
  $region34: #{exact_conv_forward.1} parent=0 // pred_check
    _
  $region35: #{exact_conv_forward.1} parent=0 // pred_check_branch
    %32 = sbr.rel (0) target = $region37
  $region36: #{exact_conv_forward.1} parent=0 // pred_region
    _
  $region37: #{exact_conv_forward.1} parent=0 // pred_fallthru
    _
  // Predicated region
  $region38: #{exact_conv_forward.1} parent=0 // pred_check
    _
  $region39: #{exact_conv_forward.1} parent=0 // pred_check_branch
    %34 = sbr.rel (0) target = $region41
  $region40: #{exact_conv_forward.1} parent=0 // pred_region
    _
  $region41: #{exact_conv_forward.1} parent=0 // pred_fallthru
    _
  %v35 = vld [vmem:[%s4] sm:$0xff]
  %v36 = vld [vmem:[%s4 + $0x8] sm:$0xff]
  %v37 = vld [vmem:[%s0] sm:$0xff]
  %v38 = vld [vmem:[%s1] sm:$0xff]
  %v39 = vld [vmem:[%s2] sm:$0xff]
  %v40 = vld [vmem:[%s3] sm:$0xff]
  %41 = vst [vmem:[#allocation2] sm:$0xff] 0.0
  %42 = vst [vmem:[#allocation2 + $0x8] sm:$0xff] 0.0
  %v43 = vld [vmem:[%s5] sm:$0xff]
  %45 = vset.pattern.permute.xlu0 0
  %46 = vperm.xlu0 %45, %v43
  %v47 = vpop.permute.xlu0 %46
  %v50 = vperm.slane %v37, 0
  %v51 = vperm.slane %v37, 4
  %v54 = vperm.slane %v50, 0
  %v55 = vperm.slane %v51, 0
  %v56 = vmul.f32 %v47, %v54
  %v57 = vmul.f32 %v47, %v55
  %58 = vset.pattern.permute.xlu0 1
  %59 = vperm.xlu0 %58, %v43
  %v60 = vpop.permute.xlu0 %59
  %v62 = vperm.slane %v37, 1
  %v63 = vperm.slane %v37, 5
  %v66 = vperm.slane %v62, 1
  %v67 = vperm.slane %v63, 1
  %v68 = vmul.f32 %v60, %v66
  %v69 = vmul.f32 %v60, %v67
  %v70 = vadd.f32 %v56, %v68
  %v71 = vadd.f32 %v57, %v69
  %72 = vset.pattern.permute.xlu0 2
  %73 = vperm.xlu0 %72, %v43
  %v74 = vpop.permute.xlu0 %73
  %v76 = vperm.slane %v37, 2
  %v77 = vperm.slane %v37, 6
  %v80 = vperm.slane %v76, 2
  %v81 = vperm.slane %v77, 2
  %v82 = vmul.f32 %v74, %v80
  %v83 = vmul.f32 %v74, %v81
  %v84 = vadd.f32 %v70, %v82
  %v85 = vadd.f32 %v71, %v83
  %86 = vset.pattern.permute.xlu0 3
  %87 = vperm.xlu0 %86, %v43
  %v88 = vpop.permute.xlu0 %87
  %v90 = vperm.slane %v37, 3
  %v91 = vperm.slane %v37, 7
  %v94 = vperm.slane %v90, 3
  %v95 = vperm.slane %v91, 3
  %v96 = vmul.f32 %v88, %v94
  %v97 = vmul.f32 %v88, %v95
  %v98 = vadd.f32 %v84, %v96
  %v99 = vadd.f32 %v85, %v97
  %v100 = vld [vmem:[#allocation2] sm:$0xff]
  %v101 = vld [vmem:[#allocation2 + $0x8] sm:$0xff]
  %v102 = vadd.f32 %v100, %v98
  %v103 = vadd.f32 %v101, %v99
  %104 = vst [vmem:[#allocation2] sm:$0xff] %v102
  %105 = vst [vmem:[#allocation2 + $0x8] sm:$0xff] %v103
  %s106 = scalar_lea.vmem %s5, 8
  %v107 = vld [vmem:[%s106] sm:$0xff]
  %109 = vset.pattern.permute.xlu0 0
  %110 = vperm.xlu0 %109, %v107
  %v111 = vpop.permute.xlu0 %110
  %v114 = vperm.slane %v38, 0
  %v115 = vperm.slane %v38, 4
  %v118 = vperm.slane %v114, 0
  %v119 = vperm.slane %v115, 0
  %v120 = vmul.f32 %v111, %v118
  %v121 = vmul.f32 %v111, %v119
  %122 = vset.pattern.permute.xlu0 1
  %123 = vperm.xlu0 %122, %v107
  %v124 = vpop.permute.xlu0 %123
  %v126 = vperm.slane %v38, 1
  %v127 = vperm.slane %v38, 5
  %v130 = vperm.slane %v126, 1
  %v131 = vperm.slane %v127, 1
  %v132 = vmul.f32 %v124, %v130
  %v133 = vmul.f32 %v124, %v131
  %v134 = vadd.f32 %v120, %v132
  %v135 = vadd.f32 %v121, %v133
  %136 = vset.pattern.permute.xlu0 2
  %137 = vperm.xlu0 %136, %v107
  %v138 = vpop.permute.xlu0 %137
  %v140 = vperm.slane %v38, 2
  %v141 = vperm.slane %v38, 6
  %v144 = vperm.slane %v140, 2
  %v145 = vperm.slane %v141, 2
  %v146 = vmul.f32 %v138, %v144
  %v147 = vmul.f32 %v138, %v145
  %v148 = vadd.f32 %v134, %v146
  %v149 = vadd.f32 %v135, %v147
  %150 = vset.pattern.permute.xlu0 3
  %151 = vperm.xlu0 %150, %v107
  %v152 = vpop.permute.xlu0 %151
  %v154 = vperm.slane %v38, 3
  %v155 = vperm.slane %v38, 7
  %v158 = vperm.slane %v154, 3
  %v159 = vperm.slane %v155, 3
  %v160 = vmul.f32 %v152, %v158
  %v161 = vmul.f32 %v152, %v159
  %v162 = vadd.f32 %v148, %v160
  %v163 = vadd.f32 %v149, %v161
  %v164 = vld [vmem:[#allocation2] sm:$0xff]
  %v165 = vld [vmem:[#allocation2 + $0x8] sm:$0xff]
  %v166 = vadd.f32 %v164, %v162
  %v167 = vadd.f32 %v165, %v163
  %168 = vst [vmem:[#allocation2] sm:$0xff] %v166
  %169 = vst [vmem:[#allocation2 + $0x8] sm:$0xff] %v167
  %s170 = scalar_lea.vmem %s5, 16
  %v171 = vld [vmem:[%s170] sm:$0xff]
  %172 = vst [vmem:[#allocation1] ss:$2 sm:$0xff] %v37
  %v173 = vld.sshfl [vmem:[#allocation1] sm:$0xff pattern:$0x75316420]
  %v174 = vld.sshfl [vmem:[#allocation1 + $0x8] sm:$0xff pattern:$0x75316420]
  %175 = vrot.lane.b32.xlu0 %v173, 127
  %v176 = vpop.permute.xlu0 %175
  %177 = vrot.lane.b32.xlu0 %v174, 127
  %v178 = vpop.permute.xlu0 %177
  %vm179 = vcmask 1039360
  %v180 = vsel %vm179, %v176, %v178
  %183 = vst [vmem:[#allocation1] ss:$2 sm:$0xff] %v37
  %v184 = vld.sshfl [vmem:[#allocation1] sm:$0xff pattern:$0x75316420]
  %185 = vrot.lane.b32.xlu0 %v184, 127
  %v186 = vpop.permute.xlu0 %185
  %v188 = vsel %vm179, %v178, %v186
  %190 = vset.pattern.permute.xlu0 0
  %191 = vperm.xlu0 %190, %v171
  %v192 = vpop.permute.xlu0 %191
  %v194 = vperm.slane %v180, 0
  %v195 = vperm.slane %v188, 0
  %v196 = vmul.f32 %v192, %v194
  %v197 = vmul.f32 %v192, %v195
  %198 = vset.pattern.permute.xlu0 1
  %199 = vperm.xlu0 %198, %v171
  %v200 = vpop.permute.xlu0 %199
  %v202 = vperm.slane %v180, 1
  %v203 = vperm.slane %v188, 1
  %v204 = vmul.f32 %v200, %v202
  %v205 = vmul.f32 %v200, %v203
  %v206 = vadd.f32 %v196, %v204
  %v207 = vadd.f32 %v197, %v205
  %208 = vset.pattern.permute.xlu0 2
  %209 = vperm.xlu0 %208, %v171
  %v210 = vpop.permute.xlu0 %209
  %v212 = vperm.slane %v180, 2
  %v213 = vperm.slane %v188, 2
  %v214 = vmul.f32 %v210, %v212
  %v215 = vmul.f32 %v210, %v213
  %v216 = vadd.f32 %v206, %v214
  %v217 = vadd.f32 %v207, %v215
  %218 = vset.pattern.permute.xlu0 3
  %219 = vperm.xlu0 %218, %v171
  %v220 = vpop.permute.xlu0 %219
  %v222 = vperm.slane %v180, 3
  %v223 = vperm.slane %v188, 3
  %v224 = vmul.f32 %v220, %v222
  %v225 = vmul.f32 %v220, %v223
  %v226 = vadd.f32 %v216, %v224
  %v227 = vadd.f32 %v217, %v225
  %v228 = vld [vmem:[#allocation2] sm:$0xff]
  %v229 = vld [vmem:[#allocation2 + $0x8] sm:$0xff]
  %v230 = vadd.f32 %v228, %v226
  %v231 = vadd.f32 %v229, %v227
  %232 = vst [vmem:[#allocation2] sm:$0xff] %v230
  %233 = vst [vmem:[#allocation2 + $0x8] sm:$0xff] %v231
  %s234 = scalar_lea.vmem %s5, 24
  %v235 = vld [vmem:[%s234] sm:$0xff]
  %237 = vset.pattern.permute.xlu0 0
  %238 = vperm.xlu0 %237, %v235
  %v239 = vpop.permute.xlu0 %238
  %v242 = vperm.slane %v39, 0
  %v243 = vperm.slane %v39, 4
  %v246 = vperm.slane %v242, 0
  %v247 = vperm.slane %v243, 0
  %v248 = vmul.f32 %v239, %v246
  %v249 = vmul.f32 %v239, %v247
  %250 = vset.pattern.permute.xlu0 1
  %251 = vperm.xlu0 %250, %v235
  %v252 = vpop.permute.xlu0 %251
  %v254 = vperm.slane %v39, 1
  %v255 = vperm.slane %v39, 5
  %v258 = vperm.slane %v254, 1
  %v259 = vperm.slane %v255, 1
  %v260 = vmul.f32 %v252, %v258
  %v261 = vmul.f32 %v252, %v259
  %v262 = vadd.f32 %v248, %v260
  %v263 = vadd.f32 %v249, %v261
  %264 = vset.pattern.permute.xlu0 2
  %265 = vperm.xlu0 %264, %v235
  %v266 = vpop.permute.xlu0 %265
  %v268 = vperm.slane %v39, 2
  %v269 = vperm.slane %v39, 6
  %v272 = vperm.slane %v268, 2
  %v273 = vperm.slane %v269, 2
  %v274 = vmul.f32 %v266, %v272
  %v275 = vmul.f32 %v266, %v273
  %v276 = vadd.f32 %v262, %v274
  %v277 = vadd.f32 %v263, %v275
  %278 = vset.pattern.permute.xlu0 3
  %279 = vperm.xlu0 %278, %v235
  %v280 = vpop.permute.xlu0 %279
  %v282 = vperm.slane %v39, 3
  %v283 = vperm.slane %v39, 7
  %v286 = vperm.slane %v282, 3
  %v287 = vperm.slane %v283, 3
  %v288 = vmul.f32 %v280, %v286
  %v289 = vmul.f32 %v280, %v287
  %v290 = vadd.f32 %v276, %v288
  %v291 = vadd.f32 %v277, %v289
  %v292 = vld [vmem:[#allocation2] sm:$0xff]
  %v293 = vld [vmem:[#allocation2 + $0x8] sm:$0xff]
  %v294 = vadd.f32 %v292, %v290
  %v295 = vadd.f32 %v293, %v291
  %296 = vst [vmem:[#allocation2] sm:$0xff] %v294
  %297 = vst [vmem:[#allocation2 + $0x8] sm:$0xff] %v295
  %s298 = scalar_lea.vmem %s5, 32
  %v299 = vld [vmem:[%s298] sm:$0xff]
  %301 = vset.pattern.permute.xlu0 0
  %302 = vperm.xlu0 %301, %v299
  %v303 = vpop.permute.xlu0 %302
  %v306 = vperm.slane %v40, 0
  %v307 = vperm.slane %v40, 4
  %v310 = vperm.slane %v306, 0
  %v311 = vperm.slane %v307, 0
  %v312 = vmul.f32 %v303, %v310
  %v313 = vmul.f32 %v303, %v311
  %314 = vset.pattern.permute.xlu0 1
  %315 = vperm.xlu0 %314, %v299
  %v316 = vpop.permute.xlu0 %315
  %v318 = vperm.slane %v40, 1
  %v319 = vperm.slane %v40, 5
  %v322 = vperm.slane %v318, 1
  %v323 = vperm.slane %v319, 1
  %v324 = vmul.f32 %v316, %v322
  %v325 = vmul.f32 %v316, %v323
  %v326 = vadd.f32 %v312, %v324
  %v327 = vadd.f32 %v313, %v325
  %328 = vset.pattern.permute.xlu0 2
  %329 = vperm.xlu0 %328, %v299
  %v330 = vpop.permute.xlu0 %329
  %v332 = vperm.slane %v40, 2
  %v333 = vperm.slane %v40, 6
  %v336 = vperm.slane %v332, 2
  %v337 = vperm.slane %v333, 2
  %v338 = vmul.f32 %v330, %v336
  %v339 = vmul.f32 %v330, %v337
  %v340 = vadd.f32 %v326, %v338
  %v341 = vadd.f32 %v327, %v339
  %342 = vset.pattern.permute.xlu0 3
  %343 = vperm.xlu0 %342, %v299
  %v344 = vpop.permute.xlu0 %343
  %v346 = vperm.slane %v40, 3
  %v347 = vperm.slane %v40, 7
  %v350 = vperm.slane %v346, 3
  %v351 = vperm.slane %v347, 3
  %v352 = vmul.f32 %v344, %v350
  %v353 = vmul.f32 %v344, %v351
  %v354 = vadd.f32 %v340, %v352
  %v355 = vadd.f32 %v341, %v353
  %v356 = vld [vmem:[#allocation2] sm:$0xff]
  %v357 = vld [vmem:[#allocation2 + $0x8] sm:$0xff]
  %v358 = vadd.f32 %v356, %v354
  %v359 = vadd.f32 %v357, %v355
  %360 = vst [vmem:[#allocation2] sm:$0xff] %v358
  %361 = vst [vmem:[#allocation2 + $0x8] sm:$0xff] %v359
  %s362 = scalar_lea.vmem %s5, 40
  %v363 = vld [vmem:[%s362] sm:$0xff]
  %364 = vst [vmem:[#allocation1] ss:$2 sm:$0xff] %v39
  %v365 = vld.sshfl [vmem:[#allocation1] sm:$0xff pattern:$0x75316420]
  %v366 = vld.sshfl [vmem:[#allocation1 + $0x8] sm:$0xff pattern:$0x75316420]
  %367 = vrot.lane.b32.xlu0 %v365, 127
  %v368 = vpop.permute.xlu0 %367
  %369 = vrot.lane.b32.xlu0 %v366, 127
  %v370 = vpop.permute.xlu0 %369
  %v371 = vsel %vm179, %v368, %v370
  %374 = vst [vmem:[#allocation1] ss:$2 sm:$0xff] %v39
  %v375 = vld.sshfl [vmem:[#allocation1] sm:$0xff pattern:$0x75316420]
  %376 = vrot.lane.b32.xlu0 %v375, 127
  %v377 = vpop.permute.xlu0 %376
  %v379 = vsel %vm179, %v370, %v377
  %381 = vset.pattern.permute.xlu0 0
  %382 = vperm.xlu0 %381, %v363
  %v383 = vpop.permute.xlu0 %382
  %v385 = vperm.slane %v371, 0
  %v386 = vperm.slane %v379, 0
  %v387 = vmul.f32 %v383, %v385
  %v388 = vmul.f32 %v383, %v386
  %389 = vset.pattern.permute.xlu0 1
  %390 = vperm.xlu0 %389, %v363
  %v391 = vpop.permute.xlu0 %390
  %v393 = vperm.slane %v371, 1
  %v394 = vperm.slane %v379, 1
  %v395 = vmul.f32 %v391, %v393
  %v396 = vmul.f32 %v391, %v394
  %v397 = vadd.f32 %v387, %v395
  %v398 = vadd.f32 %v388, %v396
  %399 = vset.pattern.permute.xlu0 2
  %400 = vperm.xlu0 %399, %v363
  %v401 = vpop.permute.xlu0 %400
  %v403 = vperm.slane %v371, 2
  %v404 = vperm.slane %v379, 2
  %v405 = vmul.f32 %v401, %v403
  %v406 = vmul.f32 %v401, %v404
  %v407 = vadd.f32 %v397, %v405
  %v408 = vadd.f32 %v398, %v406
  %409 = vset.pattern.permute.xlu0 3
  %410 = vperm.xlu0 %409, %v363
  %v411 = vpop.permute.xlu0 %410
  %v413 = vperm.slane %v371, 3
  %v414 = vperm.slane %v379, 3
  %v415 = vmul.f32 %v411, %v413
  %v416 = vmul.f32 %v411, %v414
  %v417 = vadd.f32 %v407, %v415
  %v418 = vadd.f32 %v408, %v416
  %v419 = vld [vmem:[#allocation2] sm:$0xff]
  %v420 = vld [vmem:[#allocation2 + $0x8] sm:$0xff]
  %v421 = vadd.f32 %v419, %v417
  %v422 = vadd.f32 %v420, %v418
  %423 = vst [vmem:[#allocation2] sm:$0xff] %v421
  %424 = vst [vmem:[#allocation2 + $0x8] sm:$0xff] %v422
  %s425 = scalar_lea.vmem %s5, 48
  %v426 = vld [vmem:[%s425] sm:$0xff]
  %427 = vst [vmem:[#allocation1] ss:$2 sm:$0xff] %v37
  %v428 = vld.sshfl [vmem:[#allocation1] sm:$0xff pattern:$0x75316420]
  %v429 = vld.sshfl [vmem:[#allocation1 + $0x8] sm:$0xff pattern:$0x75316420]
  %430 = vrot.lane.b32.xlu0 %v428, 118
  %v431 = vpop.permute.xlu0 %430
  %432 = vrot.lane.b32.xlu0 %v429, 118
  %v433 = vpop.permute.xlu0 %432
  %vm434 = vcmask 965632
  %v435 = vsel %vm434, %v431, %v433
  %438 = vst [vmem:[#allocation1] ss:$2 sm:$0xff] %v37
  %v439 = vld.sshfl [vmem:[#allocation1] sm:$0xff pattern:$0x75316420]
  %440 = vrot.lane.b32.xlu0 %v439, 118
  %v441 = vpop.permute.xlu0 %440
  %v443 = vsel %vm434, %v433, %v441
  %445 = vset.pattern.permute.xlu0 0
  %446 = vperm.xlu0 %445, %v426
  %v447 = vpop.permute.xlu0 %446
  %v449 = vperm.slane %v435, 0
  %v450 = vperm.slane %v443, 0
  %v451 = vmul.f32 %v447, %v449
  %v452 = vmul.f32 %v447, %v450
  %453 = vset.pattern.permute.xlu0 1
  %454 = vperm.xlu0 %453, %v426
  %v455 = vpop.permute.xlu0 %454
  %v457 = vperm.slane %v435, 1
  %v458 = vperm.slane %v443, 1
  %v459 = vmul.f32 %v455, %v457
  %v460 = vmul.f32 %v455, %v458
  %v461 = vadd.f32 %v451, %v459
  %v462 = vadd.f32 %v452, %v460
  %463 = vset.pattern.permute.xlu0 2
  %464 = vperm.xlu0 %463, %v426
  %v465 = vpop.permute.xlu0 %464
  %v467 = vperm.slane %v435, 2
  %v468 = vperm.slane %v443, 2
  %v469 = vmul.f32 %v465, %v467
  %v470 = vmul.f32 %v465, %v468
  %v471 = vadd.f32 %v461, %v469
  %v472 = vadd.f32 %v462, %v470
  %473 = vset.pattern.permute.xlu0 3
  %474 = vperm.xlu0 %473, %v426
  %v475 = vpop.permute.xlu0 %474
  %v477 = vperm.slane %v435, 3
  %v478 = vperm.slane %v443, 3
  %v479 = vmul.f32 %v475, %v477
  %v480 = vmul.f32 %v475, %v478
  %v481 = vadd.f32 %v471, %v479
  %v482 = vadd.f32 %v472, %v480
  %v483 = vld [vmem:[#allocation2] sm:$0xff]
  %v484 = vld [vmem:[#allocation2 + $0x8] sm:$0xff]
  %v485 = vadd.f32 %v483, %v481
  %v486 = vadd.f32 %v484, %v482
  %487 = vst [vmem:[#allocation2] sm:$0xff] %v485
  %488 = vst [vmem:[#allocation2 + $0x8] sm:$0xff] %v486
  %s489 = scalar_lea.vmem %s5, 56
  %v490 = vld [vmem:[%s489] sm:$0xff]
  %491 = vst [vmem:[#allocation1] ss:$2 sm:$0xff] %v38
  %v492 = vld.sshfl [vmem:[#allocation1] sm:$0xff pattern:$0x75316420]
  %v493 = vld.sshfl [vmem:[#allocation1 + $0x8] sm:$0xff pattern:$0x75316420]
  %494 = vrot.lane.b32.xlu0 %v492, 118
  %v495 = vpop.permute.xlu0 %494
  %496 = vrot.lane.b32.xlu0 %v493, 118
  %v497 = vpop.permute.xlu0 %496
  %v498 = vsel %vm434, %v495, %v497
  %501 = vst [vmem:[#allocation1] ss:$2 sm:$0xff] %v38
  %v502 = vld.sshfl [vmem:[#allocation1] sm:$0xff pattern:$0x75316420]
  %503 = vrot.lane.b32.xlu0 %v502, 118
  %v504 = vpop.permute.xlu0 %503
  %v506 = vsel %vm434, %v497, %v504
  %508 = vset.pattern.permute.xlu0 0
  %509 = vperm.xlu0 %508, %v490
  %v510 = vpop.permute.xlu0 %509
  %v512 = vperm.slane %v498, 0
  %v513 = vperm.slane %v506, 0
  %v514 = vmul.f32 %v510, %v512
  %v515 = vmul.f32 %v510, %v513
  %516 = vset.pattern.permute.xlu0 1
  %517 = vperm.xlu0 %516, %v490
  %v518 = vpop.permute.xlu0 %517
  %v520 = vperm.slane %v498, 1
  %v521 = vperm.slane %v506, 1
  %v522 = vmul.f32 %v518, %v520
  %v523 = vmul.f32 %v518, %v521
  %v524 = vadd.f32 %v514, %v522
  %v525 = vadd.f32 %v515, %v523
  %526 = vset.pattern.permute.xlu0 2
  %527 = vperm.xlu0 %526, %v490
  %v528 = vpop.permute.xlu0 %527
  %v530 = vperm.slane %v498, 2
  %v531 = vperm.slane %v506, 2
  %v532 = vmul.f32 %v528, %v530
  %v533 = vmul.f32 %v528, %v531
  %v534 = vadd.f32 %v524, %v532
  %v535 = vadd.f32 %v525, %v533
  %536 = vset.pattern.permute.xlu0 3
  %537 = vperm.xlu0 %536, %v490
  %v538 = vpop.permute.xlu0 %537
  %v540 = vperm.slane %v498, 3
  %v541 = vperm.slane %v506, 3
  %v542 = vmul.f32 %v538, %v540
  %v543 = vmul.f32 %v538, %v541
  %v544 = vadd.f32 %v534, %v542
  %v545 = vadd.f32 %v535, %v543
  %v546 = vld [vmem:[#allocation2] sm:$0xff]
  %v547 = vld [vmem:[#allocation2 + $0x8] sm:$0xff]
  %v548 = vadd.f32 %v546, %v544
  %v549 = vadd.f32 %v547, %v545
  %550 = vst [vmem:[#allocation2] sm:$0xff] %v548
  %551 = vst [vmem:[#allocation2 + $0x8] sm:$0xff] %v549
  %s552 = scalar_lea.vmem %s5, 64
  %v553 = vld [vmem:[%s552] sm:$0xff]
  %554 = vst [vmem:[#allocation1] ss:$2 sm:$0xff] %v37
  %v555 = vld.sshfl [vmem:[#allocation1] sm:$0xff pattern:$0x75316420]
  %v556 = vld.sshfl [vmem:[#allocation1 + $0x8] sm:$0xff pattern:$0x75316420]
  %557 = vrot.lane.b32.xlu0 %v555, 117
  %v558 = vpop.permute.xlu0 %557
  %559 = vrot.lane.b32.xlu0 %v556, 117
  %v560 = vpop.permute.xlu0 %559
  %vm561 = vcmask 957440
  %v562 = vsel %vm561, %v558, %v560
  %565 = vst [vmem:[#allocation1] ss:$2 sm:$0xff] %v37
  %v566 = vld.sshfl [vmem:[#allocation1] sm:$0xff pattern:$0x75316420]
  %567 = vrot.lane.b32.xlu0 %v566, 117
  %v568 = vpop.permute.xlu0 %567
  %v570 = vsel %vm561, %v560, %v568
  %572 = vset.pattern.permute.xlu0 0
  %573 = vperm.xlu0 %572, %v553
  %v574 = vpop.permute.xlu0 %573
  %v576 = vperm.slane %v562, 0
  %v577 = vperm.slane %v570, 0
  %v578 = vmul.f32 %v574, %v576
  %v579 = vmul.f32 %v574, %v577
  %580 = vset.pattern.permute.xlu0 1
  %581 = vperm.xlu0 %580, %v553
  %v582 = vpop.permute.xlu0 %581
  %v584 = vperm.slane %v562, 1
  %v585 = vperm.slane %v570, 1
  %v586 = vmul.f32 %v582, %v584
  %v587 = vmul.f32 %v582, %v585
  %v588 = vadd.f32 %v578, %v586
  %v589 = vadd.f32 %v579, %v587
  %590 = vset.pattern.permute.xlu0 2
  %591 = vperm.xlu0 %590, %v553
  %v592 = vpop.permute.xlu0 %591
  %v594 = vperm.slane %v562, 2
  %v595 = vperm.slane %v570, 2
  %v596 = vmul.f32 %v592, %v594
  %v597 = vmul.f32 %v592, %v595
  %v598 = vadd.f32 %v588, %v596
  %v599 = vadd.f32 %v589, %v597
  %600 = vset.pattern.permute.xlu0 3
  %601 = vperm.xlu0 %600, %v553
  %v602 = vpop.permute.xlu0 %601
  %v604 = vperm.slane %v562, 3
  %v605 = vperm.slane %v570, 3
  %v606 = vmul.f32 %v602, %v604
  %v607 = vmul.f32 %v602, %v605
  %v608 = vadd.f32 %v598, %v606
  %v609 = vadd.f32 %v599, %v607
  %v610 = vld [vmem:[#allocation2] sm:$0xff]
  %v611 = vld [vmem:[#allocation2 + $0x8] sm:$0xff]
  %v612 = vadd.f32 %v610, %v608
  %v613 = vadd.f32 %v611, %v609
  %614 = vst [vmem:[#allocation2] sm:$0xff] %v612
  %615 = vst [vmem:[#allocation2 + $0x8] sm:$0xff] %v613
  %v616 = vld [vmem:[#allocation2] sm:$0xff]
  %v617 = vld [vmem:[#allocation2 + $0x8] sm:$0xff]
  %v618 = vmul.f32 %v616, %v35
  %v619 = vmul.f32 %v617, %v36
  %v620 = vadd.f32 %v618, %v619
  %621 = vadd.xlane.f32.xlu0 %v620
  %v622 = vpop.xlane.xlu0 %621
  %v623 = vmul.f32 %v622, 0.0078125
  %v624 = vsub.f32 %v616, %v623
  %v625 = vsub.f32 %v617, %v623
  %v626 = vmul.f32 %v624, %v35
  %v627 = vmul.f32 %v625, %v36
  %v628 = vmul.f32 %v626, %v626
  %v629 = vmul.f32 %v627, %v627
  %v630 = vadd.f32 %v628, %v629
  %631 = vadd.xlane.f32.xlu0 %v630
  %v632 = vpop.xlane.xlu0 %631
  %v633 = vmul.f32 %v632, 0.0078125
  %v634 = vld [vmem:[%s8] sm:$0xff]
  %v635 = vadd.f32 %v633, 1e-05
  %v636 = vrsqrt.pop %v635
  %v637 = vmul.f32 %v636, %v635
  %v638 = vmul.f32 %v637, %v636
  %v639 = vmul.f32 0.5, %v638
  %v640 = vsub.f32 1.5, %v639
  %v641 = vmul.f32 %v636, %v640
  %vm642 = vweird.f32 %v635
  %vm643 = vweird.f32 %v636
  %vm644 = vmor %vm642, %vm643
  %v645 = vsel %vm644, %v636, %v641
  %v646 = vmul.f32 %v634, %v645
  %v647 = vld [vmem:[%s9] sm:$0xff]
  %v648 = vmul.f32 %v623, %v646
  %v649 = vsub.f32 %v647, %v648
  %651 = vset.pattern.permute.xlu0 0
  %652 = vperm.xlu0 %651, %v646
  %v653 = vpop.permute.xlu0 %652
  %v655 = vmul.f32 %v616, %v653
  %v656 = vmul.f32 %v617, %v653
  %658 = vset.pattern.permute.xlu0 0
  %659 = vperm.xlu0 %658, %v649
  %v660 = vpop.permute.xlu0 %659
  %v662 = vadd.f32 %v655, %v660
  %v663 = vadd.f32 %v656, %v660
  %v664 = vmax.f32 %v662, 0.0
  %v665 = vmax.f32 %v663, 0.0
  %v666 = vmul.f32 %v664, %v35
  %v667 = vmul.f32 %v665, %v36
  %668 = vst [vmem:[#allocation3] sm:$0xff] %v666
  %669 = vst [vmem:[#allocation3 + $0x8] sm:$0xff] %v667
  %v670 = vld [vmem:[#allocation3] sm:$0xff]
  %v671 = vld [vmem:[#allocation3 + $0x8] sm:$0xff]
  %672 = vst [vmem:[#allocation2] sm:$0xff] 0.0
  %673 = vst [vmem:[#allocation2 + $0x8] sm:$0xff] 0.0
  %v674 = vld [vmem:[%s6] sm:$0xff]
  %676 = vrot.lane.b32.xlu0 %v671, 11
  %v677 = vpop.permute.xlu0 %676
  %680 = vrot.lane.b32.xlu0 %v670, 11
  %v681 = vpop.permute.xlu0 %680
  %vm682 = vcmask 89088
  %v683 = vsel %vm682, %v681, %v677
  %v686 = vsel %vm682, %v677, %v681
  %688 = vset.pattern.permute.xlu0 0
  %689 = vperm.xlu0 %688, %v674
  %v690 = vpop.permute.xlu0 %689
  %v692 = vperm.slane %v686, 0
  %v693 = vperm.slane %v683, 0
  %v694 = vmul.f32 %v690, %v692
  %v695 = vmul.f32 %v690, %v693
  %696 = vset.pattern.permute.xlu0 1
  %697 = vperm.xlu0 %696, %v674
  %v698 = vpop.permute.xlu0 %697
  %v700 = vperm.slane %v686, 1
  %v701 = vperm.slane %v683, 1
  %v702 = vmul.f32 %v698, %v700
  %v703 = vmul.f32 %v698, %v701
  %v704 = vadd.f32 %v694, %v702
  %v705 = vadd.f32 %v695, %v703
  %706 = vset.pattern.permute.xlu0 2
  %707 = vperm.xlu0 %706, %v674
  %v708 = vpop.permute.xlu0 %707
  %v710 = vperm.slane %v686, 2
  %v711 = vperm.slane %v683, 2
  %v712 = vmul.f32 %v708, %v710
  %v713 = vmul.f32 %v708, %v711
  %v714 = vadd.f32 %v704, %v712
  %v715 = vadd.f32 %v705, %v713
  %716 = vset.pattern.permute.xlu0 3
  %717 = vperm.xlu0 %716, %v674
  %v718 = vpop.permute.xlu0 %717
  %v720 = vperm.slane %v686, 3
  %v721 = vperm.slane %v683, 3
  %v722 = vmul.f32 %v718, %v720
  %v723 = vmul.f32 %v718, %v721
  %v724 = vadd.f32 %v714, %v722
  %v725 = vadd.f32 %v715, %v723
  %726 = vset.pattern.permute.xlu0 4
  %727 = vperm.xlu0 %726, %v674
  %v728 = vpop.permute.xlu0 %727
  %v730 = vperm.slane %v686, 4
  %v731 = vperm.slane %v683, 4
  %v732 = vmul.f32 %v728, %v730
  %v733 = vmul.f32 %v728, %v731
  %v734 = vadd.f32 %v724, %v732
  %v735 = vadd.f32 %v725, %v733
  %736 = vset.pattern.permute.xlu0 5
  %737 = vperm.xlu0 %736, %v674
  %v738 = vpop.permute.xlu0 %737
  %v740 = vperm.slane %v686, 5
  %v741 = vperm.slane %v683, 5
  %v742 = vmul.f32 %v738, %v740
  %v743 = vmul.f32 %v738, %v741
  %v744 = vadd.f32 %v734, %v742
  %v745 = vadd.f32 %v735, %v743
  %746 = vset.pattern.permute.xlu0 6
  %747 = vperm.xlu0 %746, %v674
  %v748 = vpop.permute.xlu0 %747
  %v750 = vperm.slane %v686, 6
  %v751 = vperm.slane %v683, 6
  %v752 = vmul.f32 %v748, %v750
  %v753 = vmul.f32 %v748, %v751
  %v754 = vadd.f32 %v744, %v752
  %v755 = vadd.f32 %v745, %v753
  %756 = vset.pattern.permute.xlu0 7
  %757 = vperm.xlu0 %756, %v674
  %v758 = vpop.permute.xlu0 %757
  %v760 = vperm.slane %v686, 7
  %v761 = vperm.slane %v683, 7
  %v762 = vmul.f32 %v758, %v760
  %v763 = vmul.f32 %v758, %v761
  %v764 = vadd.f32 %v754, %v762
  %v765 = vadd.f32 %v755, %v763
  %v766 = vld [vmem:[#allocation2] sm:$0xff]
  %v767 = vld [vmem:[#allocation2 + $0x8] sm:$0xff]
  %v768 = vadd.f32 %v766, %v764
  %v769 = vadd.f32 %v767, %v765
  %770 = vst [vmem:[#allocation2] sm:$0xff] %v768
  %771 = vst [vmem:[#allocation2 + $0x8] sm:$0xff] %v769
  %s772 = scalar_lea.vmem %s6, 8
  %v773 = vld [vmem:[%s772] sm:$0xff]
  %774 = vrot.lane.b32.xlu0 %v671, 10
  %v775 = vpop.permute.xlu0 %774
  %777 = vrot.lane.b32.xlu0 %v670, 10
  %v778 = vpop.permute.xlu0 %777
  %vm779 = vcmask 80896
  %v780 = vsel %vm779, %v778, %v775
  %v783 = vsel %vm779, %v775, %v778
  %785 = vset.pattern.permute.xlu0 0
  %786 = vperm.xlu0 %785, %v773
  %v787 = vpop.permute.xlu0 %786
  %v789 = vperm.slane %v783, 0
  %v790 = vperm.slane %v780, 0
  %v791 = vmul.f32 %v787, %v789
  %v792 = vmul.f32 %v787, %v790
  %793 = vset.pattern.permute.xlu0 1
  %794 = vperm.xlu0 %793, %v773
  %v795 = vpop.permute.xlu0 %794
  %v797 = vperm.slane %v783, 1
  %v798 = vperm.slane %v780, 1
  %v799 = vmul.f32 %v795, %v797
  %v800 = vmul.f32 %v795, %v798
  %v801 = vadd.f32 %v791, %v799
  %v802 = vadd.f32 %v792, %v800
  %803 = vset.pattern.permute.xlu0 2
  %804 = vperm.xlu0 %803, %v773
  %v805 = vpop.permute.xlu0 %804
  %v807 = vperm.slane %v783, 2
  %v808 = vperm.slane %v780, 2
  %v809 = vmul.f32 %v805, %v807
  %v810 = vmul.f32 %v805, %v808
  %v811 = vadd.f32 %v801, %v809
  %v812 = vadd.f32 %v802, %v810
  %813 = vset.pattern.permute.xlu0 3
  %814 = vperm.xlu0 %813, %v773
  %v815 = vpop.permute.xlu0 %814
  %v817 = vperm.slane %v783, 3
  %v818 = vperm.slane %v780, 3
  %v819 = vmul.f32 %v815, %v817
  %v820 = vmul.f32 %v815, %v818
  %v821 = vadd.f32 %v811, %v819
  %v822 = vadd.f32 %v812, %v820
  %823 = vset.pattern.permute.xlu0 4
  %824 = vperm.xlu0 %823, %v773
  %v825 = vpop.permute.xlu0 %824
  %v827 = vperm.slane %v783, 4
  %v828 = vperm.slane %v780, 4
  %v829 = vmul.f32 %v825, %v827
  %v830 = vmul.f32 %v825, %v828
  %v831 = vadd.f32 %v821, %v829
  %v832 = vadd.f32 %v822, %v830
  %833 = vset.pattern.permute.xlu0 5
  %834 = vperm.xlu0 %833, %v773
  %v835 = vpop.permute.xlu0 %834
  %v837 = vperm.slane %v783, 5
  %v838 = vperm.slane %v780, 5
  %v839 = vmul.f32 %v835, %v837
  %v840 = vmul.f32 %v835, %v838
  %v841 = vadd.f32 %v831, %v839
  %v842 = vadd.f32 %v832, %v840
  %843 = vset.pattern.permute.xlu0 6
  %844 = vperm.xlu0 %843, %v773
  %v845 = vpop.permute.xlu0 %844
  %v847 = vperm.slane %v783, 6
  %v848 = vperm.slane %v780, 6
  %v849 = vmul.f32 %v845, %v847
  %v850 = vmul.f32 %v845, %v848
  %v851 = vadd.f32 %v841, %v849
  %v852 = vadd.f32 %v842, %v850
  %853 = vset.pattern.permute.xlu0 7
  %854 = vperm.xlu0 %853, %v773
  %v855 = vpop.permute.xlu0 %854
  %v857 = vperm.slane %v783, 7
  %v858 = vperm.slane %v780, 7
  %v859 = vmul.f32 %v855, %v857
  %v860 = vmul.f32 %v855, %v858
  %v861 = vadd.f32 %v851, %v859
  %v862 = vadd.f32 %v852, %v860
  %v863 = vld [vmem:[#allocation2] sm:$0xff]
  %v864 = vld [vmem:[#allocation2 + $0x8] sm:$0xff]
  %v865 = vadd.f32 %v863, %v861
  %v866 = vadd.f32 %v864, %v862
  %867 = vst [vmem:[#allocation2] sm:$0xff] %v865
  %868 = vst [vmem:[#allocation2 + $0x8] sm:$0xff] %v866
  %s869 = scalar_lea.vmem %s6, 16
  %v870 = vld [vmem:[%s869] sm:$0xff]
  %871 = vrot.lane.b32.xlu0 %v671, 9
  %v872 = vpop.permute.xlu0 %871
  %874 = vrot.lane.b32.xlu0 %v670, 9
  %v875 = vpop.permute.xlu0 %874
  %vm876 = vcmask 72704
  %v877 = vsel %vm876, %v875, %v872
  %v880 = vsel %vm876, %v872, %v875
  %882 = vset.pattern.permute.xlu0 0
  %883 = vperm.xlu0 %882, %v870
  %v884 = vpop.permute.xlu0 %883
  %v886 = vperm.slane %v880, 0
  %v887 = vperm.slane %v877, 0
  %v888 = vmul.f32 %v884, %v886
  %v889 = vmul.f32 %v884, %v887
  %890 = vset.pattern.permute.xlu0 1
  %891 = vperm.xlu0 %890, %v870
  %v892 = vpop.permute.xlu0 %891
  %v894 = vperm.slane %v880, 1
  %v895 = vperm.slane %v877, 1
  %v896 = vmul.f32 %v892, %v894
  %v897 = vmul.f32 %v892, %v895
  %v898 = vadd.f32 %v888, %v896
  %v899 = vadd.f32 %v889, %v897
  %900 = vset.pattern.permute.xlu0 2
  %901 = vperm.xlu0 %900, %v870
  %v902 = vpop.permute.xlu0 %901
  %v904 = vperm.slane %v880, 2
  %v905 = vperm.slane %v877, 2
  %v906 = vmul.f32 %v902, %v904
  %v907 = vmul.f32 %v902, %v905
  %v908 = vadd.f32 %v898, %v906
  %v909 = vadd.f32 %v899, %v907
  %910 = vset.pattern.permute.xlu0 3
  %911 = vperm.xlu0 %910, %v870
  %v912 = vpop.permute.xlu0 %911
  %v914 = vperm.slane %v880, 3
  %v915 = vperm.slane %v877, 3
  %v916 = vmul.f32 %v912, %v914
  %v917 = vmul.f32 %v912, %v915
  %v918 = vadd.f32 %v908, %v916
  %v919 = vadd.f32 %v909, %v917
  %920 = vset.pattern.permute.xlu0 4
  %921 = vperm.xlu0 %920, %v870
  %v922 = vpop.permute.xlu0 %921
  %v924 = vperm.slane %v880, 4
  %v925 = vperm.slane %v877, 4
  %v926 = vmul.f32 %v922, %v924
  %v927 = vmul.f32 %v922, %v925
  %v928 = vadd.f32 %v918, %v926
  %v929 = vadd.f32 %v919, %v927
  %930 = vset.pattern.permute.xlu0 5
  %931 = vperm.xlu0 %930, %v870
  %v932 = vpop.permute.xlu0 %931
  %v934 = vperm.slane %v880, 5
  %v935 = vperm.slane %v877, 5
  %v936 = vmul.f32 %v932, %v934
  %v937 = vmul.f32 %v932, %v935
  %v938 = vadd.f32 %v928, %v936
  %v939 = vadd.f32 %v929, %v937
  %940 = vset.pattern.permute.xlu0 6
  %941 = vperm.xlu0 %940, %v870
  %v942 = vpop.permute.xlu0 %941
  %v944 = vperm.slane %v880, 6
  %v945 = vperm.slane %v877, 6
  %v946 = vmul.f32 %v942, %v944
  %v947 = vmul.f32 %v942, %v945
  %v948 = vadd.f32 %v938, %v946
  %v949 = vadd.f32 %v939, %v947
  %950 = vset.pattern.permute.xlu0 7
  %951 = vperm.xlu0 %950, %v870
  %v952 = vpop.permute.xlu0 %951
  %v954 = vperm.slane %v880, 7
  %v955 = vperm.slane %v877, 7
  %v956 = vmul.f32 %v952, %v954
  %v957 = vmul.f32 %v952, %v955
  %v958 = vadd.f32 %v948, %v956
  %v959 = vadd.f32 %v949, %v957
  %v960 = vld [vmem:[#allocation2] sm:$0xff]
  %v961 = vld [vmem:[#allocation2 + $0x8] sm:$0xff]
  %v962 = vadd.f32 %v960, %v958
  %v963 = vadd.f32 %v961, %v959
  %964 = vst [vmem:[#allocation2] sm:$0xff] %v962
  %965 = vst [vmem:[#allocation2 + $0x8] sm:$0xff] %v963
  %s966 = scalar_lea.vmem %s6, 24
  %v967 = vld [vmem:[%s966] sm:$0xff]
  %968 = vrot.lane.b32.xlu0 %v671, 1
  %v969 = vpop.permute.xlu0 %968
  %971 = vrot.lane.b32.xlu0 %v670, 1
  %v972 = vpop.permute.xlu0 %971
  %vm973 = vcmask 7168
  %v974 = vsel %vm973, %v972, %v969
  %v977 = vsel %vm973, %v969, %v972
  %979 = vset.pattern.permute.xlu0 0
  %980 = vperm.xlu0 %979, %v967
  %v981 = vpop.permute.xlu0 %980
  %v983 = vperm.slane %v977, 0
  %v984 = vperm.slane %v974, 0
  %v985 = vmul.f32 %v981, %v983
  %v986 = vmul.f32 %v981, %v984
  %987 = vset.pattern.permute.xlu0 1
  %988 = vperm.xlu0 %987, %v967
  %v989 = vpop.permute.xlu0 %988
  %v991 = vperm.slane %v977, 1
  %v992 = vperm.slane %v974, 1
  %v993 = vmul.f32 %v989, %v991
  %v994 = vmul.f32 %v989, %v992
  %v995 = vadd.f32 %v985, %v993
  %v996 = vadd.f32 %v986, %v994
  %997 = vset.pattern.permute.xlu0 2
  %998 = vperm.xlu0 %997, %v967
  %v999 = vpop.permute.xlu0 %998
  %v1001 = vperm.slane %v977, 2
  %v1002 = vperm.slane %v974, 2
  %v1003 = vmul.f32 %v999, %v1001
  %v1004 = vmul.f32 %v999, %v1002
  %v1005 = vadd.f32 %v995, %v1003
  %v1006 = vadd.f32 %v996, %v1004
  %1007 = vset.pattern.permute.xlu0 3
  %1008 = vperm.xlu0 %1007, %v967
  %v1009 = vpop.permute.xlu0 %1008
  %v1011 = vperm.slane %v977, 3
  %v1012 = vperm.slane %v974, 3
  %v1013 = vmul.f32 %v1009, %v1011
  %v1014 = vmul.f32 %v1009, %v1012
  %v1015 = vadd.f32 %v1005, %v1013
  %v1016 = vadd.f32 %v1006, %v1014
  %1017 = vset.pattern.permute.xlu0 4
  %1018 = vperm.xlu0 %1017, %v967
  %v1019 = vpop.permute.xlu0 %1018
  %v1021 = vperm.slane %v977, 4
  %v1022 = vperm.slane %v974, 4
  %v1023 = vmul.f32 %v1019, %v1021
  %v1024 = vmul.f32 %v1019, %v1022
  %v1025 = vadd.f32 %v1015, %v1023
  %v1026 = vadd.f32 %v1016, %v1024
  %1027 = vset.pattern.permute.xlu0 5
  %1028 = vperm.xlu0 %1027, %v967
  %v1029 = vpop.permute.xlu0 %1028
  %v1031 = vperm.slane %v977, 5
  %v1032 = vperm.slane %v974, 5
  %v1033 = vmul.f32 %v1029, %v1031
  %v1034 = vmul.f32 %v1029, %v1032
  %v1035 = vadd.f32 %v1025, %v1033
  %v1036 = vadd.f32 %v1026, %v1034
  %1037 = vset.pattern.permute.xlu0 6
  %1038 = vperm.xlu0 %1037, %v967
  %v1039 = vpop.permute.xlu0 %1038
  %v1041 = vperm.slane %v977, 6
  %v1042 = vperm.slane %v974, 6
  %v1043 = vmul.f32 %v1039, %v1041
  %v1044 = vmul.f32 %v1039, %v1042
  %v1045 = vadd.f32 %v1035, %v1043
  %v1046 = vadd.f32 %v1036, %v1044
  %1047 = vset.pattern.permute.xlu0 7
  %1048 = vperm.xlu0 %1047, %v967
  %v1049 = vpop.permute.xlu0 %1048
  %v1051 = vperm.slane %v977, 7
  %v1052 = vperm.slane %v974, 7
  %v1053 = vmul.f32 %v1049, %v1051
  %v1054 = vmul.f32 %v1049, %v1052
  %v1055 = vadd.f32 %v1045, %v1053
  %v1056 = vadd.f32 %v1046, %v1054
  %v1057 = vld [vmem:[#allocation2] sm:$0xff]
  %v1058 = vld [vmem:[#allocation2 + $0x8] sm:$0xff]
  %v1059 = vadd.f32 %v1057, %v1055
  %v1060 = vadd.f32 %v1058, %v1056
  %1061 = vst [vmem:[#allocation2] sm:$0xff] %v1059
  %1062 = vst [vmem:[#allocation2 + $0x8] sm:$0xff] %v1060
  %s1063 = scalar_lea.vmem %s6, 32
  %v1064 = vld [vmem:[%s1063] sm:$0xff]
  %1066 = vset.pattern.permute.xlu0 0
  %1067 = vperm.xlu0 %1066, %v1064
  %v1068 = vpop.permute.xlu0 %1067
  %v1070 = vperm.slane %v670, 0
  %v1071 = vperm.slane %v671, 0
  %v1072 = vmul.f32 %v1068, %v1070
  %v1073 = vmul.f32 %v1068, %v1071
  %1074 = vset.pattern.permute.xlu0 1
  %1075 = vperm.xlu0 %1074, %v1064
  %v1076 = vpop.permute.xlu0 %1075
  %v1078 = vperm.slane %v670, 1
  %v1079 = vperm.slane %v671, 1
  %v1080 = vmul.f32 %v1076, %v1078
  %v1081 = vmul.f32 %v1076, %v1079
  %v1082 = vadd.f32 %v1072, %v1080
  %v1083 = vadd.f32 %v1073, %v1081
  %1084 = vset.pattern.permute.xlu0 2
  %1085 = vperm.xlu0 %1084, %v1064
  %v1086 = vpop.permute.xlu0 %1085
  %v1088 = vperm.slane %v670, 2
  %v1089 = vperm.slane %v671, 2
  %v1090 = vmul.f32 %v1086, %v1088
  %v1091 = vmul.f32 %v1086, %v1089
  %v1092 = vadd.f32 %v1082, %v1090
  %v1093 = vadd.f32 %v1083, %v1091
  %1094 = vset.pattern.permute.xlu0 3
  %1095 = vperm.xlu0 %1094, %v1064
  %v1096 = vpop.permute.xlu0 %1095
  %v1098 = vperm.slane %v670, 3
  %v1099 = vperm.slane %v671, 3
  %v1100 = vmul.f32 %v1096, %v1098
  %v1101 = vmul.f32 %v1096, %v1099
  %v1102 = vadd.f32 %v1092, %v1100
  %v1103 = vadd.f32 %v1093, %v1101
  %1104 = vset.pattern.permute.xlu0 4
  %1105 = vperm.xlu0 %1104, %v1064
  %v1106 = vpop.permute.xlu0 %1105
  %v1108 = vperm.slane %v670, 4
  %v1109 = vperm.slane %v671, 4
  %v1110 = vmul.f32 %v1106, %v1108
  %v1111 = vmul.f32 %v1106, %v1109
  %v1112 = vadd.f32 %v1102, %v1110
  %v1113 = vadd.f32 %v1103, %v1111
  %1114 = vset.pattern.permute.xlu0 5
  %1115 = vperm.xlu0 %1114, %v1064
  %v1116 = vpop.permute.xlu0 %1115
  %v1118 = vperm.slane %v670, 5
  %v1119 = vperm.slane %v671, 5
  %v1120 = vmul.f32 %v1116, %v1118
  %v1121 = vmul.f32 %v1116, %v1119
  %v1122 = vadd.f32 %v1112, %v1120
  %v1123 = vadd.f32 %v1113, %v1121
  %1124 = vset.pattern.permute.xlu0 6
  %1125 = vperm.xlu0 %1124, %v1064
  %v1126 = vpop.permute.xlu0 %1125
  %v1128 = vperm.slane %v670, 6
  %v1129 = vperm.slane %v671, 6
  %v1130 = vmul.f32 %v1126, %v1128
  %v1131 = vmul.f32 %v1126, %v1129
  %v1132 = vadd.f32 %v1122, %v1130
  %v1133 = vadd.f32 %v1123, %v1131
  %1134 = vset.pattern.permute.xlu0 7
  %1135 = vperm.xlu0 %1134, %v1064
  %v1136 = vpop.permute.xlu0 %1135
  %v1138 = vperm.slane %v670, 7
  %v1139 = vperm.slane %v671, 7
  %v1140 = vmul.f32 %v1136, %v1138
  %v1141 = vmul.f32 %v1136, %v1139
  %v1142 = vadd.f32 %v1132, %v1140
  %v1143 = vadd.f32 %v1133, %v1141
  %v1144 = vld [vmem:[#allocation2] sm:$0xff]
  %v1145 = vld [vmem:[#allocation2 + $0x8] sm:$0xff]
  %v1146 = vadd.f32 %v1144, %v1142
  %v1147 = vadd.f32 %v1145, %v1143
  %1148 = vst [vmem:[#allocation2] sm:$0xff] %v1146
  %1149 = vst [vmem:[#allocation2 + $0x8] sm:$0xff] %v1147
  %s1150 = scalar_lea.vmem %s6, 40
  %v1151 = vld [vmem:[%s1150] sm:$0xff]
  %1152 = vrot.lane.b32.xlu0 %v670, 127
  %v1153 = vpop.permute.xlu0 %1152
  %1154 = vrot.lane.b32.xlu0 %v671, 127
  %v1155 = vpop.permute.xlu0 %1154
  %v1156 = vsel %vm179, %v1153, %v1155
  %v1160 = vsel %vm179, %v1155, %v1153
  %1162 = vset.pattern.permute.xlu0 0
  %1163 = vperm.xlu0 %1162, %v1151
  %v1164 = vpop.permute.xlu0 %1163
  %v1166 = vperm.slane %v1156, 0
  %v1167 = vperm.slane %v1160, 0
  %v1168 = vmul.f32 %v1164, %v1166
  %v1169 = vmul.f32 %v1164, %v1167
  %1170 = vset.pattern.permute.xlu0 1
  %1171 = vperm.xlu0 %1170, %v1151
  %v1172 = vpop.permute.xlu0 %1171
  %v1174 = vperm.slane %v1156, 1
  %v1175 = vperm.slane %v1160, 1
  %v1176 = vmul.f32 %v1172, %v1174
  %v1177 = vmul.f32 %v1172, %v1175
  %v1178 = vadd.f32 %v1168, %v1176
  %v1179 = vadd.f32 %v1169, %v1177
  %1180 = vset.pattern.permute.xlu0 2
  %1181 = vperm.xlu0 %1180, %v1151
  %v1182 = vpop.permute.xlu0 %1181
  %v1184 = vperm.slane %v1156, 2
  %v1185 = vperm.slane %v1160, 2
  %v1186 = vmul.f32 %v1182, %v1184
  %v1187 = vmul.f32 %v1182, %v1185
  %v1188 = vadd.f32 %v1178, %v1186
  %v1189 = vadd.f32 %v1179, %v1187
  %1190 = vset.pattern.permute.xlu0 3
  %1191 = vperm.xlu0 %1190, %v1151
  %v1192 = vpop.permute.xlu0 %1191
  %v1194 = vperm.slane %v1156, 3
  %v1195 = vperm.slane %v1160, 3
  %v1196 = vmul.f32 %v1192, %v1194
  %v1197 = vmul.f32 %v1192, %v1195
  %v1198 = vadd.f32 %v1188, %v1196
  %v1199 = vadd.f32 %v1189, %v1197
  %1200 = vset.pattern.permute.xlu0 4
  %1201 = vperm.xlu0 %1200, %v1151
  %v1202 = vpop.permute.xlu0 %1201
  %v1204 = vperm.slane %v1156, 4
  %v1205 = vperm.slane %v1160, 4
  %v1206 = vmul.f32 %v1202, %v1204
  %v1207 = vmul.f32 %v1202, %v1205
  %v1208 = vadd.f32 %v1198, %v1206
  %v1209 = vadd.f32 %v1199, %v1207
  %1210 = vset.pattern.permute.xlu0 5
  %1211 = vperm.xlu0 %1210, %v1151
  %v1212 = vpop.permute.xlu0 %1211
  %v1214 = vperm.slane %v1156, 5
  %v1215 = vperm.slane %v1160, 5
  %v1216 = vmul.f32 %v1212, %v1214
  %v1217 = vmul.f32 %v1212, %v1215
  %v1218 = vadd.f32 %v1208, %v1216
  %v1219 = vadd.f32 %v1209, %v1217
  %1220 = vset.pattern.permute.xlu0 6
  %1221 = vperm.xlu0 %1220, %v1151
  %v1222 = vpop.permute.xlu0 %1221
  %v1224 = vperm.slane %v1156, 6
  %v1225 = vperm.slane %v1160, 6
  %v1226 = vmul.f32 %v1222, %v1224
  %v1227 = vmul.f32 %v1222, %v1225
  %v1228 = vadd.f32 %v1218, %v1226
  %v1229 = vadd.f32 %v1219, %v1227
  %1230 = vset.pattern.permute.xlu0 7
  %1231 = vperm.xlu0 %1230, %v1151
  %v1232 = vpop.permute.xlu0 %1231
  %v1234 = vperm.slane %v1156, 7
  %v1235 = vperm.slane %v1160, 7
  %v1236 = vmul.f32 %v1232, %v1234
  %v1237 = vmul.f32 %v1232, %v1235
  %v1238 = vadd.f32 %v1228, %v1236
  %v1239 = vadd.f32 %v1229, %v1237
  %v1240 = vld [vmem:[#allocation2] sm:$0xff]
  %v1241 = vld [vmem:[#allocation2 + $0x8] sm:$0xff]
  %v1242 = vadd.f32 %v1240, %v1238
  %v1243 = vadd.f32 %v1241, %v1239
  %1244 = vst [vmem:[#allocation2] sm:$0xff] %v1242
  %1245 = vst [vmem:[#allocation2 + $0x8] sm:$0xff] %v1243
  %s1246 = scalar_lea.vmem %s6, 48
  %v1247 = vld [vmem:[%s1246] sm:$0xff]
  %1248 = vrot.lane.b32.xlu0 %v670, 119
  %v1249 = vpop.permute.xlu0 %1248
  %1250 = vrot.lane.b32.xlu0 %v671, 119
  %v1251 = vpop.permute.xlu0 %1250
  %vm1252 = vcmask 973824
  %v1253 = vsel %vm1252, %v1249, %v1251
  %v1257 = vsel %vm1252, %v1251, %v1249
  %1259 = vset.pattern.permute.xlu0 0
  %1260 = vperm.xlu0 %1259, %v1247
  %v1261 = vpop.permute.xlu0 %1260
  %v1263 = vperm.slane %v1253, 0
  %v1264 = vperm.slane %v1257, 0
  %v1265 = vmul.f32 %v1261, %v1263
  %v1266 = vmul.f32 %v1261, %v1264
  %1267 = vset.pattern.permute.xlu0 1
  %1268 = vperm.xlu0 %1267, %v1247
  %v1269 = vpop.permute.xlu0 %1268
  %v1271 = vperm.slane %v1253, 1
  %v1272 = vperm.slane %v1257, 1
  %v1273 = vmul.f32 %v1269, %v1271
  %v1274 = vmul.f32 %v1269, %v1272
  %v1275 = vadd.f32 %v1265, %v1273
  %v1276 = vadd.f32 %v1266, %v1274
  %1277 = vset.pattern.permute.xlu0 2
  %1278 = vperm.xlu0 %1277, %v1247
  %v1279 = vpop.permute.xlu0 %1278
  %v1281 = vperm.slane %v1253, 2
  %v1282 = vperm.slane %v1257, 2
  %v1283 = vmul.f32 %v1279, %v1281
  %v1284 = vmul.f32 %v1279, %v1282
  %v1285 = vadd.f32 %v1275, %v1283
  %v1286 = vadd.f32 %v1276, %v1284
  %1287 = vset.pattern.permute.xlu0 3
  %1288 = vperm.xlu0 %1287, %v1247
  %v1289 = vpop.permute.xlu0 %1288
  %v1291 = vperm.slane %v1253, 3
  %v1292 = vperm.slane %v1257, 3
  %v1293 = vmul.f32 %v1289, %v1291
  %v1294 = vmul.f32 %v1289, %v1292
  %v1295 = vadd.f32 %v1285, %v1293
  %v1296 = vadd.f32 %v1286, %v1294
  %1297 = vset.pattern.permute.xlu0 4
  %1298 = vperm.xlu0 %1297, %v1247
  %v1299 = vpop.permute.xlu0 %1298
  %v1301 = vperm.slane %v1253, 4
  %v1302 = vperm.slane %v1257, 4
  %v1303 = vmul.f32 %v1299, %v1301
  %v1304 = vmul.f32 %v1299, %v1302
  %v1305 = vadd.f32 %v1295, %v1303
  %v1306 = vadd.f32 %v1296, %v1304
  %1307 = vset.pattern.permute.xlu0 5
  %1308 = vperm.xlu0 %1307, %v1247
  %v1309 = vpop.permute.xlu0 %1308
  %v1311 = vperm.slane %v1253, 5
  %v1312 = vperm.slane %v1257, 5
  %v1313 = vmul.f32 %v1309, %v1311
  %v1314 = vmul.f32 %v1309, %v1312
  %v1315 = vadd.f32 %v1305, %v1313
  %v1316 = vadd.f32 %v1306, %v1314
  %1317 = vset.pattern.permute.xlu0 6
  %1318 = vperm.xlu0 %1317, %v1247
  %v1319 = vpop.permute.xlu0 %1318
  %v1321 = vperm.slane %v1253, 6
  %v1322 = vperm.slane %v1257, 6
  %v1323 = vmul.f32 %v1319, %v1321
  %v1324 = vmul.f32 %v1319, %v1322
  %v1325 = vadd.f32 %v1315, %v1323
  %v1326 = vadd.f32 %v1316, %v1324
  %1327 = vset.pattern.permute.xlu0 7
  %1328 = vperm.xlu0 %1327, %v1247
  %v1329 = vpop.permute.xlu0 %1328
  %v1331 = vperm.slane %v1253, 7
  %v1332 = vperm.slane %v1257, 7
  %v1333 = vmul.f32 %v1329, %v1331
  %v1334 = vmul.f32 %v1329, %v1332
  %v1335 = vadd.f32 %v1325, %v1333
  %v1336 = vadd.f32 %v1326, %v1334
  %v1337 = vld [vmem:[#allocation2] sm:$0xff]
  %v1338 = vld [vmem:[#allocation2 + $0x8] sm:$0xff]
  %v1339 = vadd.f32 %v1337, %v1335
  %v1340 = vadd.f32 %v1338, %v1336
  %1341 = vst [vmem:[#allocation2] sm:$0xff] %v1339
  %1342 = vst [vmem:[#allocation2 + $0x8] sm:$0xff] %v1340
  %s1343 = scalar_lea.vmem %s6, 56
  %v1344 = vld [vmem:[%s1343] sm:$0xff]
  %1345 = vrot.lane.b32.xlu0 %v670, 118
  %v1346 = vpop.permute.xlu0 %1345
  %1347 = vrot.lane.b32.xlu0 %v671, 118
  %v1348 = vpop.permute.xlu0 %1347
  %v1349 = vsel %vm434, %v1346, %v1348
  %v1353 = vsel %vm434, %v1348, %v1346
  %1355 = vset.pattern.permute.xlu0 0
  %1356 = vperm.xlu0 %1355, %v1344
  %v1357 = vpop.permute.xlu0 %1356
  %v1359 = vperm.slane %v1349, 0
  %v1360 = vperm.slane %v1353, 0
  %v1361 = vmul.f32 %v1357, %v1359
  %v1362 = vmul.f32 %v1357, %v1360
  %1363 = vset.pattern.permute.xlu0 1
  %1364 = vperm.xlu0 %1363, %v1344
  %v1365 = vpop.permute.xlu0 %1364
  %v1367 = vperm.slane %v1349, 1
  %v1368 = vperm.slane %v1353, 1
  %v1369 = vmul.f32 %v1365, %v1367
  %v1370 = vmul.f32 %v1365, %v1368
  %v1371 = vadd.f32 %v1361, %v1369
  %v1372 = vadd.f32 %v1362, %v1370
  %1373 = vset.pattern.permute.xlu0 2
  %1374 = vperm.xlu0 %1373, %v1344
  %v1375 = vpop.permute.xlu0 %1374
  %v1377 = vperm.slane %v1349, 2
  %v1378 = vperm.slane %v1353, 2
  %v1379 = vmul.f32 %v1375, %v1377
  %v1380 = vmul.f32 %v1375, %v1378
  %v1381 = vadd.f32 %v1371, %v1379
  %v1382 = vadd.f32 %v1372, %v1380
  %1383 = vset.pattern.permute.xlu0 3
  %1384 = vperm.xlu0 %1383, %v1344
  %v1385 = vpop.permute.xlu0 %1384
  %v1387 = vperm.slane %v1349, 3
  %v1388 = vperm.slane %v1353, 3
  %v1389 = vmul.f32 %v1385, %v1387
  %v1390 = vmul.f32 %v1385, %v1388
  %v1391 = vadd.f32 %v1381, %v1389
  %v1392 = vadd.f32 %v1382, %v1390
  %1393 = vset.pattern.permute.xlu0 4
  %1394 = vperm.xlu0 %1393, %v1344
  %v1395 = vpop.permute.xlu0 %1394
  %v1397 = vperm.slane %v1349, 4
  %v1398 = vperm.slane %v1353, 4
  %v1399 = vmul.f32 %v1395, %v1397
  %v1400 = vmul.f32 %v1395, %v1398
  %v1401 = vadd.f32 %v1391, %v1399
  %v1402 = vadd.f32 %v1392, %v1400
  %1403 = vset.pattern.permute.xlu0 5
  %1404 = vperm.xlu0 %1403, %v1344
  %v1405 = vpop.permute.xlu0 %1404
  %v1407 = vperm.slane %v1349, 5
  %v1408 = vperm.slane %v1353, 5
  %v1409 = vmul.f32 %v1405, %v1407
  %v1410 = vmul.f32 %v1405, %v1408
  %v1411 = vadd.f32 %v1401, %v1409
  %v1412 = vadd.f32 %v1402, %v1410
  %1413 = vset.pattern.permute.xlu0 6
  %1414 = vperm.xlu0 %1413, %v1344
  %v1415 = vpop.permute.xlu0 %1414
  %v1417 = vperm.slane %v1349, 6
  %v1418 = vperm.slane %v1353, 6
  %v1419 = vmul.f32 %v1415, %v1417
  %v1420 = vmul.f32 %v1415, %v1418
  %v1421 = vadd.f32 %v1411, %v1419
  %v1422 = vadd.f32 %v1412, %v1420
  %1423 = vset.pattern.permute.xlu0 7
  %1424 = vperm.xlu0 %1423, %v1344
  %v1425 = vpop.permute.xlu0 %1424
  %v1427 = vperm.slane %v1349, 7
  %v1428 = vperm.slane %v1353, 7
  %v1429 = vmul.f32 %v1425, %v1427
  %v1430 = vmul.f32 %v1425, %v1428
  %v1431 = vadd.f32 %v1421, %v1429
  %v1432 = vadd.f32 %v1422, %v1430
  %v1433 = vld [vmem:[#allocation2] sm:$0xff]
  %v1434 = vld [vmem:[#allocation2 + $0x8] sm:$0xff]
  %v1435 = vadd.f32 %v1433, %v1431
  %v1436 = vadd.f32 %v1434, %v1432
  %1437 = vst [vmem:[#allocation2] sm:$0xff] %v1435
  %1438 = vst [vmem:[#allocation2 + $0x8] sm:$0xff] %v1436
  %s1439 = scalar_lea.vmem %s6, 64
  %v1440 = vld [vmem:[%s1439] sm:$0xff]
  %1441 = vrot.lane.b32.xlu0 %v670, 117
  %v1442 = vpop.permute.xlu0 %1441
  %1443 = vrot.lane.b32.xlu0 %v671, 117
  %v1444 = vpop.permute.xlu0 %1443
  %v1445 = vsel %vm561, %v1442, %v1444
  %v1449 = vsel %vm561, %v1444, %v1442
  %1451 = vset.pattern.permute.xlu0 0
  %1452 = vperm.xlu0 %1451, %v1440
  %v1453 = vpop.permute.xlu0 %1452
  %v1455 = vperm.slane %v1445, 0
  %v1456 = vperm.slane %v1449, 0
  %v1457 = vmul.f32 %v1453, %v1455
  %v1458 = vmul.f32 %v1453, %v1456
  %1459 = vset.pattern.permute.xlu0 1
  %1460 = vperm.xlu0 %1459, %v1440
  %v1461 = vpop.permute.xlu0 %1460
  %v1463 = vperm.slane %v1445, 1
  %v1464 = vperm.slane %v1449, 1
  %v1465 = vmul.f32 %v1461, %v1463
  %v1466 = vmul.f32 %v1461, %v1464
  %v1467 = vadd.f32 %v1457, %v1465
  %v1468 = vadd.f32 %v1458, %v1466
  %1469 = vset.pattern.permute.xlu0 2
  %1470 = vperm.xlu0 %1469, %v1440
  %v1471 = vpop.permute.xlu0 %1470
  %v1473 = vperm.slane %v1445, 2
  %v1474 = vperm.slane %v1449, 2
  %v1475 = vmul.f32 %v1471, %v1473
  %v1476 = vmul.f32 %v1471, %v1474
  %v1477 = vadd.f32 %v1467, %v1475
  %v1478 = vadd.f32 %v1468, %v1476
  %1479 = vset.pattern.permute.xlu0 3
  %1480 = vperm.xlu0 %1479, %v1440
  %v1481 = vpop.permute.xlu0 %1480
  %v1483 = vperm.slane %v1445, 3
  %v1484 = vperm.slane %v1449, 3
  %v1485 = vmul.f32 %v1481, %v1483
  %v1486 = vmul.f32 %v1481, %v1484
  %v1487 = vadd.f32 %v1477, %v1485
  %v1488 = vadd.f32 %v1478, %v1486
  %1489 = vset.pattern.permute.xlu0 4
  %1490 = vperm.xlu0 %1489, %v1440
  %v1491 = vpop.permute.xlu0 %1490
  %v1493 = vperm.slane %v1445, 4
  %v1494 = vperm.slane %v1449, 4
  %v1495 = vmul.f32 %v1491, %v1493
  %v1496 = vmul.f32 %v1491, %v1494
  %v1497 = vadd.f32 %v1487, %v1495
  %v1498 = vadd.f32 %v1488, %v1496
  %1499 = vset.pattern.permute.xlu0 5
  %1500 = vperm.xlu0 %1499, %v1440
  %v1501 = vpop.permute.xlu0 %1500
  %v1503 = vperm.slane %v1445, 5
  %v1504 = vperm.slane %v1449, 5
  %v1505 = vmul.f32 %v1501, %v1503
  %v1506 = vmul.f32 %v1501, %v1504
  %v1507 = vadd.f32 %v1497, %v1505
  %v1508 = vadd.f32 %v1498, %v1506
  %1509 = vset.pattern.permute.xlu0 6
  %1510 = vperm.xlu0 %1509, %v1440
  %v1511 = vpop.permute.xlu0 %1510
  %v1513 = vperm.slane %v1445, 6
  %v1514 = vperm.slane %v1449, 6
  %v1515 = vmul.f32 %v1511, %v1513
  %v1516 = vmul.f32 %v1511, %v1514
  %v1517 = vadd.f32 %v1507, %v1515
  %v1518 = vadd.f32 %v1508, %v1516
  %1519 = vset.pattern.permute.xlu0 7
  %1520 = vperm.xlu0 %1519, %v1440
  %v1521 = vpop.permute.xlu0 %1520
  %v1523 = vperm.slane %v1445, 7
  %v1524 = vperm.slane %v1449, 7
  %v1525 = vmul.f32 %v1521, %v1523
  %v1526 = vmul.f32 %v1521, %v1524
  %v1527 = vadd.f32 %v1517, %v1525
  %v1528 = vadd.f32 %v1518, %v1526
  %v1529 = vld [vmem:[#allocation2] sm:$0xff]
  %v1530 = vld [vmem:[#allocation2 + $0x8] sm:$0xff]
  %v1531 = vadd.f32 %v1529, %v1527
  %v1532 = vadd.f32 %v1530, %v1528
  %1533 = vst [vmem:[#allocation2] sm:$0xff] %v1531
  %1534 = vst [vmem:[#allocation2 + $0x8] sm:$0xff] %v1532
  %v1535 = vld [vmem:[#allocation2] sm:$0xff]
  %v1536 = vld [vmem:[#allocation2 + $0x8] sm:$0xff]
  %v1537 = vmul.f32 %v1535, %v35
  %v1538 = vmul.f32 %v1536, %v36
  %v1539 = vadd.f32 %v1537, %v1538
  %1540 = vadd.xlane.f32.xlu0 %v1539
  %v1541 = vpop.xlane.xlu0 %1540
  %v1542 = vmul.f32 %v1541, 0.0078125
  %v1543 = vsub.f32 %v1535, %v1542
  %v1544 = vsub.f32 %v1536, %v1542
  %v1545 = vmul.f32 %v1543, %v35
  %v1546 = vmul.f32 %v1544, %v36
  %v1547 = vmul.f32 %v1545, %v1545
  %v1548 = vmul.f32 %v1546, %v1546
  %v1549 = vadd.f32 %v1547, %v1548
  %1550 = vadd.xlane.f32.xlu0 %v1549
  %v1551 = vpop.xlane.xlu0 %1550
  %v1552 = vmul.f32 %v1551, 0.0078125
  %s1553 = scalar_lea.vmem %s8, 8
  %v1554 = vld [vmem:[%s1553] sm:$0xff]
  %v1555 = vadd.f32 %v1552, 1e-05
  %v1556 = vrsqrt.pop %v1555
  %v1557 = vmul.f32 %v1556, %v1555
  %v1558 = vmul.f32 %v1557, %v1556
  %v1559 = vmul.f32 0.5, %v1558
  %v1560 = vsub.f32 1.5, %v1559
  %v1561 = vmul.f32 %v1556, %v1560
  %vm1562 = vweird.f32 %v1555
  %vm1563 = vweird.f32 %v1556
  %vm1564 = vmor %vm1562, %vm1563
  %v1565 = vsel %vm1564, %v1556, %v1561
  %v1566 = vmul.f32 %v1554, %v1565
  %s1567 = scalar_lea.vmem %s9, 8
  %v1568 = vld [vmem:[%s1567] sm:$0xff]
  %v1569 = vmul.f32 %v1542, %v1566
  %v1570 = vsub.f32 %v1568, %v1569
  %1572 = vset.pattern.permute.xlu0 0
  %1573 = vperm.xlu0 %1572, %v1566
  %v1574 = vpop.permute.xlu0 %1573
  %v1576 = vmul.f32 %v1535, %v1574
  %v1577 = vmul.f32 %v1536, %v1574
  %1579 = vset.pattern.permute.xlu0 0
  %1580 = vperm.xlu0 %1579, %v1570
  %v1581 = vpop.permute.xlu0 %1580
  %v1583 = vadd.f32 %v1576, %v1581
  %v1584 = vadd.f32 %v1577, %v1581
  %v1585 = vmax.f32 %v1583, 0.0
  %v1586 = vmax.f32 %v1584, 0.0
  %v1587 = vmul.f32 %v1585, %v35
  %v1588 = vmul.f32 %v1586, %v36
  %1589 = vst [vmem:[#allocation4] sm:$0xff] %v1587
  %1590 = vst [vmem:[#allocation4 + $0x8] sm:$0xff] %v1588
  %v1591 = vld [vmem:[#allocation4] sm:$0xff]
  %v1592 = vld [vmem:[#allocation4 + $0x8] sm:$0xff]
  %1593 = vst [vmem:[#allocation2] sm:$0xff] 0.0
  %1594 = vst [vmem:[#allocation2 + $0x8] sm:$0xff] 0.0
  %v1595 = vld [vmem:[%s7] sm:$0xff]
  %1597 = vrot.lane.b32.xlu0 %v1592, 11
  %v1598 = vpop.permute.xlu0 %1597
  %1601 = vrot.lane.b32.xlu0 %v1591, 11
  %v1602 = vpop.permute.xlu0 %1601
  %v1603 = vsel %vm682, %v1602, %v1598
  %v1606 = vsel %vm682, %v1598, %v1602
  %1608 = vset.pattern.permute.xlu0 0
  %1609 = vperm.xlu0 %1608, %v1595
  %v1610 = vpop.permute.xlu0 %1609
  %v1612 = vperm.slane %v1606, 0
  %v1613 = vperm.slane %v1603, 0
  %v1614 = vmul.f32 %v1610, %v1612
  %v1615 = vmul.f32 %v1610, %v1613
  %1616 = vset.pattern.permute.xlu0 1
  %1617 = vperm.xlu0 %1616, %v1595
  %v1618 = vpop.permute.xlu0 %1617
  %v1620 = vperm.slane %v1606, 1
  %v1621 = vperm.slane %v1603, 1
  %v1622 = vmul.f32 %v1618, %v1620
  %v1623 = vmul.f32 %v1618, %v1621
  %v1624 = vadd.f32 %v1614, %v1622
  %v1625 = vadd.f32 %v1615, %v1623
  %1626 = vset.pattern.permute.xlu0 2
  %1627 = vperm.xlu0 %1626, %v1595
  %v1628 = vpop.permute.xlu0 %1627
  %v1630 = vperm.slane %v1606, 2
  %v1631 = vperm.slane %v1603, 2
  %v1632 = vmul.f32 %v1628, %v1630
  %v1633 = vmul.f32 %v1628, %v1631
  %v1634 = vadd.f32 %v1624, %v1632
  %v1635 = vadd.f32 %v1625, %v1633
  %1636 = vset.pattern.permute.xlu0 3
  %1637 = vperm.xlu0 %1636, %v1595
  %v1638 = vpop.permute.xlu0 %1637
  %v1640 = vperm.slane %v1606, 3
  %v1641 = vperm.slane %v1603, 3
  %v1642 = vmul.f32 %v1638, %v1640
  %v1643 = vmul.f32 %v1638, %v1641
  %v1644 = vadd.f32 %v1634, %v1642
  %v1645 = vadd.f32 %v1635, %v1643
  %1646 = vset.pattern.permute.xlu0 4
  %1647 = vperm.xlu0 %1646, %v1595
  %v1648 = vpop.permute.xlu0 %1647
  %v1650 = vperm.slane %v1606, 4
  %v1651 = vperm.slane %v1603, 4
  %v1652 = vmul.f32 %v1648, %v1650
  %v1653 = vmul.f32 %v1648, %v1651
  %v1654 = vadd.f32 %v1644, %v1652
  %v1655 = vadd.f32 %v1645, %v1653
  %1656 = vset.pattern.permute.xlu0 5
  %1657 = vperm.xlu0 %1656, %v1595
  %v1658 = vpop.permute.xlu0 %1657
  %v1660 = vperm.slane %v1606, 5
  %v1661 = vperm.slane %v1603, 5
  %v1662 = vmul.f32 %v1658, %v1660
  %v1663 = vmul.f32 %v1658, %v1661
  %v1664 = vadd.f32 %v1654, %v1662
  %v1665 = vadd.f32 %v1655, %v1663
  %1666 = vset.pattern.permute.xlu0 6
  %1667 = vperm.xlu0 %1666, %v1595
  %v1668 = vpop.permute.xlu0 %1667
  %v1670 = vperm.slane %v1606, 6
  %v1671 = vperm.slane %v1603, 6
  %v1672 = vmul.f32 %v1668, %v1670
  %v1673 = vmul.f32 %v1668, %v1671
  %v1674 = vadd.f32 %v1664, %v1672
  %v1675 = vadd.f32 %v1665, %v1673
  %1676 = vset.pattern.permute.xlu0 7
  %1677 = vperm.xlu0 %1676, %v1595
  %v1678 = vpop.permute.xlu0 %1677
  %v1680 = vperm.slane %v1606, 7
  %v1681 = vperm.slane %v1603, 7
  %v1682 = vmul.f32 %v1678, %v1680
  %v1683 = vmul.f32 %v1678, %v1681
  %v1684 = vadd.f32 %v1674, %v1682
  %v1685 = vadd.f32 %v1675, %v1683
  %v1686 = vld [vmem:[#allocation2] sm:$0xff]
  %v1687 = vld [vmem:[#allocation2 + $0x8] sm:$0xff]
  %v1688 = vadd.f32 %v1686, %v1684
  %v1689 = vadd.f32 %v1687, %v1685
  %1690 = vst [vmem:[#allocation2] sm:$0xff] %v1688
  %1691 = vst [vmem:[#allocation2 + $0x8] sm:$0xff] %v1689
  %s1692 = scalar_lea.vmem %s7, 8
  %v1693 = vld [vmem:[%s1692] sm:$0xff]
  %1694 = vrot.lane.b32.xlu0 %v1592, 10
  %v1695 = vpop.permute.xlu0 %1694
  %1697 = vrot.lane.b32.xlu0 %v1591, 10
  %v1698 = vpop.permute.xlu0 %1697
  %v1699 = vsel %vm779, %v1698, %v1695
  %v1702 = vsel %vm779, %v1695, %v1698
  %1704 = vset.pattern.permute.xlu0 0
  %1705 = vperm.xlu0 %1704, %v1693
  %v1706 = vpop.permute.xlu0 %1705
  %v1708 = vperm.slane %v1702, 0
  %v1709 = vperm.slane %v1699, 0
  %v1710 = vmul.f32 %v1706, %v1708
  %v1711 = vmul.f32 %v1706, %v1709
  %1712 = vset.pattern.permute.xlu0 1
  %1713 = vperm.xlu0 %1712, %v1693
  %v1714 = vpop.permute.xlu0 %1713
  %v1716 = vperm.slane %v1702, 1
  %v1717 = vperm.slane %v1699, 1
  %v1718 = vmul.f32 %v1714, %v1716
  %v1719 = vmul.f32 %v1714, %v1717
  %v1720 = vadd.f32 %v1710, %v1718
  %v1721 = vadd.f32 %v1711, %v1719
  %1722 = vset.pattern.permute.xlu0 2
  %1723 = vperm.xlu0 %1722, %v1693
  %v1724 = vpop.permute.xlu0 %1723
  %v1726 = vperm.slane %v1702, 2
  %v1727 = vperm.slane %v1699, 2
  %v1728 = vmul.f32 %v1724, %v1726
  %v1729 = vmul.f32 %v1724, %v1727
  %v1730 = vadd.f32 %v1720, %v1728
  %v1731 = vadd.f32 %v1721, %v1729
  %1732 = vset.pattern.permute.xlu0 3
  %1733 = vperm.xlu0 %1732, %v1693
  %v1734 = vpop.permute.xlu0 %1733
  %v1736 = vperm.slane %v1702, 3
  %v1737 = vperm.slane %v1699, 3
  %v1738 = vmul.f32 %v1734, %v1736
  %v1739 = vmul.f32 %v1734, %v1737
  %v1740 = vadd.f32 %v1730, %v1738
  %v1741 = vadd.f32 %v1731, %v1739
  %1742 = vset.pattern.permute.xlu0 4
  %1743 = vperm.xlu0 %1742, %v1693
  %v1744 = vpop.permute.xlu0 %1743
  %v1746 = vperm.slane %v1702, 4
  %v1747 = vperm.slane %v1699, 4
  %v1748 = vmul.f32 %v1744, %v1746
  %v1749 = vmul.f32 %v1744, %v1747
  %v1750 = vadd.f32 %v1740, %v1748
  %v1751 = vadd.f32 %v1741, %v1749
  %1752 = vset.pattern.permute.xlu0 5
  %1753 = vperm.xlu0 %1752, %v1693
  %v1754 = vpop.permute.xlu0 %1753
  %v1756 = vperm.slane %v1702, 5
  %v1757 = vperm.slane %v1699, 5
  %v1758 = vmul.f32 %v1754, %v1756
  %v1759 = vmul.f32 %v1754, %v1757
  %v1760 = vadd.f32 %v1750, %v1758
  %v1761 = vadd.f32 %v1751, %v1759
  %1762 = vset.pattern.permute.xlu0 6
  %1763 = vperm.xlu0 %1762, %v1693
  %v1764 = vpop.permute.xlu0 %1763
  %v1766 = vperm.slane %v1702, 6
  %v1767 = vperm.slane %v1699, 6
  %v1768 = vmul.f32 %v1764, %v1766
  %v1769 = vmul.f32 %v1764, %v1767
  %v1770 = vadd.f32 %v1760, %v1768
  %v1771 = vadd.f32 %v1761, %v1769
  %1772 = vset.pattern.permute.xlu0 7
  %1773 = vperm.xlu0 %1772, %v1693
  %v1774 = vpop.permute.xlu0 %1773
  %v1776 = vperm.slane %v1702, 7
  %v1777 = vperm.slane %v1699, 7
  %v1778 = vmul.f32 %v1774, %v1776
  %v1779 = vmul.f32 %v1774, %v1777
  %v1780 = vadd.f32 %v1770, %v1778
  %v1781 = vadd.f32 %v1771, %v1779
  %v1782 = vld [vmem:[#allocation2] sm:$0xff]
  %v1783 = vld [vmem:[#allocation2 + $0x8] sm:$0xff]
  %v1784 = vadd.f32 %v1782, %v1780
  %v1785 = vadd.f32 %v1783, %v1781
  %1786 = vst [vmem:[#allocation2] sm:$0xff] %v1784
  %1787 = vst [vmem:[#allocation2 + $0x8] sm:$0xff] %v1785
  %s1788 = scalar_lea.vmem %s7, 16
  %v1789 = vld [vmem:[%s1788] sm:$0xff]
  %1790 = vrot.lane.b32.xlu0 %v1592, 9
  %v1791 = vpop.permute.xlu0 %1790
  %1793 = vrot.lane.b32.xlu0 %v1591, 9
  %v1794 = vpop.permute.xlu0 %1793
  %v1795 = vsel %vm876, %v1794, %v1791
  %v1798 = vsel %vm876, %v1791, %v1794
  %1800 = vset.pattern.permute.xlu0 0
  %1801 = vperm.xlu0 %1800, %v1789
  %v1802 = vpop.permute.xlu0 %1801
  %v1804 = vperm.slane %v1798, 0
  %v1805 = vperm.slane %v1795, 0
  %v1806 = vmul.f32 %v1802, %v1804
  %v1807 = vmul.f32 %v1802, %v1805
  %1808 = vset.pattern.permute.xlu0 1
  %1809 = vperm.xlu0 %1808, %v1789
  %v1810 = vpop.permute.xlu0 %1809
  %v1812 = vperm.slane %v1798, 1
  %v1813 = vperm.slane %v1795, 1
  %v1814 = vmul.f32 %v1810, %v1812
  %v1815 = vmul.f32 %v1810, %v1813
  %v1816 = vadd.f32 %v1806, %v1814
  %v1817 = vadd.f32 %v1807, %v1815
  %1818 = vset.pattern.permute.xlu0 2
  %1819 = vperm.xlu0 %1818, %v1789
  %v1820 = vpop.permute.xlu0 %1819
  %v1822 = vperm.slane %v1798, 2
  %v1823 = vperm.slane %v1795, 2
  %v1824 = vmul.f32 %v1820, %v1822
  %v1825 = vmul.f32 %v1820, %v1823
  %v1826 = vadd.f32 %v1816, %v1824
  %v1827 = vadd.f32 %v1817, %v1825
  %1828 = vset.pattern.permute.xlu0 3
  %1829 = vperm.xlu0 %1828, %v1789
  %v1830 = vpop.permute.xlu0 %1829
  %v1832 = vperm.slane %v1798, 3
  %v1833 = vperm.slane %v1795, 3
  %v1834 = vmul.f32 %v1830, %v1832
  %v1835 = vmul.f32 %v1830, %v1833
  %v1836 = vadd.f32 %v1826, %v1834
  %v1837 = vadd.f32 %v1827, %v1835
  %1838 = vset.pattern.permute.xlu0 4
  %1839 = vperm.xlu0 %1838, %v1789
  %v1840 = vpop.permute.xlu0 %1839
  %v1842 = vperm.slane %v1798, 4
  %v1843 = vperm.slane %v1795, 4
  %v1844 = vmul.f32 %v1840, %v1842
  %v1845 = vmul.f32 %v1840, %v1843
  %v1846 = vadd.f32 %v1836, %v1844
  %v1847 = vadd.f32 %v1837, %v1845
  %1848 = vset.pattern.permute.xlu0 5
  %1849 = vperm.xlu0 %1848, %v1789
  %v1850 = vpop.permute.xlu0 %1849
  %v1852 = vperm.slane %v1798, 5
  %v1853 = vperm.slane %v1795, 5
  %v1854 = vmul.f32 %v1850, %v1852
  %v1855 = vmul.f32 %v1850, %v1853
  %v1856 = vadd.f32 %v1846, %v1854
  %v1857 = vadd.f32 %v1847, %v1855
  %1858 = vset.pattern.permute.xlu0 6
  %1859 = vperm.xlu0 %1858, %v1789
  %v1860 = vpop.permute.xlu0 %1859
  %v1862 = vperm.slane %v1798, 6
  %v1863 = vperm.slane %v1795, 6
  %v1864 = vmul.f32 %v1860, %v1862
  %v1865 = vmul.f32 %v1860, %v1863
  %v1866 = vadd.f32 %v1856, %v1864
  %v1867 = vadd.f32 %v1857, %v1865
  %1868 = vset.pattern.permute.xlu0 7
  %1869 = vperm.xlu0 %1868, %v1789
  %v1870 = vpop.permute.xlu0 %1869
  %v1872 = vperm.slane %v1798, 7
  %v1873 = vperm.slane %v1795, 7
  %v1874 = vmul.f32 %v1870, %v1872
  %v1875 = vmul.f32 %v1870, %v1873
  %v1876 = vadd.f32 %v1866, %v1874
  %v1877 = vadd.f32 %v1867, %v1875
  %v1878 = vld [vmem:[#allocation2] sm:$0xff]
  %v1879 = vld [vmem:[#allocation2 + $0x8] sm:$0xff]
  %v1880 = vadd.f32 %v1878, %v1876
  %v1881 = vadd.f32 %v1879, %v1877
  %1882 = vst [vmem:[#allocation2] sm:$0xff] %v1880
  %1883 = vst [vmem:[#allocation2 + $0x8] sm:$0xff] %v1881
  %s1884 = scalar_lea.vmem %s7, 24
  %v1885 = vld [vmem:[%s1884] sm:$0xff]
  %1886 = vrot.lane.b32.xlu0 %v1592, 1
  %v1887 = vpop.permute.xlu0 %1886
  %1889 = vrot.lane.b32.xlu0 %v1591, 1
  %v1890 = vpop.permute.xlu0 %1889
  %v1891 = vsel %vm973, %v1890, %v1887
  %v1894 = vsel %vm973, %v1887, %v1890
  %1896 = vset.pattern.permute.xlu0 0
  %1897 = vperm.xlu0 %1896, %v1885
  %v1898 = vpop.permute.xlu0 %1897
  %v1900 = vperm.slane %v1894, 0
  %v1901 = vperm.slane %v1891, 0
  %v1902 = vmul.f32 %v1898, %v1900
  %v1903 = vmul.f32 %v1898, %v1901
  %1904 = vset.pattern.permute.xlu0 1
  %1905 = vperm.xlu0 %1904, %v1885
  %v1906 = vpop.permute.xlu0 %1905
  %v1908 = vperm.slane %v1894, 1
  %v1909 = vperm.slane %v1891, 1
  %v1910 = vmul.f32 %v1906, %v1908
  %v1911 = vmul.f32 %v1906, %v1909
  %v1912 = vadd.f32 %v1902, %v1910
  %v1913 = vadd.f32 %v1903, %v1911
  %1914 = vset.pattern.permute.xlu0 2
  %1915 = vperm.xlu0 %1914, %v1885
  %v1916 = vpop.permute.xlu0 %1915
  %v1918 = vperm.slane %v1894, 2
  %v1919 = vperm.slane %v1891, 2
  %v1920 = vmul.f32 %v1916, %v1918
  %v1921 = vmul.f32 %v1916, %v1919
  %v1922 = vadd.f32 %v1912, %v1920
  %v1923 = vadd.f32 %v1913, %v1921
  %1924 = vset.pattern.permute.xlu0 3
  %1925 = vperm.xlu0 %1924, %v1885
  %v1926 = vpop.permute.xlu0 %1925
  %v1928 = vperm.slane %v1894, 3
  %v1929 = vperm.slane %v1891, 3
  %v1930 = vmul.f32 %v1926, %v1928
  %v1931 = vmul.f32 %v1926, %v1929
  %v1932 = vadd.f32 %v1922, %v1930
  %v1933 = vadd.f32 %v1923, %v1931
  %1934 = vset.pattern.permute.xlu0 4
  %1935 = vperm.xlu0 %1934, %v1885
  %v1936 = vpop.permute.xlu0 %1935
  %v1938 = vperm.slane %v1894, 4
  %v1939 = vperm.slane %v1891, 4
  %v1940 = vmul.f32 %v1936, %v1938
  %v1941 = vmul.f32 %v1936, %v1939
  %v1942 = vadd.f32 %v1932, %v1940
  %v1943 = vadd.f32 %v1933, %v1941
  %1944 = vset.pattern.permute.xlu0 5
  %1945 = vperm.xlu0 %1944, %v1885
  %v1946 = vpop.permute.xlu0 %1945
  %v1948 = vperm.slane %v1894, 5
  %v1949 = vperm.slane %v1891, 5
  %v1950 = vmul.f32 %v1946, %v1948
  %v1951 = vmul.f32 %v1946, %v1949
  %v1952 = vadd.f32 %v1942, %v1950
  %v1953 = vadd.f32 %v1943, %v1951
  %1954 = vset.pattern.permute.xlu0 6
  %1955 = vperm.xlu0 %1954, %v1885
  %v1956 = vpop.permute.xlu0 %1955
  %v1958 = vperm.slane %v1894, 6
  %v1959 = vperm.slane %v1891, 6
  %v1960 = vmul.f32 %v1956, %v1958
  %v1961 = vmul.f32 %v1956, %v1959
  %v1962 = vadd.f32 %v1952, %v1960
  %v1963 = vadd.f32 %v1953, %v1961
  %1964 = vset.pattern.permute.xlu0 7
  %1965 = vperm.xlu0 %1964, %v1885
  %v1966 = vpop.permute.xlu0 %1965
  %v1968 = vperm.slane %v1894, 7
  %v1969 = vperm.slane %v1891, 7
  %v1970 = vmul.f32 %v1966, %v1968
  %v1971 = vmul.f32 %v1966, %v1969
  %v1972 = vadd.f32 %v1962, %v1970
  %v1973 = vadd.f32 %v1963, %v1971
  %v1974 = vld [vmem:[#allocation2] sm:$0xff]
  %v1975 = vld [vmem:[#allocation2 + $0x8] sm:$0xff]
  %v1976 = vadd.f32 %v1974, %v1972
  %v1977 = vadd.f32 %v1975, %v1973
  %1978 = vst [vmem:[#allocation2] sm:$0xff] %v1976
  %1979 = vst [vmem:[#allocation2 + $0x8] sm:$0xff] %v1977
  %s1980 = scalar_lea.vmem %s7, 32
  %v1981 = vld [vmem:[%s1980] sm:$0xff]
  %1983 = vset.pattern.permute.xlu0 0
  %1984 = vperm.xlu0 %1983, %v1981
  %v1985 = vpop.permute.xlu0 %1984
  %v1987 = vperm.slane %v1591, 0
  %v1988 = vperm.slane %v1592, 0
  %v1989 = vmul.f32 %v1985, %v1987
  %v1990 = vmul.f32 %v1985, %v1988
  %1991 = vset.pattern.permute.xlu0 1
  %1992 = vperm.xlu0 %1991, %v1981
  %v1993 = vpop.permute.xlu0 %1992
  %v1995 = vperm.slane %v1591, 1
  %v1996 = vperm.slane %v1592, 1
  %v1997 = vmul.f32 %v1993, %v1995
  %v1998 = vmul.f32 %v1993, %v1996
  %v1999 = vadd.f32 %v1989, %v1997
  %v2000 = vadd.f32 %v1990, %v1998
  %2001 = vset.pattern.permute.xlu0 2
  %2002 = vperm.xlu0 %2001, %v1981
  %v2003 = vpop.permute.xlu0 %2002
  %v2005 = vperm.slane %v1591, 2
  %v2006 = vperm.slane %v1592, 2
  %v2007 = vmul.f32 %v2003, %v2005
  %v2008 = vmul.f32 %v2003, %v2006
  %v2009 = vadd.f32 %v1999, %v2007
  %v2010 = vadd.f32 %v2000, %v2008
  %2011 = vset.pattern.permute.xlu0 3
  %2012 = vperm.xlu0 %2011, %v1981
  %v2013 = vpop.permute.xlu0 %2012
  %v2015 = vperm.slane %v1591, 3
  %v2016 = vperm.slane %v1592, 3
  %v2017 = vmul.f32 %v2013, %v2015
  %v2018 = vmul.f32 %v2013, %v2016
  %v2019 = vadd.f32 %v2009, %v2017
  %v2020 = vadd.f32 %v2010, %v2018
  %2021 = vset.pattern.permute.xlu0 4
  %2022 = vperm.xlu0 %2021, %v1981
  %v2023 = vpop.permute.xlu0 %2022
  %v2025 = vperm.slane %v1591, 4
  %v2026 = vperm.slane %v1592, 4
  %v2027 = vmul.f32 %v2023, %v2025
  %v2028 = vmul.f32 %v2023, %v2026
  %v2029 = vadd.f32 %v2019, %v2027
  %v2030 = vadd.f32 %v2020, %v2028
  %2031 = vset.pattern.permute.xlu0 5
  %2032 = vperm.xlu0 %2031, %v1981
  %v2033 = vpop.permute.xlu0 %2032
  %v2035 = vperm.slane %v1591, 5
  %v2036 = vperm.slane %v1592, 5
  %v2037 = vmul.f32 %v2033, %v2035
  %v2038 = vmul.f32 %v2033, %v2036
  %v2039 = vadd.f32 %v2029, %v2037
  %v2040 = vadd.f32 %v2030, %v2038
  %2041 = vset.pattern.permute.xlu0 6
  %2042 = vperm.xlu0 %2041, %v1981
  %v2043 = vpop.permute.xlu0 %2042
  %v2045 = vperm.slane %v1591, 6
  %v2046 = vperm.slane %v1592, 6
  %v2047 = vmul.f32 %v2043, %v2045
  %v2048 = vmul.f32 %v2043, %v2046
  %v2049 = vadd.f32 %v2039, %v2047
  %v2050 = vadd.f32 %v2040, %v2048
  %2051 = vset.pattern.permute.xlu0 7
  %2052 = vperm.xlu0 %2051, %v1981
  %v2053 = vpop.permute.xlu0 %2052
  %v2055 = vperm.slane %v1591, 7
  %v2056 = vperm.slane %v1592, 7
  %v2057 = vmul.f32 %v2053, %v2055
  %v2058 = vmul.f32 %v2053, %v2056
  %v2059 = vadd.f32 %v2049, %v2057
  %v2060 = vadd.f32 %v2050, %v2058
  %v2061 = vld [vmem:[#allocation2] sm:$0xff]
  %v2062 = vld [vmem:[#allocation2 + $0x8] sm:$0xff]
  %v2063 = vadd.f32 %v2061, %v2059
  %v2064 = vadd.f32 %v2062, %v2060
  %2065 = vst [vmem:[#allocation2] sm:$0xff] %v2063
  %2066 = vst [vmem:[#allocation2 + $0x8] sm:$0xff] %v2064
  %s2067 = scalar_lea.vmem %s7, 40
  %v2068 = vld [vmem:[%s2067] sm:$0xff]
  %2069 = vrot.lane.b32.xlu0 %v1591, 127
  %v2070 = vpop.permute.xlu0 %2069
  %2071 = vrot.lane.b32.xlu0 %v1592, 127
  %v2072 = vpop.permute.xlu0 %2071
  %v2073 = vsel %vm179, %v2070, %v2072
  %v2077 = vsel %vm179, %v2072, %v2070
  %2079 = vset.pattern.permute.xlu0 0
  %2080 = vperm.xlu0 %2079, %v2068
  %v2081 = vpop.permute.xlu0 %2080
  %v2083 = vperm.slane %v2073, 0
  %v2084 = vperm.slane %v2077, 0
  %v2085 = vmul.f32 %v2081, %v2083
  %v2086 = vmul.f32 %v2081, %v2084
  %2087 = vset.pattern.permute.xlu0 1
  %2088 = vperm.xlu0 %2087, %v2068
  %v2089 = vpop.permute.xlu0 %2088
  %v2091 = vperm.slane %v2073, 1
  %v2092 = vperm.slane %v2077, 1
  %v2093 = vmul.f32 %v2089, %v2091
  %v2094 = vmul.f32 %v2089, %v2092
  %v2095 = vadd.f32 %v2085, %v2093
  %v2096 = vadd.f32 %v2086, %v2094
  %2097 = vset.pattern.permute.xlu0 2
  %2098 = vperm.xlu0 %2097, %v2068
  %v2099 = vpop.permute.xlu0 %2098
  %v2101 = vperm.slane %v2073, 2
  %v2102 = vperm.slane %v2077, 2
  %v2103 = vmul.f32 %v2099, %v2101
  %v2104 = vmul.f32 %v2099, %v2102
  %v2105 = vadd.f32 %v2095, %v2103
  %v2106 = vadd.f32 %v2096, %v2104
  %2107 = vset.pattern.permute.xlu0 3
  %2108 = vperm.xlu0 %2107, %v2068
  %v2109 = vpop.permute.xlu0 %2108
  %v2111 = vperm.slane %v2073, 3
  %v2112 = vperm.slane %v2077, 3
  %v2113 = vmul.f32 %v2109, %v2111
  %v2114 = vmul.f32 %v2109, %v2112
  %v2115 = vadd.f32 %v2105, %v2113
  %v2116 = vadd.f32 %v2106, %v2114
  %2117 = vset.pattern.permute.xlu0 4
  %2118 = vperm.xlu0 %2117, %v2068
  %v2119 = vpop.permute.xlu0 %2118
  %v2121 = vperm.slane %v2073, 4
  %v2122 = vperm.slane %v2077, 4
  %v2123 = vmul.f32 %v2119, %v2121
  %v2124 = vmul.f32 %v2119, %v2122
  %v2125 = vadd.f32 %v2115, %v2123
  %v2126 = vadd.f32 %v2116, %v2124
  %2127 = vset.pattern.permute.xlu0 5
  %2128 = vperm.xlu0 %2127, %v2068
  %v2129 = vpop.permute.xlu0 %2128
  %v2131 = vperm.slane %v2073, 5
  %v2132 = vperm.slane %v2077, 5
  %v2133 = vmul.f32 %v2129, %v2131
  %v2134 = vmul.f32 %v2129, %v2132
  %v2135 = vadd.f32 %v2125, %v2133
  %v2136 = vadd.f32 %v2126, %v2134
  %2137 = vset.pattern.permute.xlu0 6
  %2138 = vperm.xlu0 %2137, %v2068
  %v2139 = vpop.permute.xlu0 %2138
  %v2141 = vperm.slane %v2073, 6
  %v2142 = vperm.slane %v2077, 6
  %v2143 = vmul.f32 %v2139, %v2141
  %v2144 = vmul.f32 %v2139, %v2142
  %v2145 = vadd.f32 %v2135, %v2143
  %v2146 = vadd.f32 %v2136, %v2144
  %2147 = vset.pattern.permute.xlu0 7
  %2148 = vperm.xlu0 %2147, %v2068
  %v2149 = vpop.permute.xlu0 %2148
  %v2151 = vperm.slane %v2073, 7
  %v2152 = vperm.slane %v2077, 7
  %v2153 = vmul.f32 %v2149, %v2151
  %v2154 = vmul.f32 %v2149, %v2152
  %v2155 = vadd.f32 %v2145, %v2153
  %v2156 = vadd.f32 %v2146, %v2154
  %v2157 = vld [vmem:[#allocation2] sm:$0xff]
  %v2158 = vld [vmem:[#allocation2 + $0x8] sm:$0xff]
  %v2159 = vadd.f32 %v2157, %v2155
  %v2160 = vadd.f32 %v2158, %v2156
  %2161 = vst [vmem:[#allocation2] sm:$0xff] %v2159
  %2162 = vst [vmem:[#allocation2 + $0x8] sm:$0xff] %v2160
  %s2163 = scalar_lea.vmem %s7, 48
  %v2164 = vld [vmem:[%s2163] sm:$0xff]
  %2165 = vrot.lane.b32.xlu0 %v1591, 119
  %v2166 = vpop.permute.xlu0 %2165
  %2167 = vrot.lane.b32.xlu0 %v1592, 119
  %v2168 = vpop.permute.xlu0 %2167
  %v2169 = vsel %vm1252, %v2166, %v2168
  %v2173 = vsel %vm1252, %v2168, %v2166
  %2175 = vset.pattern.permute.xlu0 0
  %2176 = vperm.xlu0 %2175, %v2164
  %v2177 = vpop.permute.xlu0 %2176
  %v2179 = vperm.slane %v2169, 0
  %v2180 = vperm.slane %v2173, 0
  %v2181 = vmul.f32 %v2177, %v2179
  %v2182 = vmul.f32 %v2177, %v2180
  %2183 = vset.pattern.permute.xlu0 1
  %2184 = vperm.xlu0 %2183, %v2164
  %v2185 = vpop.permute.xlu0 %2184
  %v2187 = vperm.slane %v2169, 1
  %v2188 = vperm.slane %v2173, 1
  %v2189 = vmul.f32 %v2185, %v2187
  %v2190 = vmul.f32 %v2185, %v2188
  %v2191 = vadd.f32 %v2181, %v2189
  %v2192 = vadd.f32 %v2182, %v2190
  %2193 = vset.pattern.permute.xlu0 2
  %2194 = vperm.xlu0 %2193, %v2164
  %v2195 = vpop.permute.xlu0 %2194
  %v2197 = vperm.slane %v2169, 2
  %v2198 = vperm.slane %v2173, 2
  %v2199 = vmul.f32 %v2195, %v2197
  %v2200 = vmul.f32 %v2195, %v2198
  %v2201 = vadd.f32 %v2191, %v2199
  %v2202 = vadd.f32 %v2192, %v2200
  %2203 = vset.pattern.permute.xlu0 3
  %2204 = vperm.xlu0 %2203, %v2164
  %v2205 = vpop.permute.xlu0 %2204
  %v2207 = vperm.slane %v2169, 3
  %v2208 = vperm.slane %v2173, 3
  %v2209 = vmul.f32 %v2205, %v2207
  %v2210 = vmul.f32 %v2205, %v2208
  %v2211 = vadd.f32 %v2201, %v2209
  %v2212 = vadd.f32 %v2202, %v2210
  %2213 = vset.pattern.permute.xlu0 4
  %2214 = vperm.xlu0 %2213, %v2164
  %v2215 = vpop.permute.xlu0 %2214
  %v2217 = vperm.slane %v2169, 4
  %v2218 = vperm.slane %v2173, 4
  %v2219 = vmul.f32 %v2215, %v2217
  %v2220 = vmul.f32 %v2215, %v2218
  %v2221 = vadd.f32 %v2211, %v2219
  %v2222 = vadd.f32 %v2212, %v2220
  %2223 = vset.pattern.permute.xlu0 5
  %2224 = vperm.xlu0 %2223, %v2164
  %v2225 = vpop.permute.xlu0 %2224
  %v2227 = vperm.slane %v2169, 5
  %v2228 = vperm.slane %v2173, 5
  %v2229 = vmul.f32 %v2225, %v2227
  %v2230 = vmul.f32 %v2225, %v2228
  %v2231 = vadd.f32 %v2221, %v2229
  %v2232 = vadd.f32 %v2222, %v2230
  %2233 = vset.pattern.permute.xlu0 6
  %2234 = vperm.xlu0 %2233, %v2164
  %v2235 = vpop.permute.xlu0 %2234
  %v2237 = vperm.slane %v2169, 6
  %v2238 = vperm.slane %v2173, 6
  %v2239 = vmul.f32 %v2235, %v2237
  %v2240 = vmul.f32 %v2235, %v2238
  %v2241 = vadd.f32 %v2231, %v2239
  %v2242 = vadd.f32 %v2232, %v2240
  %2243 = vset.pattern.permute.xlu0 7
  %2244 = vperm.xlu0 %2243, %v2164
  %v2245 = vpop.permute.xlu0 %2244
  %v2247 = vperm.slane %v2169, 7
  %v2248 = vperm.slane %v2173, 7
  %v2249 = vmul.f32 %v2245, %v2247
  %v2250 = vmul.f32 %v2245, %v2248
  %v2251 = vadd.f32 %v2241, %v2249
  %v2252 = vadd.f32 %v2242, %v2250
  %v2253 = vld [vmem:[#allocation2] sm:$0xff]
  %v2254 = vld [vmem:[#allocation2 + $0x8] sm:$0xff]
  %v2255 = vadd.f32 %v2253, %v2251
  %v2256 = vadd.f32 %v2254, %v2252
  %2257 = vst [vmem:[#allocation2] sm:$0xff] %v2255
  %2258 = vst [vmem:[#allocation2 + $0x8] sm:$0xff] %v2256
  %s2259 = scalar_lea.vmem %s7, 56
  %v2260 = vld [vmem:[%s2259] sm:$0xff]
  %2261 = vrot.lane.b32.xlu0 %v1591, 118
  %v2262 = vpop.permute.xlu0 %2261
  %2263 = vrot.lane.b32.xlu0 %v1592, 118
  %v2264 = vpop.permute.xlu0 %2263
  %v2265 = vsel %vm434, %v2262, %v2264
  %v2269 = vsel %vm434, %v2264, %v2262
  %2271 = vset.pattern.permute.xlu0 0
  %2272 = vperm.xlu0 %2271, %v2260
  %v2273 = vpop.permute.xlu0 %2272
  %v2275 = vperm.slane %v2265, 0
  %v2276 = vperm.slane %v2269, 0
  %v2277 = vmul.f32 %v2273, %v2275
  %v2278 = vmul.f32 %v2273, %v2276
  %2279 = vset.pattern.permute.xlu0 1
  %2280 = vperm.xlu0 %2279, %v2260
  %v2281 = vpop.permute.xlu0 %2280
  %v2283 = vperm.slane %v2265, 1
  %v2284 = vperm.slane %v2269, 1
  %v2285 = vmul.f32 %v2281, %v2283
  %v2286 = vmul.f32 %v2281, %v2284
  %v2287 = vadd.f32 %v2277, %v2285
  %v2288 = vadd.f32 %v2278, %v2286
  %2289 = vset.pattern.permute.xlu0 2
  %2290 = vperm.xlu0 %2289, %v2260
  %v2291 = vpop.permute.xlu0 %2290
  %v2293 = vperm.slane %v2265, 2
  %v2294 = vperm.slane %v2269, 2
  %v2295 = vmul.f32 %v2291, %v2293
  %v2296 = vmul.f32 %v2291, %v2294
  %v2297 = vadd.f32 %v2287, %v2295
  %v2298 = vadd.f32 %v2288, %v2296
  %2299 = vset.pattern.permute.xlu0 3
  %2300 = vperm.xlu0 %2299, %v2260
  %v2301 = vpop.permute.xlu0 %2300
  %v2303 = vperm.slane %v2265, 3
  %v2304 = vperm.slane %v2269, 3
  %v2305 = vmul.f32 %v2301, %v2303
  %v2306 = vmul.f32 %v2301, %v2304
  %v2307 = vadd.f32 %v2297, %v2305
  %v2308 = vadd.f32 %v2298, %v2306
  %2309 = vset.pattern.permute.xlu0 4
  %2310 = vperm.xlu0 %2309, %v2260
  %v2311 = vpop.permute.xlu0 %2310
  %v2313 = vperm.slane %v2265, 4
  %v2314 = vperm.slane %v2269, 4
  %v2315 = vmul.f32 %v2311, %v2313
  %v2316 = vmul.f32 %v2311, %v2314
  %v2317 = vadd.f32 %v2307, %v2315
  %v2318 = vadd.f32 %v2308, %v2316
  %2319 = vset.pattern.permute.xlu0 5
  %2320 = vperm.xlu0 %2319, %v2260
  %v2321 = vpop.permute.xlu0 %2320
  %v2323 = vperm.slane %v2265, 5
  %v2324 = vperm.slane %v2269, 5
  %v2325 = vmul.f32 %v2321, %v2323
  %v2326 = vmul.f32 %v2321, %v2324
  %v2327 = vadd.f32 %v2317, %v2325
  %v2328 = vadd.f32 %v2318, %v2326
  %2329 = vset.pattern.permute.xlu0 6
  %2330 = vperm.xlu0 %2329, %v2260
  %v2331 = vpop.permute.xlu0 %2330
  %v2333 = vperm.slane %v2265, 6
  %v2334 = vperm.slane %v2269, 6
  %v2335 = vmul.f32 %v2331, %v2333
  %v2336 = vmul.f32 %v2331, %v2334
  %v2337 = vadd.f32 %v2327, %v2335
  %v2338 = vadd.f32 %v2328, %v2336
  %2339 = vset.pattern.permute.xlu0 7
  %2340 = vperm.xlu0 %2339, %v2260
  %v2341 = vpop.permute.xlu0 %2340
  %v2343 = vperm.slane %v2265, 7
  %v2344 = vperm.slane %v2269, 7
  %v2345 = vmul.f32 %v2341, %v2343
  %v2346 = vmul.f32 %v2341, %v2344
  %v2347 = vadd.f32 %v2337, %v2345
  %v2348 = vadd.f32 %v2338, %v2346
  %v2349 = vld [vmem:[#allocation2] sm:$0xff]
  %v2350 = vld [vmem:[#allocation2 + $0x8] sm:$0xff]
  %v2351 = vadd.f32 %v2349, %v2347
  %v2352 = vadd.f32 %v2350, %v2348
  %2353 = vst [vmem:[#allocation2] sm:$0xff] %v2351
  %2354 = vst [vmem:[#allocation2 + $0x8] sm:$0xff] %v2352
  %s2355 = scalar_lea.vmem %s7, 64
  %v2356 = vld [vmem:[%s2355] sm:$0xff]
  %2357 = vrot.lane.b32.xlu0 %v1591, 117
  %v2358 = vpop.permute.xlu0 %2357
  %2359 = vrot.lane.b32.xlu0 %v1592, 117
  %v2360 = vpop.permute.xlu0 %2359
  %v2361 = vsel %vm561, %v2358, %v2360
  %v2365 = vsel %vm561, %v2360, %v2358
  %2367 = vset.pattern.permute.xlu0 0
  %2368 = vperm.xlu0 %2367, %v2356
  %v2369 = vpop.permute.xlu0 %2368
  %v2371 = vperm.slane %v2361, 0
  %v2372 = vperm.slane %v2365, 0
  %v2373 = vmul.f32 %v2369, %v2371
  %v2374 = vmul.f32 %v2369, %v2372
  %2375 = vset.pattern.permute.xlu0 1
  %2376 = vperm.xlu0 %2375, %v2356
  %v2377 = vpop.permute.xlu0 %2376
  %v2379 = vperm.slane %v2361, 1
  %v2380 = vperm.slane %v2365, 1
  %v2381 = vmul.f32 %v2377, %v2379
  %v2382 = vmul.f32 %v2377, %v2380
  %v2383 = vadd.f32 %v2373, %v2381
  %v2384 = vadd.f32 %v2374, %v2382
  %2385 = vset.pattern.permute.xlu0 2
  %2386 = vperm.xlu0 %2385, %v2356
  %v2387 = vpop.permute.xlu0 %2386
  %v2389 = vperm.slane %v2361, 2
  %v2390 = vperm.slane %v2365, 2
  %v2391 = vmul.f32 %v2387, %v2389
  %v2392 = vmul.f32 %v2387, %v2390
  %v2393 = vadd.f32 %v2383, %v2391
  %v2394 = vadd.f32 %v2384, %v2392
  %2395 = vset.pattern.permute.xlu0 3
  %2396 = vperm.xlu0 %2395, %v2356
  %v2397 = vpop.permute.xlu0 %2396
  %v2399 = vperm.slane %v2361, 3
  %v2400 = vperm.slane %v2365, 3
  %v2401 = vmul.f32 %v2397, %v2399
  %v2402 = vmul.f32 %v2397, %v2400
  %v2403 = vadd.f32 %v2393, %v2401
  %v2404 = vadd.f32 %v2394, %v2402
  %2405 = vset.pattern.permute.xlu0 4
  %2406 = vperm.xlu0 %2405, %v2356
  %v2407 = vpop.permute.xlu0 %2406
  %v2409 = vperm.slane %v2361, 4
  %v2410 = vperm.slane %v2365, 4
  %v2411 = vmul.f32 %v2407, %v2409
  %v2412 = vmul.f32 %v2407, %v2410
  %v2413 = vadd.f32 %v2403, %v2411
  %v2414 = vadd.f32 %v2404, %v2412
  %2415 = vset.pattern.permute.xlu0 5
  %2416 = vperm.xlu0 %2415, %v2356
  %v2417 = vpop.permute.xlu0 %2416
  %v2419 = vperm.slane %v2361, 5
  %v2420 = vperm.slane %v2365, 5
  %v2421 = vmul.f32 %v2417, %v2419
  %v2422 = vmul.f32 %v2417, %v2420
  %v2423 = vadd.f32 %v2413, %v2421
  %v2424 = vadd.f32 %v2414, %v2422
  %2425 = vset.pattern.permute.xlu0 6
  %2426 = vperm.xlu0 %2425, %v2356
  %v2427 = vpop.permute.xlu0 %2426
  %v2429 = vperm.slane %v2361, 6
  %v2430 = vperm.slane %v2365, 6
  %v2431 = vmul.f32 %v2427, %v2429
  %v2432 = vmul.f32 %v2427, %v2430
  %v2433 = vadd.f32 %v2423, %v2431
  %v2434 = vadd.f32 %v2424, %v2432
  %2435 = vset.pattern.permute.xlu0 7
  %2436 = vperm.xlu0 %2435, %v2356
  %v2437 = vpop.permute.xlu0 %2436
  %v2439 = vperm.slane %v2361, 7
  %v2440 = vperm.slane %v2365, 7
  %v2441 = vmul.f32 %v2437, %v2439
  %v2442 = vmul.f32 %v2437, %v2440
  %v2443 = vadd.f32 %v2433, %v2441
  %v2444 = vadd.f32 %v2434, %v2442
  %v2445 = vld [vmem:[#allocation2] sm:$0xff]
  %v2446 = vld [vmem:[#allocation2 + $0x8] sm:$0xff]
  %v2447 = vadd.f32 %v2445, %v2443
  %v2448 = vadd.f32 %v2446, %v2444
  %2449 = vst [vmem:[#allocation2] sm:$0xff] %v2447
  %2450 = vst [vmem:[#allocation2 + $0x8] sm:$0xff] %v2448
  %v2451 = vld [vmem:[#allocation2] sm:$0xff]
  %v2452 = vld [vmem:[#allocation2 + $0x8] sm:$0xff]
  %v2453 = vmul.f32 %v2451, %v35
  %v2454 = vmul.f32 %v2452, %v36
  %v2455 = vadd.f32 %v2453, %v2454
  %2456 = vadd.xlane.f32.xlu0 %v2455
  %v2457 = vpop.xlane.xlu0 %2456
  %v2458 = vmul.f32 %v2457, 0.0078125
  %v2459 = vsub.f32 %v2451, %v2458
  %v2460 = vsub.f32 %v2452, %v2458
  %v2461 = vmul.f32 %v2459, %v35
  %v2462 = vmul.f32 %v2460, %v36
  %v2463 = vmul.f32 %v2461, %v2461
  %v2464 = vmul.f32 %v2462, %v2462
  %v2465 = vadd.f32 %v2463, %v2464
  %2466 = vadd.xlane.f32.xlu0 %v2465
  %v2467 = vpop.xlane.xlu0 %2466
  %v2468 = vmul.f32 %v2467, 0.0078125
  %s2469 = scalar_lea.vmem %s8, 16
  %v2470 = vld [vmem:[%s2469] sm:$0xff]
  %v2471 = vadd.f32 %v2468, 1e-05
  %v2472 = vrsqrt.pop %v2471
  %v2473 = vmul.f32 %v2472, %v2471
  %v2474 = vmul.f32 %v2473, %v2472
  %v2475 = vmul.f32 0.5, %v2474
  %v2476 = vsub.f32 1.5, %v2475
  %v2477 = vmul.f32 %v2472, %v2476
  %vm2478 = vweird.f32 %v2471
  %vm2479 = vweird.f32 %v2472
  %vm2480 = vmor %vm2478, %vm2479
  %v2481 = vsel %vm2480, %v2472, %v2477
  %v2482 = vmul.f32 %v2470, %v2481
  %s2483 = scalar_lea.vmem %s9, 16
  %v2484 = vld [vmem:[%s2483] sm:$0xff]
  %v2485 = vmul.f32 %v2458, %v2482
  %v2486 = vsub.f32 %v2484, %v2485
  %2488 = vset.pattern.permute.xlu0 0
  %2489 = vperm.xlu0 %2488, %v2482
  %v2490 = vpop.permute.xlu0 %2489
  %v2492 = vmul.f32 %v2451, %v2490
  %v2493 = vmul.f32 %v2452, %v2490
  %2495 = vset.pattern.permute.xlu0 0
  %2496 = vperm.xlu0 %2495, %v2486
  %v2497 = vpop.permute.xlu0 %2496
  %v2499 = vadd.f32 %v2492, %v2497
  %v2500 = vadd.f32 %v2493, %v2497
  %v2501 = vmax.f32 %v2499, 0.0
  %v2502 = vmax.f32 %v2500, 0.0
  %v2503 = vmul.f32 %v2501, %v35
  %v2504 = vmul.f32 %v2502, %v36
  %2505 = vst [vmem:[%s10] sm:$0xff] %v2503
  %2506 = vst [vmem:[%s10 + $0x8] sm:$0xff] %v2504
  // Predicated region
  $region42: #{exact_conv_forward.1} parent=0 // pred_check
    _
  $region43: #{exact_conv_forward.1} parent=0 // pred_check_branch
    %2508 = sbr.rel (0) target = $region45
  $region44: #{exact_conv_forward.1} parent=0 // pred_region
    _
  $region45: #{exact_conv_forward.1} parent=0 // pred_fallthru
    _
  // Predicated region
  $region46: #{exact_conv_forward.1} parent=0 // pred_check
    _
  $region47: #{exact_conv_forward.1} parent=0 // pred_check_branch
    %2510 = sbr.rel (0) target = $region49
  $region48: #{exact_conv_forward.1} parent=0 // pred_region
    _
  $region49: #{exact_conv_forward.1} parent=0 // pred_fallthru
    _

</llo_original>
